<compile_context>
chip_gen: v6e
topology: v6e:2x2x1
jax: 0.10.0
libtpu: 0.0.40
codegen_flags: <defaults>
</compile_context>

<pallas_src>
import functools

import jax
import jax.numpy as jnp
from jax.experimental import pallas as pl
from jax.experimental.pallas import tpu as pltpu

NUM_FEATURES = 128          # self.num_features
ARCH = (500, 400, 300)      # self.architecture


def _round_up(x, m):
    return ((x + m - 1) // m) * m


def _choose_tiles(B, n_pad, target=256, min_tile=16, max_conv_rows=4096):
    """Pick (TILE_B, B_pad).

    TILE_B is a multiple of 16 (bf16 sublane-pack friendly), targets 256 rows so
    the dense-stack matmuls present a full MXU M dimension, is capped so the
    per-tile conv activation slab (TILE_B * n_pad rows) stays VMEM-friendly, and
    B_pad guarantees at least 2 batch tiles so both v7x TensorCores get work.
    """
    tile = min(target, max(min_tile, _round_up((B + 1) // 2, min_tile)))
    cap = max(min_tile, (max_conv_rows // n_pad) // min_tile * min_tile)
    tile = min(tile, cap)
    b_pad = max(_round_up(B, tile), 2 * tile)
    return tile, b_pad


# ----------------------------------------------------------------------------
# Kernel
# ----------------------------------------------------------------------------
def q_network_kernel(n_real, xp_ref, tail_ref,
                     w1_ref, b1_ref, w2_ref, b2_ref,
                     w3p_ref, w3t_ref, b3_ref,
                     w4_ref, b4_ref, w5_ref, b5_ref,
                     w6_ref, b6_ref,
                     out_ref):
    f32 = jnp.float32
    bf16 = jnp.bfloat16
    rows = xp_ref.shape[0]            # TILE_B * N_pad particle rows
    tb = out_ref.shape[0]             # TILE_B
    n_pad = rows // tb

    # conv1: per-particle linear P_pad -> 256, ReLU (bf16 operands, f32 acc).
    h = jnp.dot(xp_ref[...], w1_ref[...], preferred_element_type=f32) + b1_ref[...]
    h = jnp.maximum(h, 0.0)

    # conv2: per-particle linear 256 -> 128, ReLU.
    h = jnp.dot(h.astype(bf16), w2_ref[...], preferred_element_type=f32) + b2_ref[...]
    h = jnp.maximum(h, 0.0)

    # AvgPool over the particle axis.  h is f32 and n_pad is a multiple of 8,
    # so the reshape is a pure sublane relabel; zero-padded particle rows are
    # excluded by the static slice and the scale uses the real N.
    # (The PyTorch ReLU right after the avg-pool is a no-op: inputs are >= 0.)
    h3 = h.reshape(tb, n_pad, h.shape[-1])
    pooled = jnp.sum(h3[:, :n_real, :], axis=1) * (1.0 / n_real)      # (tb, 128)

    # linear0, concat-free:
    #   relu(pooled @ w3_pool + [features | action | 0] @ w3_tail + b3)
    q = jnp.dot(pooled.astype(bf16), w3p_ref[...], preferred_element_type=f32)
    q = q + jnp.dot(tail_ref[...], w3t_ref[...], preferred_element_type=f32)
    q = jnp.maximum(q + b3_ref[...], 0.0)

    # Remaining stack: 512(=500) -> 512(=400) -> 384(=300) -> 128(=A), padded
    # lanes stay exactly zero through ReLU.
    q = jnp.maximum(jnp.dot(q.astype(bf16), w4_ref[...],
                            preferred_element_type=f32) + b4_ref[...], 0.0)
    q = jnp.maximum(jnp.dot(q.astype(bf16), w5_ref[...],
                            preferred_element_type=f32) + b5_ref[...], 0.0)
    out_ref[...] = jnp.dot(q.astype(bf16), w6_ref[...],
                           preferred_element_type=f32) + b6_ref[...]


# ----------------------------------------------------------------------------
# Wrapper
# ----------------------------------------------------------------------------
def q_network_forward(state_features, state_particles, action, params):
    B, N, P = state_particles.shape
    F = state_features.shape[1]
    A = action.shape[1]

    P_pad = params['w1'].shape[0]
    H1 = params['w1'].shape[1]                    # 256
    H2 = params['w2'].shape[1]                    # 128
    TAIL = params['w3t'].shape[0]                 # padded (features+action) width
    D3, D4, D5 = params['w3p'].shape[1], params['w4'].shape[1], params['w5'].shape[1]
    A_pad = params['w6'].shape[1]
    assert F + A <= TAIL

    N_pad = _round_up(N, 8)
    TILE_B, B_pad = _choose_tiles(B, N_pad)
    grid = (B_pad // TILE_B,)

    # Particles: zero-pad batch / particle-count / particle-dim, cast to bf16,
    # and pre-flatten to 2-D so the kernel never reshapes a bf16 array across
    # sublane-tile boundaries.
    xp = jnp.pad(state_particles.astype(jnp.float32),
                 ((0, B_pad - B), (0, N_pad - N), (0, P_pad - P)))
    xp = xp.astype(jnp.bfloat16).reshape(B_pad * N_pad, P_pad)

    # [features | action | zeros] packed into one lane-dense 128-wide slab.
    tail = jnp.concatenate([state_features.astype(jnp.float32),
                            action.astype(jnp.float32)], axis=1)
    tail = jnp.pad(tail, ((0, B_pad - B), (0, TAIL - (F + A)))).astype(jnp.bfloat16)

    weight_order = ['w1', 'b1', 'w2', 'b2', 'w3p', 'w3t', 'b3',
                    'w4', 'b4', 'w5', 'b5', 'w6', 'b6']
    weights = [params[k] for k in weight_order]

    def resident(arr):
        nd = arr.ndim
        return pl.BlockSpec(arr.shape, lambda b, _nd=nd: (0,) * _nd)

    in_specs = ([pl.BlockSpec((TILE_B * N_pad, P_pad), lambda b: (b, 0)),
                 pl.BlockSpec((TILE_B, TAIL), lambda b: (b, 0))]
                + [resident(w) for w in weights])
    out_specs = pl.BlockSpec((TILE_B, A_pad), lambda b: (b, 0))

    flops = 2 * (B_pad * N_pad * (P_pad * H1 + H1 * H2)
                 + B_pad * ((H2 + TAIL) * D3 + D3 * D4 + D4 * D5 + D5 * A_pad))
    bytes_accessed = (int(xp.size) * 2 + int(tail.size) * 2
                      + sum(int(w.size) * int(w.dtype.itemsize) for w in weights)
                      + B_pad * A_pad * 4)

    kernel = functools.partial(q_network_kernel, N)

    out = pl.pallas_call(
        kernel,
        out_shape=jax.ShapeDtypeStruct((B_pad, A_pad), jnp.float32),
        grid=grid,
        in_specs=in_specs,
        out_specs=out_specs,
        compiler_params=pltpu.CompilerParams(
            dimension_semantics=("parallel",),        # batch tiles are independent
            vmem_limit_bytes=48 * 1024 * 1024),       # within v7x's 64 MiB physical
        cost_estimate=pl.CostEstimate(
            flops=int(flops), transcendentals=0,
            bytes_accessed=int(bytes_accessed)),
    )(xp, tail, *weights)

    return out[:B, :A]


# ----------------------------------------------------------------------------
# Parameters: raw (PyTorch-equivalent) init + padding/casting to TPU shapes
# ----------------------------------------------------------------------------
def init_params(key, P, F, A):
    """Deterministic init mimicking PyTorch default U(-1/sqrt(fan_in), 1/sqrt(fan_in))."""
    def u(k, shape, fan_in):
        bound = 1.0 / float(fan_in) ** 0.5
        return jax.random.uniform(k, shape, jnp.float32, -bound, bound)

    keys = jax.random.split(key, 12)
    d_in = NUM_FEATURES + F + A
    p = {}
    p['w1'] = u(keys[0], (P, 2 * NUM_FEATURES), P)                      # conv1 (transposed)
    p['b1'] = u(keys[1], (2 * NUM_FEATURES,), P)
    p['w2'] = u(keys[2], (2 * NUM_FEATURES, NUM_FEATURES), 2 * NUM_FEATURES)
    p['b2'] = u(keys[3], (NUM_FEATURES,), 2 * NUM_FEATURES)
    p['w3'] = u(keys[4], (d_in, ARCH[0]), d_in)                         # linear 0
    p['b3'] = u(keys[5], (ARCH[0],), d_in)
    p['w4'] = u(keys[6], (ARCH[0], ARCH[1]), ARCH[0])
    p['b4'] = u(keys[7], (ARCH[1],), ARCH[0])
    p['w5'] = u(keys[8], (ARCH[1], ARCH[2]), ARCH[1])
    p['b5'] = u(keys[9], (ARCH[2],), ARCH[1])
    p['w6'] = u(keys[10], (ARCH[2], A), ARCH[2])
    p['b6'] = u(keys[11], (A,), ARCH[2])
    return p


def pad_params(raw, P, F, A):
    """Zero-pad to lane-multiple shapes; weights bf16 (MXU operands), biases f32."""
    P_pad = _round_up(P, 128)
    TAIL = _round_up(max(F + A, 1), 128)
    A_pad = _round_up(A, 128)
    H1, H2 = 2 * NUM_FEATURES, NUM_FEATURES
    D3, D4, D5 = (_round_up(d, 128) for d in ARCH)
    bf16 = jnp.bfloat16

    def pad2(w, r, c):
        return jnp.pad(w, ((0, r - w.shape[0]), (0, c - w.shape[1])))

    def padb(b, c):
        return jnp.pad(b.reshape(1, -1), ((0, 0), (0, c - b.shape[-1])))

    p = {}
    p['w1'] = pad2(raw['w1'], P_pad, H1).astype(bf16)
    p['b1'] = padb(raw['b1'], H1)
    p['w2'] = pad2(raw['w2'], H1, H2).astype(bf16)
    p['b2'] = padb(raw['b2'], H2)
    # linear-0 weight split: pooled part (first 128 rows) and a lane-dense
    # [features | action | zeros] tail part -- removes the in-kernel concat.
    p['w3p'] = pad2(raw['w3'][:NUM_FEATURES], NUM_FEATURES, D3).astype(bf16)
    p['w3t'] = pad2(raw['w3'][NUM_FEATURES:], TAIL, D3).astype(bf16)
    p['b3'] = padb(raw['b3'], D3)
    p['w4'] = pad2(raw['w4'], D3, D4).astype(bf16)
    p['b4'] = padb(raw['b4'], D4)
    p['w5'] = pad2(raw['w5'], D4, D5).astype(bf16)
    p['b5'] = padb(raw['b5'], D5)
    p['w6'] = pad2(raw['w6'], D5, A_pad).astype(bf16)
    p['b6'] = padb(raw['b6'], A_pad)
    return p


# ----------------------------------------------------------------------------
# Pure-JAX reference reproducing the PyTorch forward (uses the raw f32 params)
# ----------------------------------------------------------------------------
def reference_forward(state_features, state_particles, action, p):
    B, N, P = state_particles.shape
    x = state_particles.reshape(B * N, P)
    h = jax.nn.relu(x @ p['w1'] + p['b1'])
    h = jax.nn.relu(h @ p['w2'] + p['b2'])
    pooled = jax.nn.relu(h.reshape(B, N, -1).mean(axis=1))
    q = jnp.concatenate([pooled, state_features, action], axis=1)
    q = jax.nn.relu(q @ p['w3'] + p['b3'])
    q = jax.nn.relu(q @ p['w4'] + p['b4'])
    q = jax.nn.relu(q @ p['w5'] + p['b5'])
    return q @ p['w6'] + p['b6']


if __name__ == "__main__":
    # Small shapes consistent with the module:
    #   obs_space[0].shape = (F,)   -> state_features (B, F)
    #   obs_space[1].shape = (N, P) -> state_particles (B, N, P)
    #   action_space.shape = (A,)   -> action (B, A)
    B, N, P, F, A = 4, 8, 6, 10, 3

    key = jax.random.PRNGKey(0)
    k_feat, k_part, k_act, k_params = jax.random.split(key, 4)
    state_features = jax.random.normal(k_feat, (B, F), jnp.float32)
    state_particles = jax.random.normal(k_part, (B, N, P), jnp.float32)
    action = jax.random.normal(k_act, (B, A), jnp.float32)

    raw_params = init_params(k_params, P, F, A)
    padded_params = pad_params(raw_params, P, F, A)

    out = q_network_forward(state_features, state_particles, action, padded_params)
    out = jax.block_until_ready(out)

    ref = reference_forward(state_features, state_particles, action, raw_params)
    assert out.shape == (B, A)
    # bf16 matmul operands (f32 accumulation): tolerance relaxed vs. the f32 path.
    assert jnp.allclose(out, ref, atol=5e-2, rtol=5e-2), "mismatch vs reference"

    print("KERNEL_OK")
</pallas_src>

<mosaic_0001>
module attributes {stable_mosaic.version = 11 : i64} {
  func.func @q_network_kernel(%arg0: i32, %arg1: memref<128x128xbf16, #tpu.memory_space<vmem>>, %arg2: memref<16x128xbf16, #tpu.memory_space<vmem>>, %arg3: memref<128x256xbf16, #tpu.memory_space<vmem>>, %arg4: memref<1x256xf32, #tpu.memory_space<vmem>>, %arg5: memref<256x128xbf16, #tpu.memory_space<vmem>>, %arg6: memref<1x128xf32, #tpu.memory_space<vmem>>, %arg7: memref<128x512xbf16, #tpu.memory_space<vmem>>, %arg8: memref<128x512xbf16, #tpu.memory_space<vmem>>, %arg9: memref<1x512xf32, #tpu.memory_space<vmem>>, %arg10: memref<512x512xbf16, #tpu.memory_space<vmem>>, %arg11: memref<1x512xf32, #tpu.memory_space<vmem>>, %arg12: memref<512x384xbf16, #tpu.memory_space<vmem>>, %arg13: memref<1x384xf32, #tpu.memory_space<vmem>>, %arg14: memref<384x128xbf16, #tpu.memory_space<vmem>>, %arg15: memref<1x128xf32, #tpu.memory_space<vmem>>, %arg16: memref<16x128xf32, #tpu.memory_space<vmem>>) attributes {dimension_semantics = [#tpu.dimension_semantics<parallel>], iteration_bounds = array<i64: 2>, scalar_prefetch = 0 : i64, scratch_operands = 0 : i64, tpu.core_type = #tpu.core_type<tc>, window_params = [{transform_indices = @transform_0, window_bounds = array<i64: 128, 128>}, {transform_indices = @transform_1, window_bounds = array<i64: 16, 128>}, {pipeline_mode = #tpu.pipeline_mode<synchronous>, transform_indices = @transform_2, window_bounds = array<i64: 128, 256>}, {pipeline_mode = #tpu.pipeline_mode<synchronous>, transform_indices = @transform_3, window_bounds = array<i64: 1, 256>}, {pipeline_mode = #tpu.pipeline_mode<synchronous>, transform_indices = @transform_4, window_bounds = array<i64: 256, 128>}, {pipeline_mode = #tpu.pipeline_mode<synchronous>, transform_indices = @transform_5, window_bounds = array<i64: 1, 128>}, {pipeline_mode = #tpu.pipeline_mode<synchronous>, transform_indices = @transform_6, window_bounds = array<i64: 128, 512>}, {pipeline_mode = #tpu.pipeline_mode<synchronous>, transform_indices = @transform_7, window_bounds = array<i64: 128, 512>}, {pipeline_mode = #tpu.pipeline_mode<synchronous>, transform_indices = @transform_8, window_bounds = array<i64: 1, 512>}, {pipeline_mode = #tpu.pipeline_mode<synchronous>, transform_indices = @transform_9, window_bounds = array<i64: 512, 512>}, {pipeline_mode = #tpu.pipeline_mode<synchronous>, transform_indices = @transform_10, window_bounds = array<i64: 1, 512>}, {pipeline_mode = #tpu.pipeline_mode<synchronous>, transform_indices = @transform_11, window_bounds = array<i64: 512, 384>}, {pipeline_mode = #tpu.pipeline_mode<synchronous>, transform_indices = @transform_12, window_bounds = array<i64: 1, 384>}, {pipeline_mode = #tpu.pipeline_mode<synchronous>, transform_indices = @transform_13, window_bounds = array<i64: 384, 128>}, {pipeline_mode = #tpu.pipeline_mode<synchronous>, transform_indices = @transform_14, window_bounds = array<i64: 1, 128>}, {transform_indices = @transform_15, window_bounds = array<i64: 16, 128>}]} {
    %c0 = arith.constant 0 : index
    %c0_0 = arith.constant 0 : index
    %0 = vector.load %arg1[%c0, %c0_0] : memref<128x128xbf16, #tpu.memory_space<vmem>>, vector<128x128xbf16>
    %c0_1 = arith.constant 0 : index
    %c0_2 = arith.constant 0 : index
    %1 = vector.load %arg3[%c0_1, %c0_2] : memref<128x256xbf16, #tpu.memory_space<vmem>>, vector<128x256xbf16>
    %cst = arith.constant dense<0.000000e+00> : vector<128x256xf32>
    %2 = tpu.matmul %0, %1, %cst {dimension_numbers = #tpu.dot_dimension_numbers<[1], [0], [0], [1], [0, 0, 1, 1], [], []>} : vector<128x128xbf16>, vector<128x256xbf16>, vector<128x256xf32> -> vector<128x256xf32>
    %c0_3 = arith.constant 0 : index
    %c0_4 = arith.constant 0 : index
    %3 = vector.load %arg4[%c0_3, %c0_4] : memref<1x256xf32, #tpu.memory_space<vmem>>, vector<1x256xf32>
    %4 = vector.broadcast %3 : vector<1x256xf32> to vector<128x256xf32>
    %5 = arith.addf %2, %4 : vector<128x256xf32>
    %cst_5 = arith.constant 0.000000e+00 : f32
    %6 = vector.broadcast %cst_5 : f32 to vector<128x256xf32>
    %7 = arith.maximumf %5, %6 : vector<128x256xf32>
    %8 = arith.truncf %7 : vector<128x256xf32> to vector<128x256xbf16>
    %c0_6 = arith.constant 0 : index
    %c0_7 = arith.constant 0 : index
    %9 = vector.load %arg5[%c0_6, %c0_7] : memref<256x128xbf16, #tpu.memory_space<vmem>>, vector<256x128xbf16>
    %cst_8 = arith.constant dense<0.000000e+00> : vector<128x128xf32>
    %10 = tpu.matmul %8, %9, %cst_8 {dimension_numbers = #tpu.dot_dimension_numbers<[1], [0], [0], [1], [0, 0, 1, 1], [], []>} : vector<128x256xbf16>, vector<256x128xbf16>, vector<128x128xf32> -> vector<128x128xf32>
    %c0_9 = arith.constant 0 : index
    %c0_10 = arith.constant 0 : index
    %11 = vector.load %arg6[%c0_9, %c0_10] : memref<1x128xf32, #tpu.memory_space<vmem>>, vector<1x128xf32>
    %12 = vector.broadcast %11 : vector<1x128xf32> to vector<128x128xf32>
    %13 = arith.addf %10, %12 : vector<128x128xf32>
    %cst_11 = arith.constant 0.000000e+00 : f32
    %14 = vector.broadcast %cst_11 : f32 to vector<128x128xf32>
    %15 = arith.maximumf %13, %14 : vector<128x128xf32>
    %16 = vector.shape_cast %15 : vector<128x128xf32> to vector<16x8x128xf32>
    %cst_12 = arith.constant dense<0.000000e+00> : vector<16x128xf32>
    %17 = vector.multi_reduction <add>, %16, %cst_12 [1] : vector<16x8x128xf32> to vector<16x128xf32>
    %cst_13 = arith.constant 1.250000e-01 : f32
    %18 = vector.broadcast %cst_13 : f32 to vector<16x128xf32>
    %19 = arith.mulf %17, %18 : vector<16x128xf32>
    %20 = arith.truncf %19 : vector<16x128xf32> to vector<16x128xbf16>
    %c0_14 = arith.constant 0 : index
    %c0_15 = arith.constant 0 : index
    %21 = vector.load %arg7[%c0_14, %c0_15] : memref<128x512xbf16, #tpu.memory_space<vmem>>, vector<128x512xbf16>
    %cst_16 = arith.constant dense<0.000000e+00> : vector<16x512xf32>
    %22 = tpu.matmul %20, %21, %cst_16 {dimension_numbers = #tpu.dot_dimension_numbers<[1], [0], [0], [1], [0, 0, 1, 1], [], []>} : vector<16x128xbf16>, vector<128x512xbf16>, vector<16x512xf32> -> vector<16x512xf32>
    %c0_17 = arith.constant 0 : index
    %c0_18 = arith.constant 0 : index
    %23 = vector.load %arg2[%c0_17, %c0_18] : memref<16x128xbf16, #tpu.memory_space<vmem>>, vector<16x128xbf16>
    %c0_19 = arith.constant 0 : index
    %c0_20 = arith.constant 0 : index
    %24 = vector.load %arg8[%c0_19, %c0_20] : memref<128x512xbf16, #tpu.memory_space<vmem>>, vector<128x512xbf16>
    %cst_21 = arith.constant dense<0.000000e+00> : vector<16x512xf32>
    %25 = tpu.matmul %23, %24, %cst_21 {dimension_numbers = #tpu.dot_dimension_numbers<[1], [0], [0], [1], [0, 0, 1, 1], [], []>} : vector<16x128xbf16>, vector<128x512xbf16>, vector<16x512xf32> -> vector<16x512xf32>
    %26 = arith.addf %22, %25 : vector<16x512xf32>
    %c0_22 = arith.constant 0 : index
    %c0_23 = arith.constant 0 : index
    %27 = vector.load %arg9[%c0_22, %c0_23] : memref<1x512xf32, #tpu.memory_space<vmem>>, vector<1x512xf32>
    %28 = vector.broadcast %27 : vector<1x512xf32> to vector<16x512xf32>
    %29 = arith.addf %26, %28 : vector<16x512xf32>
    %cst_24 = arith.constant 0.000000e+00 : f32
    %30 = vector.broadcast %cst_24 : f32 to vector<16x512xf32>
    %31 = arith.maximumf %29, %30 : vector<16x512xf32>
    %32 = arith.truncf %31 : vector<16x512xf32> to vector<16x512xbf16>
    %c0_25 = arith.constant 0 : index
    %c0_26 = arith.constant 0 : index
    %33 = vector.load %arg10[%c0_25, %c0_26] : memref<512x512xbf16, #tpu.memory_space<vmem>>, vector<512x512xbf16>
    %cst_27 = arith.constant dense<0.000000e+00> : vector<16x512xf32>
    %34 = tpu.matmul %32, %33, %cst_27 {dimension_numbers = #tpu.dot_dimension_numbers<[1], [0], [0], [1], [0, 0, 1, 1], [], []>} : vector<16x512xbf16>, vector<512x512xbf16>, vector<16x512xf32> -> vector<16x512xf32>
    %c0_28 = arith.constant 0 : index
    %c0_29 = arith.constant 0 : index
    %35 = vector.load %arg11[%c0_28, %c0_29] : memref<1x512xf32, #tpu.memory_space<vmem>>, vector<1x512xf32>
    %36 = vector.broadcast %35 : vector<1x512xf32> to vector<16x512xf32>
    %37 = arith.addf %34, %36 : vector<16x512xf32>
    %cst_30 = arith.constant 0.000000e+00 : f32
    %38 = vector.broadcast %cst_30 : f32 to vector<16x512xf32>
    %39 = arith.maximumf %37, %38 : vector<16x512xf32>
    %40 = arith.truncf %39 : vector<16x512xf32> to vector<16x512xbf16>
    %c0_31 = arith.constant 0 : index
    %c0_32 = arith.constant 0 : index
    %41 = vector.load %arg12[%c0_31, %c0_32] : memref<512x384xbf16, #tpu.memory_space<vmem>>, vector<512x384xbf16>
    %cst_33 = arith.constant dense<0.000000e+00> : vector<16x384xf32>
    %42 = tpu.matmul %40, %41, %cst_33 {dimension_numbers = #tpu.dot_dimension_numbers<[1], [0], [0], [1], [0, 0, 1, 1], [], []>} : vector<16x512xbf16>, vector<512x384xbf16>, vector<16x384xf32> -> vector<16x384xf32>
    %c0_34 = arith.constant 0 : index
    %c0_35 = arith.constant 0 : index
    %43 = vector.load %arg13[%c0_34, %c0_35] : memref<1x384xf32, #tpu.memory_space<vmem>>, vector<1x384xf32>
    %44 = vector.broadcast %43 : vector<1x384xf32> to vector<16x384xf32>
    %45 = arith.addf %42, %44 : vector<16x384xf32>
    %cst_36 = arith.constant 0.000000e+00 : f32
    %46 = vector.broadcast %cst_36 : f32 to vector<16x384xf32>
    %47 = arith.maximumf %45, %46 : vector<16x384xf32>
    %48 = arith.truncf %47 : vector<16x384xf32> to vector<16x384xbf16>
    %c0_37 = arith.constant 0 : index
    %c0_38 = arith.constant 0 : index
    %49 = vector.load %arg14[%c0_37, %c0_38] : memref<384x128xbf16, #tpu.memory_space<vmem>>, vector<384x128xbf16>
    %cst_39 = arith.constant dense<0.000000e+00> : vector<16x128xf32>
    %50 = tpu.matmul %48, %49, %cst_39 {dimension_numbers = #tpu.dot_dimension_numbers<[1], [0], [0], [1], [0, 0, 1, 1], [], []>} : vector<16x384xbf16>, vector<384x128xbf16>, vector<16x128xf32> -> vector<16x128xf32>
    %c0_40 = arith.constant 0 : index
    %c0_41 = arith.constant 0 : index
    %51 = vector.load %arg15[%c0_40, %c0_41] : memref<1x128xf32, #tpu.memory_space<vmem>>, vector<1x128xf32>
    %52 = vector.broadcast %51 : vector<1x128xf32> to vector<16x128xf32>
    %53 = arith.addf %50, %52 : vector<16x128xf32>
    %c0_42 = arith.constant 0 : index
    %c0_43 = arith.constant 0 : index
    %54 = vector.load %arg16[%c0_42, %c0_43] : memref<16x128xf32, #tpu.memory_space<vmem>>, vector<16x128xf32>
    tpu.vector_store %arg16[%c0_42, %c0_43], %53 {strides = array<i32>} : memref<16x128xf32, #tpu.memory_space<vmem>>, vector<16x128xf32>,
    return
  }
  func.func @transform_0(%arg0: i32) -> (i32, i32) {
    %c0_i32 = arith.constant 0 : i32
    %c0_i32_0 = arith.constant 0 : i32
    return %arg0, %c0_i32 : i32, i32
  }
  func.func @transform_1(%arg0: i32) -> (i32, i32) {
    %c0_i32 = arith.constant 0 : i32
    %c0_i32_0 = arith.constant 0 : i32
    return %arg0, %c0_i32 : i32, i32
  }
  func.func @transform_2(%arg0: i32) -> (i32, i32) {
    %c0_i32 = arith.constant 0 : i32
    %c0_i32_0 = arith.constant 0 : i32
    %c0_i32_1 = arith.constant 0 : i32
    return %c0_i32, %c0_i32_0 : i32, i32
  }
  func.func @transform_3(%arg0: i32) -> (i32, i32) {
    %c0_i32 = arith.constant 0 : i32
    %c0_i32_0 = arith.constant 0 : i32
    %c0_i32_1 = arith.constant 0 : i32
    return %c0_i32, %c0_i32_0 : i32, i32
  }
  func.func @transform_4(%arg0: i32) -> (i32, i32) {
    %c0_i32 = arith.constant 0 : i32
    %c0_i32_0 = arith.constant 0 : i32
    %c0_i32_1 = arith.constant 0 : i32
    return %c0_i32, %c0_i32_0 : i32, i32
  }
  func.func @transform_5(%arg0: i32) -> (i32, i32) {
    %c0_i32 = arith.constant 0 : i32
    %c0_i32_0 = arith.constant 0 : i32
    %c0_i32_1 = arith.constant 0 : i32
    return %c0_i32, %c0_i32_0 : i32, i32
  }
  func.func @transform_6(%arg0: i32) -> (i32, i32) {
    %c0_i32 = arith.constant 0 : i32
    %c0_i32_0 = arith.constant 0 : i32
    %c0_i32_1 = arith.constant 0 : i32
    return %c0_i32, %c0_i32_0 : i32, i32
  }
  func.func @transform_7(%arg0: i32) -> (i32, i32) {
    %c0_i32 = arith.constant 0 : i32
    %c0_i32_0 = arith.constant 0 : i32
    %c0_i32_1 = arith.constant 0 : i32
    return %c0_i32, %c0_i32_0 : i32, i32
  }
  func.func @transform_8(%arg0: i32) -> (i32, i32) {
    %c0_i32 = arith.constant 0 : i32
    %c0_i32_0 = arith.constant 0 : i32
    %c0_i32_1 = arith.constant 0 : i32
    return %c0_i32, %c0_i32_0 : i32, i32
  }
  func.func @transform_9(%arg0: i32) -> (i32, i32) {
    %c0_i32 = arith.constant 0 : i32
    %c0_i32_0 = arith.constant 0 : i32
    %c0_i32_1 = arith.constant 0 : i32
    return %c0_i32, %c0_i32_0 : i32, i32
  }
  func.func @transform_10(%arg0: i32) -> (i32, i32) {
    %c0_i32 = arith.constant 0 : i32
    %c0_i32_0 = arith.constant 0 : i32
    %c0_i32_1 = arith.constant 0 : i32
    return %c0_i32, %c0_i32_0 : i32, i32
  }
  func.func @transform_11(%arg0: i32) -> (i32, i32) {
    %c0_i32 = arith.constant 0 : i32
    %c0_i32_0 = arith.constant 0 : i32
    %c0_i32_1 = arith.constant 0 : i32
    return %c0_i32, %c0_i32_0 : i32, i32
  }
  func.func @transform_12(%arg0: i32) -> (i32, i32) {
    %c0_i32 = arith.constant 0 : i32
    %c0_i32_0 = arith.constant 0 : i32
    %c0_i32_1 = arith.constant 0 : i32
    return %c0_i32, %c0_i32_0 : i32, i32
  }
  func.func @transform_13(%arg0: i32) -> (i32, i32) {
    %c0_i32 = arith.constant 0 : i32
    %c0_i32_0 = arith.constant 0 : i32
    %c0_i32_1 = arith.constant 0 : i32
    return %c0_i32, %c0_i32_0 : i32, i32
  }
  func.func @transform_14(%arg0: i32) -> (i32, i32) {
    %c0_i32 = arith.constant 0 : i32
    %c0_i32_0 = arith.constant 0 : i32
    %c0_i32_1 = arith.constant 0 : i32
    return %c0_i32, %c0_i32_0 : i32, i32
  }
  func.func @transform_15(%arg0: i32) -> (i32, i32) {
    %c0_i32 = arith.constant 0 : i32
    %c0_i32_0 = arith.constant 0 : i32
    return %arg0, %c0_i32 : i32, i32
  }
}

</mosaic_0001>

<llo_original>
// kernel: tpu_custom_call.1
$region0: #{tpu_custom_call.1}
  #allocation0 [shape = 'u32[]', space=smem, size = 0x4, offset = 0x4, fixed_abs, tag = 'smem constant byte address 0x4 - core index']
  #allocation1 [shape = 'u32[144,128]{1,0:T(1,128)}', space=vmem, size = 0x12000, scoped, tag = 'internal scratch']
  %s0 = inlined_call_operand.hbm [shape: bf16[256,128], index: 0, kind: input, shape index: {}]
  %s1 = inlined_call_operand.hbm [shape: bf16[32,128], index: 1, kind: input, shape index: {}]
  %s2 = inlined_call_operand.hbm [shape: bf16[128,256], index: 2, kind: input, shape index: {}]
  %s3 = inlined_call_operand.hbm [shape: f32[1,256], index: 3, kind: input, shape index: {}]
  %s4 = inlined_call_operand.hbm [shape: bf16[256,128], index: 4, kind: input, shape index: {}]
  %s5 = inlined_call_operand.vmem [shape: f32[1,128], index: 5, kind: input, shape index: {}]
  %s6 = inlined_call_operand.hbm [shape: bf16[128,512], index: 6, kind: input, shape index: {}]
  %s7 = inlined_call_operand.hbm [shape: bf16[128,512], index: 7, kind: input, shape index: {}]
  %s8 = inlined_call_operand.vmem [shape: f32[1,512], index: 8, kind: input, shape index: {}]
  %s9 = inlined_call_operand.hbm [shape: bf16[512,512], index: 9, kind: input, shape index: {}]
  %s10 = inlined_call_operand.vmem [shape: f32[1,512], index: 10, kind: input, shape index: {}]
  %s11 = inlined_call_operand.hbm [shape: bf16[512,384], index: 11, kind: input, shape index: {}]
  %s12 = inlined_call_operand.vmem [shape: f32[1,384], index: 12, kind: input, shape index: {}]
  %s13 = inlined_call_operand.hbm [shape: bf16[384,128], index: 13, kind: input, shape index: {}]
  %s14 = inlined_call_operand.vmem [shape: f32[1,128], index: 14, kind: input, shape index: {}]
  %s15 = inlined_call_operand.hbm [shape: f32[32,128], index: 15, kind: output, shape index: {}]
  %s16 = sld [smem:[#allocation0]]
  $region133: #{tpu_custom_call.1} parent=0
    _
  %s18 = ssub.s32 1, %s16
  %s19 = scalar_select 0, %s18, %s16
  $region1: #{tpu_custom_call.1} parent=0
    #allocation2 [shape = 'u8[65536]{0}', space=vmem, size = 0x10000, scoped, tag = 'input window, operand 0']
    #allocation3 [shape = 's32[2]{0}', space=sflag, size = 0x8, scoped, tag = 'scoped memory for tpu_custom_call.1']
    #allocation4 [shape = 's32[2]{0}', space=sflag, size = 0x8, scoped, tag = 'scoped memory for tpu_custom_call.1']
    #allocation5 [shape = 'u8[8192]{0}', space=vmem, size = 0x2000, scoped, tag = 'input window, operand 1']
    #allocation6 [shape = 's32[2]{0}', space=sflag, size = 0x8, scoped, tag = 'scoped memory for tpu_custom_call.1']
    #allocation7 [shape = 'u8[65536]{0}', space=vmem, size = 0x10000, scoped, tag = 'input window, operand 2, single buffered']
    #allocation8 [shape = 'u8[1024]{0}', space=vmem, size = 0x400, scoped, tag = 'input window, operand 3, single buffered']
    #allocation9 [shape = 's32[1]{0}', space=sflag, size = 0x4, scoped, tag = 'scoped memory for tpu_custom_call.1']
    #allocation10 [shape = 'u8[65536]{0}', space=vmem, size = 0x10000, scoped, tag = 'input window, operand 4, single buffered']
    #allocation11 [shape = 'u8[131072]{0}', space=vmem, size = 0x20000, scoped, tag = 'input window, operand 6, single buffered']
    #allocation12 [shape = 's32[1]{0}', space=sflag, size = 0x4, scoped, tag = 'scoped memory for tpu_custom_call.1']
    #allocation13 [shape = 'u8[131072]{0}', space=vmem, size = 0x20000, scoped, tag = 'input window, operand 7, single buffered']
    #allocation14 [shape = 'u8[524288]{0}', space=vmem, size = 0x80000, scoped, tag = 'input window, operand 9, single buffered']
    #allocation15 [shape = 's32[1]{0}', space=sflag, size = 0x4, scoped, tag = 'scoped memory for tpu_custom_call.1']
    #allocation16 [shape = 'u8[393216]{0}', space=vmem, size = 0x60000, scoped, tag = 'input window, operand 11, single buffered']
    #allocation17 [shape = 'u8[98304]{0}', space=vmem, size = 0x18000, scoped, tag = 'input window, operand 13, single buffered']
    #allocation18 [shape = 's32[1]{0}', space=sflag, size = 0x4, scoped, tag = 'scoped memory for tpu_custom_call.1']
    #allocation19 [shape = 'u8[16384]{0}', space=vmem, size = 0x4000, scoped, tag = 'output window, operand 0']
    %20 = vsyncpa [#allocation3], 0
    %s21 = scalar_lea.sflag [#allocation3], 1
    %22 = vsyncpa %s21, 0
    %23 = vsyncpa [#allocation6], 0
    %s24 = scalar_lea.sflag [#allocation6], 1
    %25 = vsyncpa %s24, 0
    %26 = vsyncpa [#allocation9], 0
    %27 = vsyncpa [#allocation12], 0
    %28 = vsyncpa [#allocation15], 0
    %29 = vsyncpa [#allocation18], 0
    %30 = vsyncpa [#allocation4], 0
    %s31 = scalar_lea.sflag [#allocation4], 1
    %32 = vsyncpa %s31, 0
    loop: start=0, step=1, limit=4
    $region2: #{tpu_custom_call.1} parent=1 // loop_pre_header
      _
    $region3: #{tpu_custom_call.1} parent=1 // loop_header
      %s34 = sphi 0, %s38
      %p35 = scmp.ge.s32.totalorder %s34, 4
      %s44 = sphi 0, %s46
      %s47 = sphi 0, %s44
      %s48 = sphi 0, %s47
      %s64 = sphi 0, %s48
      %s70 = sphi 0, %s72
      %s73 = sphi 0, %s70
      %s74 = sphi 0, %s73
      %s90 = sphi 0, %s74
      %s94 = sphi 0, %s94
      %s96 = sphi 0, %s94
      %s97 = sphi 0, %s96
      %s111 = sphi 0, %s97
      %s115 = sphi 0, %s115
      %s117 = sphi 0, %s115
      %s118 = sphi 0, %s117
      %s132 = sphi 0, %s118
      %s136 = sphi 0, %s136
      %s138 = sphi 0, %s136
      %s139 = sphi 0, %s138
      %s153 = sphi 0, %s139
      %s157 = sphi 0, %s157
      %s159 = sphi 0, %s157
      %s160 = sphi 0, %s159
      %s174 = sphi 0, %s160
      %s178 = sphi 0, %s178
      %s180 = sphi 0, %s178
      %s181 = sphi 0, %s180
      %s195 = sphi 0, %s181
      %s199 = sphi 0, %s199
      %s201 = sphi 0, %s199
      %s202 = sphi 0, %s201
      %s216 = sphi 0, %s202
      %s220 = sphi 0, %s220
      %s222 = sphi 0, %s220
      %s223 = sphi 0, %s222
      %s237 = sphi 0, %s223
      %s241 = sphi 0, %s241
      %s243 = sphi 0, %s241
      %s244 = sphi 0, %s243
      %s258 = sphi 0, %s244
      %s262 = sphi 0, %s262
      %s264 = sphi 0, %s262
      %s265 = sphi 0, %s264
      %s279 = sphi 0, %s265
      %s283 = sphi 0, %s283
      %s285 = sphi 0, %s283
      %s286 = sphi 0, %s285
      %s300 = sphi 0, %s286
      %s304 = sphi 0, %s304
      %s306 = sphi 0, %s304
      %s307 = sphi 0, %s306
      %s321 = sphi 0, %s307
      %s325 = sphi 0, %s325
      %s327 = sphi 0, %s325
      %s328 = sphi 0, %s327
      %s342 = sphi 0, %s328
      %s346 = sphi 0, %s346
      %s348 = sphi 0, %s346
      %s349 = sphi 0, %s348
      %s363 = sphi 0, %s349
      %s369 = sphi 0, %s371
      %s372 = sphi 0, %s369
      %s373 = sphi 0, %s372
      %s389 = sphi 0, %s373
    $region4: #{tpu_custom_call.1} parent=1 // loop_header_branch
      %37 = sbr.rel (%p35) target = $region8
    $region5: #{tpu_custom_call.1} parent=1 // loop_body
      %s39 = ssub.s32 %s34, 1
      %s40 = ssub.s32 %s34, 2
      %s41 = sadd.s32 %s34, 1
      %s42 = ssub.s32 %s34, %s41
      %p43 = scmp.eq.s32.totalorder %s42, 0
      %s45 = sadd.s32 %s44, 1
      %s46 = scalar_select %p43, %s44, %s45
      %p49 = pneg %p43
      %p50 = scmp.eq.s32.totalorder %s34, 1
      %p51 = por %p49, %p50
      %p52 = scmp.ne.s32.totalorder %s44, %s47
      %p53 = scmp.eq.s32.totalorder %s34, 0
      %p54 = por %p52, %p53
      %p55 = scmp.ne.s32.totalorder %s44, %s47
      %p56 = scmp.eq.s32.totalorder %s39, 1
      %p57 = por %p55, %p56
      %p58 = scmp.ne.s32.totalorder %s47, %s48
      %p59 = scmp.eq.s32.totalorder %s39, 0
      %p60 = por %p58, %p59
      %p61 = scmp.ne.s32.totalorder %s47, %s48
      %p62 = scmp.eq.s32.totalorder %s40, 1
      %p63 = por %p61, %p62
      %p65 = scmp.ne.s32.totalorder %s48, %s64
      %p66 = scmp.eq.s32.totalorder %s40, 0
      %p67 = por %p65, %p66
      %s68 = ssub.s32 %s34, %s41
      %p69 = scmp.eq.s32.totalorder %s68, 0
      %s71 = sadd.s32 %s70, 1
      %s72 = scalar_select %p69, %s70, %s71
      %p75 = pneg %p69
      %p76 = scmp.eq.s32.totalorder %s34, 1
      %p77 = por %p75, %p76
      %p78 = scmp.ne.s32.totalorder %s70, %s73
      %p79 = scmp.eq.s32.totalorder %s34, 0
      %p80 = por %p78, %p79
      %p81 = scmp.ne.s32.totalorder %s70, %s73
      %p82 = scmp.eq.s32.totalorder %s39, 1
      %p83 = por %p81, %p82
      %p84 = scmp.ne.s32.totalorder %s73, %s74
      %p85 = scmp.eq.s32.totalorder %s39, 0
      %p86 = por %p84, %p85
      %p87 = scmp.ne.s32.totalorder %s73, %s74
      %p88 = scmp.eq.s32.totalorder %s40, 1
      %p89 = por %p87, %p88
      %p91 = scmp.ne.s32.totalorder %s74, %s90
      %p92 = scmp.eq.s32.totalorder %s40, 0
      %p93 = por %p91, %p92
      %s95 = sadd.s32 %s94, 1
      %p98 = scmp.eq.s32.totalorder %s34, 1
      %p99 = scmp.ne.s32.totalorder %s94, %s96
      %p100 = scmp.eq.s32.totalorder %s34, 0
      %p101 = por %p99, %p100
      %p102 = scmp.ne.s32.totalorder %s94, %s96
      %p103 = scmp.eq.s32.totalorder %s39, 1
      %p104 = por %p102, %p103
      %p105 = scmp.ne.s32.totalorder %s96, %s97
      %p106 = scmp.eq.s32.totalorder %s39, 0
      %p107 = por %p105, %p106
      %p108 = scmp.ne.s32.totalorder %s96, %s97
      %p109 = scmp.eq.s32.totalorder %s40, 1
      %p110 = por %p108, %p109
      %p112 = scmp.ne.s32.totalorder %s97, %s111
      %p113 = scmp.eq.s32.totalorder %s40, 0
      %p114 = por %p112, %p113
      %s116 = sadd.s32 %s115, 1
      %p119 = scmp.eq.s32.totalorder %s34, 1
      %p120 = scmp.ne.s32.totalorder %s115, %s117
      %p121 = scmp.eq.s32.totalorder %s34, 0
      %p122 = por %p120, %p121
      %p123 = scmp.ne.s32.totalorder %s115, %s117
      %p124 = scmp.eq.s32.totalorder %s39, 1
      %p125 = por %p123, %p124
      %p126 = scmp.ne.s32.totalorder %s117, %s118
      %p127 = scmp.eq.s32.totalorder %s39, 0
      %p128 = por %p126, %p127
      %p129 = scmp.ne.s32.totalorder %s117, %s118
      %p130 = scmp.eq.s32.totalorder %s40, 1
      %p131 = por %p129, %p130
      %p133 = scmp.ne.s32.totalorder %s118, %s132
      %p134 = scmp.eq.s32.totalorder %s40, 0
      %p135 = por %p133, %p134
      %s137 = sadd.s32 %s136, 1
      %p140 = scmp.eq.s32.totalorder %s34, 1
      %p141 = scmp.ne.s32.totalorder %s136, %s138
      %p142 = scmp.eq.s32.totalorder %s34, 0
      %p143 = por %p141, %p142
      %p144 = scmp.ne.s32.totalorder %s136, %s138
      %p145 = scmp.eq.s32.totalorder %s39, 1
      %p146 = por %p144, %p145
      %p147 = scmp.ne.s32.totalorder %s138, %s139
      %p148 = scmp.eq.s32.totalorder %s39, 0
      %p149 = por %p147, %p148
      %p150 = scmp.ne.s32.totalorder %s138, %s139
      %p151 = scmp.eq.s32.totalorder %s40, 1
      %p152 = por %p150, %p151
      %p154 = scmp.ne.s32.totalorder %s139, %s153
      %p155 = scmp.eq.s32.totalorder %s40, 0
      %p156 = por %p154, %p155
      %s158 = sadd.s32 %s157, 1
      %p161 = scmp.eq.s32.totalorder %s34, 1
      %p162 = scmp.ne.s32.totalorder %s157, %s159
      %p163 = scmp.eq.s32.totalorder %s34, 0
      %p164 = por %p162, %p163
      %p165 = scmp.ne.s32.totalorder %s157, %s159
      %p166 = scmp.eq.s32.totalorder %s39, 1
      %p167 = por %p165, %p166
      %p168 = scmp.ne.s32.totalorder %s159, %s160
      %p169 = scmp.eq.s32.totalorder %s39, 0
      %p170 = por %p168, %p169
      %p171 = scmp.ne.s32.totalorder %s159, %s160
      %p172 = scmp.eq.s32.totalorder %s40, 1
      %p173 = por %p171, %p172
      %p175 = scmp.ne.s32.totalorder %s160, %s174
      %p176 = scmp.eq.s32.totalorder %s40, 0
      %p177 = por %p175, %p176
      %s179 = sadd.s32 %s178, 1
      %p182 = scmp.eq.s32.totalorder %s34, 1
      %p183 = scmp.ne.s32.totalorder %s178, %s180
      %p184 = scmp.eq.s32.totalorder %s34, 0
      %p185 = por %p183, %p184
      %p186 = scmp.ne.s32.totalorder %s178, %s180
      %p187 = scmp.eq.s32.totalorder %s39, 1
      %p188 = por %p186, %p187
      %p189 = scmp.ne.s32.totalorder %s180, %s181
      %p190 = scmp.eq.s32.totalorder %s39, 0
      %p191 = por %p189, %p190
      %p192 = scmp.ne.s32.totalorder %s180, %s181
      %p193 = scmp.eq.s32.totalorder %s40, 1
      %p194 = por %p192, %p193
      %p196 = scmp.ne.s32.totalorder %s181, %s195
      %p197 = scmp.eq.s32.totalorder %s40, 0
      %p198 = por %p196, %p197
      %s200 = sadd.s32 %s199, 1
      %p203 = scmp.eq.s32.totalorder %s34, 1
      %p204 = scmp.ne.s32.totalorder %s199, %s201
      %p205 = scmp.eq.s32.totalorder %s34, 0
      %p206 = por %p204, %p205
      %p207 = scmp.ne.s32.totalorder %s199, %s201
      %p208 = scmp.eq.s32.totalorder %s39, 1
      %p209 = por %p207, %p208
      %p210 = scmp.ne.s32.totalorder %s201, %s202
      %p211 = scmp.eq.s32.totalorder %s39, 0
      %p212 = por %p210, %p211
      %p213 = scmp.ne.s32.totalorder %s201, %s202
      %p214 = scmp.eq.s32.totalorder %s40, 1
      %p215 = por %p213, %p214
      %p217 = scmp.ne.s32.totalorder %s202, %s216
      %p218 = scmp.eq.s32.totalorder %s40, 0
      %p219 = por %p217, %p218
      %s221 = sadd.s32 %s220, 1
      %p224 = scmp.eq.s32.totalorder %s34, 1
      %p225 = scmp.ne.s32.totalorder %s220, %s222
      %p226 = scmp.eq.s32.totalorder %s34, 0
      %p227 = por %p225, %p226
      %p228 = scmp.ne.s32.totalorder %s220, %s222
      %p229 = scmp.eq.s32.totalorder %s39, 1
      %p230 = por %p228, %p229
      %p231 = scmp.ne.s32.totalorder %s222, %s223
      %p232 = scmp.eq.s32.totalorder %s39, 0
      %p233 = por %p231, %p232
      %p234 = scmp.ne.s32.totalorder %s222, %s223
      %p235 = scmp.eq.s32.totalorder %s40, 1
      %p236 = por %p234, %p235
      %p238 = scmp.ne.s32.totalorder %s223, %s237
      %p239 = scmp.eq.s32.totalorder %s40, 0
      %p240 = por %p238, %p239
      %s242 = sadd.s32 %s241, 1
      %p245 = scmp.eq.s32.totalorder %s34, 1
      %p246 = scmp.ne.s32.totalorder %s241, %s243
      %p247 = scmp.eq.s32.totalorder %s34, 0
      %p248 = por %p246, %p247
      %p249 = scmp.ne.s32.totalorder %s241, %s243
      %p250 = scmp.eq.s32.totalorder %s39, 1
      %p251 = por %p249, %p250
      %p252 = scmp.ne.s32.totalorder %s243, %s244
      %p253 = scmp.eq.s32.totalorder %s39, 0
      %p254 = por %p252, %p253
      %p255 = scmp.ne.s32.totalorder %s243, %s244
      %p256 = scmp.eq.s32.totalorder %s40, 1
      %p257 = por %p255, %p256
      %p259 = scmp.ne.s32.totalorder %s244, %s258
      %p260 = scmp.eq.s32.totalorder %s40, 0
      %p261 = por %p259, %p260
      %s263 = sadd.s32 %s262, 1
      %p266 = scmp.eq.s32.totalorder %s34, 1
      %p267 = scmp.ne.s32.totalorder %s262, %s264
      %p268 = scmp.eq.s32.totalorder %s34, 0
      %p269 = por %p267, %p268
      %p270 = scmp.ne.s32.totalorder %s262, %s264
      %p271 = scmp.eq.s32.totalorder %s39, 1
      %p272 = por %p270, %p271
      %p273 = scmp.ne.s32.totalorder %s264, %s265
      %p274 = scmp.eq.s32.totalorder %s39, 0
      %p275 = por %p273, %p274
      %p276 = scmp.ne.s32.totalorder %s264, %s265
      %p277 = scmp.eq.s32.totalorder %s40, 1
      %p278 = por %p276, %p277
      %p280 = scmp.ne.s32.totalorder %s265, %s279
      %p281 = scmp.eq.s32.totalorder %s40, 0
      %p282 = por %p280, %p281
      %s284 = sadd.s32 %s283, 1
      %p287 = scmp.eq.s32.totalorder %s34, 1
      %p288 = scmp.ne.s32.totalorder %s283, %s285
      %p289 = scmp.eq.s32.totalorder %s34, 0
      %p290 = por %p288, %p289
      %p291 = scmp.ne.s32.totalorder %s283, %s285
      %p292 = scmp.eq.s32.totalorder %s39, 1
      %p293 = por %p291, %p292
      %p294 = scmp.ne.s32.totalorder %s285, %s286
      %p295 = scmp.eq.s32.totalorder %s39, 0
      %p296 = por %p294, %p295
      %p297 = scmp.ne.s32.totalorder %s285, %s286
      %p298 = scmp.eq.s32.totalorder %s40, 1
      %p299 = por %p297, %p298
      %p301 = scmp.ne.s32.totalorder %s286, %s300
      %p302 = scmp.eq.s32.totalorder %s40, 0
      %p303 = por %p301, %p302
      %s305 = sadd.s32 %s304, 1
      %p308 = scmp.eq.s32.totalorder %s34, 1
      %p309 = scmp.ne.s32.totalorder %s304, %s306
      %p310 = scmp.eq.s32.totalorder %s34, 0
      %p311 = por %p309, %p310
      %p312 = scmp.ne.s32.totalorder %s304, %s306
      %p313 = scmp.eq.s32.totalorder %s39, 1
      %p314 = por %p312, %p313
      %p315 = scmp.ne.s32.totalorder %s306, %s307
      %p316 = scmp.eq.s32.totalorder %s39, 0
      %p317 = por %p315, %p316
      %p318 = scmp.ne.s32.totalorder %s306, %s307
      %p319 = scmp.eq.s32.totalorder %s40, 1
      %p320 = por %p318, %p319
      %p322 = scmp.ne.s32.totalorder %s307, %s321
      %p323 = scmp.eq.s32.totalorder %s40, 0
      %p324 = por %p322, %p323
      %s326 = sadd.s32 %s325, 1
      %p329 = scmp.eq.s32.totalorder %s34, 1
      %p330 = scmp.ne.s32.totalorder %s325, %s327
      %p331 = scmp.eq.s32.totalorder %s34, 0
      %p332 = por %p330, %p331
      %p333 = scmp.ne.s32.totalorder %s325, %s327
      %p334 = scmp.eq.s32.totalorder %s39, 1
      %p335 = por %p333, %p334
      %p336 = scmp.ne.s32.totalorder %s327, %s328
      %p337 = scmp.eq.s32.totalorder %s39, 0
      %p338 = por %p336, %p337
      %p339 = scmp.ne.s32.totalorder %s327, %s328
      %p340 = scmp.eq.s32.totalorder %s40, 1
      %p341 = por %p339, %p340
      %p343 = scmp.ne.s32.totalorder %s328, %s342
      %p344 = scmp.eq.s32.totalorder %s40, 0
      %p345 = por %p343, %p344
      %s347 = sadd.s32 %s346, 1
      %p350 = scmp.eq.s32.totalorder %s34, 1
      %p351 = scmp.ne.s32.totalorder %s346, %s348
      %p352 = scmp.eq.s32.totalorder %s34, 0
      %p353 = por %p351, %p352
      %p354 = scmp.ne.s32.totalorder %s346, %s348
      %p355 = scmp.eq.s32.totalorder %s39, 1
      %p356 = por %p354, %p355
      %p357 = scmp.ne.s32.totalorder %s348, %s349
      %p358 = scmp.eq.s32.totalorder %s39, 0
      %p359 = por %p357, %p358
      %p360 = scmp.ne.s32.totalorder %s348, %s349
      %p361 = scmp.eq.s32.totalorder %s40, 1
      %p362 = por %p360, %p361
      %p364 = scmp.ne.s32.totalorder %s349, %s363
      %p365 = scmp.eq.s32.totalorder %s40, 0
      %p366 = por %p364, %p365
      %s367 = ssub.s32 %s34, %s41
      %p368 = scmp.eq.s32.totalorder %s367, 0
      %s370 = sadd.s32 %s369, 1
      %s371 = scalar_select %p368, %s369, %s370
      %p374 = pneg %p368
      %p375 = scmp.eq.s32.totalorder %s34, 1
      %p376 = por %p374, %p375
      %p377 = scmp.ne.s32.totalorder %s369, %s372
      %p378 = scmp.eq.s32.totalorder %s34, 0
      %p379 = por %p377, %p378
      %p380 = scmp.ne.s32.totalorder %s369, %s372
      %p381 = scmp.eq.s32.totalorder %s39, 1
      %p382 = por %p380, %p381
      %p383 = scmp.ne.s32.totalorder %s372, %s373
      %p384 = scmp.eq.s32.totalorder %s39, 0
      %p385 = por %p383, %p384
      %p386 = scmp.ne.s32.totalorder %s372, %s373
      %p387 = scmp.eq.s32.totalorder %s40, 1
      %p388 = por %p386, %p387
      %p390 = scmp.ne.s32.totalorder %s373, %s389
      %p391 = scmp.eq.s32.totalorder %s40, 0
      %p392 = por %p390, %p391
      %p393 = scmp.le.s32.totalorder 1, %s34
      %p394 = scmp.lt.s32.totalorder %s34, 3
      %p395 = pnand %p393, %p394
      %p396 = pneg %p395
      // Predicated region
      $region9: #{tpu_custom_call.1} parent=5 // pred_check
        _
      $region10: #{tpu_custom_call.1} parent=5 // pred_check_branch
        %398 = sbr.rel (%p395) target = $region12
      $region11: #{tpu_custom_call.1} parent=5 // pred_region
        %s399 = ssub.s32 %s34, 1
        // Predicated region
        $region13: #{tpu_custom_call.1} parent=11 // pred_check
          %p400 = pneg %p107
        $region14: #{tpu_custom_call.1} parent=11 // pred_check_branch
          %402 = sbr.rel (%p400) target = $region16
        $region15: #{tpu_custom_call.1} parent=11 // pred_region
          %s404 = ssub.s32 2048, 2048
          %405 = vsyncadd [#allocation6], %s404
          %s406 = sshll.u32 [#allocation7], 4
          %s407 = int_to_ptr.vmem [resolvable:$true] %s406
          %412 = dma.hbm_to_vmem [thread:$0]  %s2, 2048, %s407, [#allocation6], 128, 128, 8
        $region16: #{tpu_custom_call.1} parent=11 // pred_fallthru
          _
        // Predicated region
        $region17: #{tpu_custom_call.1} parent=11 // pred_check
          %p413 = pneg %p128
        $region18: #{tpu_custom_call.1} parent=11 // pred_check_branch
          %415 = sbr.rel (%p413) target = $region20
        $region19: #{tpu_custom_call.1} parent=11 // pred_region
          %s417 = ssub.s32 32, 32
          %418 = vsyncadd [#allocation9], %s417
          %s420 = sshll.u32 [#allocation8], 4
          %s421 = int_to_ptr.vmem [resolvable:$true] %s420
          %423 = dma.hbm_to_vmem [thread:$0]  %s3, 32, %s421, [#allocation9]
        $region20: #{tpu_custom_call.1} parent=11 // pred_fallthru
          _
        // Predicated region
        $region21: #{tpu_custom_call.1} parent=11 // pred_check
          %p424 = pneg %p149
        $region22: #{tpu_custom_call.1} parent=11 // pred_check_branch
          %426 = sbr.rel (%p424) target = $region24
        $region23: #{tpu_custom_call.1} parent=11 // pred_region
          %s428 = ssub.s32 2048, 2048
          %429 = vsyncadd [#allocation9], %s428
          %s430 = sshll.u32 [#allocation10], 4
          %s431 = int_to_ptr.vmem [resolvable:$true] %s430
          %436 = dma.hbm_to_vmem [thread:$0]  %s4, 2048, %s431, [#allocation9], 64, 64, 4
        $region24: #{tpu_custom_call.1} parent=11 // pred_fallthru
          _
        // Predicated region
        $region25: #{tpu_custom_call.1} parent=11 // pred_check
          %p437 = pneg %p170
        $region26: #{tpu_custom_call.1} parent=11 // pred_check_branch
          %439 = sbr.rel (%p437) target = $region28
        $region27: #{tpu_custom_call.1} parent=11 // pred_region
          _
        $region28: #{tpu_custom_call.1} parent=11 // pred_fallthru
          _
        // Predicated region
        $region29: #{tpu_custom_call.1} parent=11 // pred_check
          %p440 = pneg %p191
        $region30: #{tpu_custom_call.1} parent=11 // pred_check_branch
          %442 = sbr.rel (%p440) target = $region32
        $region31: #{tpu_custom_call.1} parent=11 // pred_region
          %s444 = ssub.s32 4096, 4096
          %445 = vsyncadd [#allocation12], %s444
          %s446 = sshll.u32 [#allocation11], 4
          %s447 = int_to_ptr.vmem [resolvable:$true] %s446
          %452 = dma.hbm_to_vmem [thread:$0]  %s6, 4096, %s447, [#allocation12], 256, 256, 16
        $region32: #{tpu_custom_call.1} parent=11 // pred_fallthru
          _
        // Predicated region
        $region33: #{tpu_custom_call.1} parent=11 // pred_check
          %p453 = pneg %p212
        $region34: #{tpu_custom_call.1} parent=11 // pred_check_branch
          %455 = sbr.rel (%p453) target = $region36
        $region35: #{tpu_custom_call.1} parent=11 // pred_region
          %s457 = ssub.s32 4096, 4096
          %458 = vsyncadd [#allocation12], %s457
          %s459 = sshll.u32 [#allocation13], 4
          %s460 = int_to_ptr.vmem [resolvable:$true] %s459
          %465 = dma.hbm_to_vmem [thread:$0]  %s7, 4096, %s460, [#allocation12], 256, 256, 16
        $region36: #{tpu_custom_call.1} parent=11 // pred_fallthru
          _
        // Predicated region
        $region37: #{tpu_custom_call.1} parent=11 // pred_check
          %p466 = pneg %p233
        $region38: #{tpu_custom_call.1} parent=11 // pred_check_branch
          %468 = sbr.rel (%p466) target = $region40
        $region39: #{tpu_custom_call.1} parent=11 // pred_region
          _
        $region40: #{tpu_custom_call.1} parent=11 // pred_fallthru
          _
        // Predicated region
        $region41: #{tpu_custom_call.1} parent=11 // pred_check
          %p469 = pneg %p254
        $region42: #{tpu_custom_call.1} parent=11 // pred_check_branch
          %471 = sbr.rel (%p469) target = $region44
        $region43: #{tpu_custom_call.1} parent=11 // pred_region
          %s473 = ssub.s32 16384, 16384
          %474 = vsyncadd [#allocation15], %s473
          %s475 = sshll.u32 [#allocation14], 4
          %s476 = int_to_ptr.vmem [resolvable:$true] %s475
          %481 = dma.hbm_to_vmem [thread:$0]  %s9, 16384, %s476, [#allocation15], 256, 256, 16
        $region44: #{tpu_custom_call.1} parent=11 // pred_fallthru
          _
        // Predicated region
        $region45: #{tpu_custom_call.1} parent=11 // pred_check
          %p482 = pneg %p275
        $region46: #{tpu_custom_call.1} parent=11 // pred_check_branch
          %484 = sbr.rel (%p482) target = $region48
        $region47: #{tpu_custom_call.1} parent=11 // pred_region
          _
        $region48: #{tpu_custom_call.1} parent=11 // pred_fallthru
          _
        // Predicated region
        $region49: #{tpu_custom_call.1} parent=11 // pred_check
          %p485 = pneg %p296
        $region50: #{tpu_custom_call.1} parent=11 // pred_check_branch
          %487 = sbr.rel (%p485) target = $region52
        $region51: #{tpu_custom_call.1} parent=11 // pred_region
          %s489 = ssub.s32 12288, 12288
          %490 = vsyncadd [#allocation15], %s489
          %s491 = sshll.u32 [#allocation16], 4
          %s492 = int_to_ptr.vmem [resolvable:$true] %s491
          %497 = dma.hbm_to_vmem [thread:$0]  %s11, 12288, %s492, [#allocation15], 192, 192, 12
        $region52: #{tpu_custom_call.1} parent=11 // pred_fallthru
          _
        // Predicated region
        $region53: #{tpu_custom_call.1} parent=11 // pred_check
          %p498 = pneg %p317
        $region54: #{tpu_custom_call.1} parent=11 // pred_check_branch
          %500 = sbr.rel (%p498) target = $region56
        $region55: #{tpu_custom_call.1} parent=11 // pred_region
          _
        $region56: #{tpu_custom_call.1} parent=11 // pred_fallthru
          _
        // Predicated region
        $region57: #{tpu_custom_call.1} parent=11 // pred_check
          %p501 = pneg %p338
        $region58: #{tpu_custom_call.1} parent=11 // pred_check_branch
          %503 = sbr.rel (%p501) target = $region60
        $region59: #{tpu_custom_call.1} parent=11 // pred_region
          %s505 = ssub.s32 3072, 3072
          %506 = vsyncadd [#allocation18], %s505
          %s507 = sshll.u32 [#allocation17], 4
          %s508 = int_to_ptr.vmem [resolvable:$true] %s507
          %513 = dma.hbm_to_vmem [thread:$0]  %s13, 3072, %s508, [#allocation18], 64, 64, 4
        $region60: #{tpu_custom_call.1} parent=11 // pred_fallthru
          _
        // Predicated region
        $region61: #{tpu_custom_call.1} parent=11 // pred_check
          %p514 = pneg %p359
        $region62: #{tpu_custom_call.1} parent=11 // pred_check_branch
          %516 = sbr.rel (%p514) target = $region64
        $region63: #{tpu_custom_call.1} parent=11 // pred_region
          _
        $region64: #{tpu_custom_call.1} parent=11 // pred_fallthru
          _
      $region12: #{tpu_custom_call.1} parent=5 // pred_fallthru
        _
      %p517 = scmp.lt.s32.totalorder %s34, 2
      // Predicated region
      $region65: #{tpu_custom_call.1} parent=5 // pred_check
        %p518 = pneg %p517
      $region66: #{tpu_custom_call.1} parent=5 // pred_check_branch
        %520 = sbr.rel (%p518) target = $region68
      $region67: #{tpu_custom_call.1} parent=5 // pred_region
        // Predicated region
        $region69: #{tpu_custom_call.1} parent=67 // pred_check
          %p521 = pneg %p54
        $region70: #{tpu_custom_call.1} parent=67 // pred_check_branch
          %523 = sbr.rel (%p521) target = $region72
        $region71: #{tpu_custom_call.1} parent=67 // pred_region
          %s524 = sand.u32 %s44, 1
          %s525 = scalar_lea.sflag [#allocation3], %s524
          %s526 = sand.u32 %s44, 1
          %s527 = smul.addr %s526, 64
          %s528 = scalar_lea.vmem [#allocation2], %s527
          %s529 = smul.u32 16, %s34
          %s531 = ssub.s32 1024, 1024
          %532 = vsyncadd %s525, %s531
          %s533 = smul.addr %s529, 64
          %s534 = scalar_lea.hbm %s0, %s533
          %s535 = sshll.u32 %s528, 4
          %s536 = int_to_ptr.vmem [resolvable:$true] %s535
          %541 = dma.hbm_to_vmem [thread:$0]  %s534, 1024, %s536, %s525, 64, 64, 4
        $region72: #{tpu_custom_call.1} parent=67 // pred_fallthru
          _
        // Predicated region
        $region73: #{tpu_custom_call.1} parent=67 // pred_check
          %p542 = pneg %p80
        $region74: #{tpu_custom_call.1} parent=67 // pred_check_branch
          %544 = sbr.rel (%p542) target = $region76
        $region75: #{tpu_custom_call.1} parent=67 // pred_region
          %s545 = sand.u32 %s34, 1
          %s546 = scalar_lea.sflag [#allocation6], %s545
          %s547 = sand.u32 %s70, 1
          %s548 = smul.addr %s547, 8
          %s549 = scalar_lea.vmem [#allocation5], %s548
          %s550 = smul.u32 2, %s34
          %s552 = ssub.s32 128, 128
          %553 = vsyncadd %s546, %s552
          %s554 = smul.addr %s550, 64
          %s555 = scalar_lea.hbm %s1, %s554
          %s556 = sshll.u32 %s549, 4
          %s557 = int_to_ptr.vmem [resolvable:$true] %s556
          %562 = dma.hbm_to_vmem [thread:$0]  %s555, 128, %s557, %s546, 64, 64, 4
        $region76: #{tpu_custom_call.1} parent=67 // pred_fallthru
          _
      $region68: #{tpu_custom_call.1} parent=5 // pred_fallthru
        _
      %p563 = scmp.le.s32.totalorder 1, %s34
      %p564 = scmp.lt.s32.totalorder %s34, 3
      %p565 = pnand %p563, %p564
      %p566 = pneg %p565
      // Predicated region
      $region77: #{tpu_custom_call.1} parent=5 // pred_check
        _
      $region78: #{tpu_custom_call.1} parent=5 // pred_check_branch
        %568 = sbr.rel (%p565) target = $region80
      $region79: #{tpu_custom_call.1} parent=5 // pred_region
        %s569 = ssub.s32 %s34, 1
        %s570 = sand.u32 %s47, 1
        %s571 = scalar_lea.sflag [#allocation3], %s570
        %s572 = sand.u32 %s47, 1
        %s573 = smul.addr %s572, 64
        %s574 = scalar_lea.vmem [#allocation2], %s573
        // Predicated region
        $region81: #{tpu_custom_call.1} parent=79 // pred_check
          %p575 = pneg %p60
        $region82: #{tpu_custom_call.1} parent=79 // pred_check_branch
          %577 = sbr.rel (%p575) target = $region84
        $region83: #{tpu_custom_call.1} parent=79 // pred_region
          %578 = dma.done %s571, 1024
        $region84: #{tpu_custom_call.1} parent=79 // pred_fallthru
          _
        %s579 = sand.u32 %s39, 1
        %s580 = scalar_lea.sflag [#allocation6], %s579
        %s581 = sand.u32 %s73, 1
        %s582 = smul.addr %s581, 8
        %s583 = scalar_lea.vmem [#allocation5], %s582
        // Predicated region
        $region85: #{tpu_custom_call.1} parent=79 // pred_check
          %p584 = pneg %p86
        $region86: #{tpu_custom_call.1} parent=79 // pred_check_branch
          %586 = sbr.rel (%p584) target = $region88
        $region87: #{tpu_custom_call.1} parent=79 // pred_region
          %587 = dma.done %s580, 128
        $region88: #{tpu_custom_call.1} parent=79 // pred_fallthru
          _
        // Predicated region
        $region89: #{tpu_custom_call.1} parent=79 // pred_check
          %p588 = pneg %p107
        $region90: #{tpu_custom_call.1} parent=79 // pred_check_branch
          %590 = sbr.rel (%p588) target = $region92
        $region91: #{tpu_custom_call.1} parent=79 // pred_region
          %591 = dma.done [#allocation6], 2048
        $region92: #{tpu_custom_call.1} parent=79 // pred_fallthru
          _
        // Predicated region
        $region93: #{tpu_custom_call.1} parent=79 // pred_check
          %p592 = pneg %p128
        $region94: #{tpu_custom_call.1} parent=79 // pred_check_branch
          %594 = sbr.rel (%p592) target = $region96
        $region95: #{tpu_custom_call.1} parent=79 // pred_region
          %595 = dma.done [#allocation9], 32
        $region96: #{tpu_custom_call.1} parent=79 // pred_fallthru
          _
        // Predicated region
        $region97: #{tpu_custom_call.1} parent=79 // pred_check
          %p596 = pneg %p149
        $region98: #{tpu_custom_call.1} parent=79 // pred_check_branch
          %598 = sbr.rel (%p596) target = $region100
        $region99: #{tpu_custom_call.1} parent=79 // pred_region
          %599 = dma.done [#allocation9], 2048
        $region100: #{tpu_custom_call.1} parent=79 // pred_fallthru
          _
        // Predicated region
        $region101: #{tpu_custom_call.1} parent=79 // pred_check
          %p600 = pneg %p191
        $region102: #{tpu_custom_call.1} parent=79 // pred_check_branch
          %602 = sbr.rel (%p600) target = $region104
        $region103: #{tpu_custom_call.1} parent=79 // pred_region
          %603 = dma.done [#allocation12], 4096
        $region104: #{tpu_custom_call.1} parent=79 // pred_fallthru
          _
        // Predicated region
        $region105: #{tpu_custom_call.1} parent=79 // pred_check
          %p604 = pneg %p212
        $region106: #{tpu_custom_call.1} parent=79 // pred_check_branch
          %606 = sbr.rel (%p604) target = $region108
        $region107: #{tpu_custom_call.1} parent=79 // pred_region
          %607 = dma.done [#allocation12], 4096
        $region108: #{tpu_custom_call.1} parent=79 // pred_fallthru
          _
        // Predicated region
        $region109: #{tpu_custom_call.1} parent=79 // pred_check
          %p608 = pneg %p254
        $region110: #{tpu_custom_call.1} parent=79 // pred_check_branch
          %610 = sbr.rel (%p608) target = $region112
        $region111: #{tpu_custom_call.1} parent=79 // pred_region
          %611 = dma.done [#allocation15], 16384
        $region112: #{tpu_custom_call.1} parent=79 // pred_fallthru
          _
        // Predicated region
        $region113: #{tpu_custom_call.1} parent=79 // pred_check
          %p612 = pneg %p296
        $region114: #{tpu_custom_call.1} parent=79 // pred_check_branch
          %614 = sbr.rel (%p612) target = $region116
        $region115: #{tpu_custom_call.1} parent=79 // pred_region
          %615 = dma.done [#allocation15], 12288
        $region116: #{tpu_custom_call.1} parent=79 // pred_fallthru
          _
        // Predicated region
        $region117: #{tpu_custom_call.1} parent=79 // pred_check
          %p616 = pneg %p338
        $region118: #{tpu_custom_call.1} parent=79 // pred_check_branch
          %618 = sbr.rel (%p616) target = $region120
        $region119: #{tpu_custom_call.1} parent=79 // pred_region
          %619 = dma.done [#allocation18], 3072
        $region120: #{tpu_custom_call.1} parent=79 // pred_fallthru
          _
        %s620 = sand.u32 %s47, 1
        %s621 = scalar_lea.sflag [#allocation3], %s620
        %s622 = sand.u32 %s47, 1
        %s623 = smul.addr %s622, 64
        %s624 = scalar_lea.vmem [#allocation2], %s623
        %p625 = pneg %p60
        %p626 = pneg %p57
        %s627 = sand.u32 %s39, 1
        %s628 = scalar_lea.sflag [#allocation6], %s627
        %s629 = sand.u32 %s73, 1
        %s630 = smul.addr %s629, 8
        %s631 = scalar_lea.vmem [#allocation5], %s630
        %p632 = pneg %p86
        %p633 = pneg %p83
        %p634 = pneg %p107
        %p635 = pneg %p104
        %p636 = pneg %p128
        %p637 = pneg %p125
        %p638 = pneg %p149
        %p639 = pneg %p146
        %p640 = pneg %p170
        %p641 = pneg %p167
        %p642 = pneg %p191
        %p643 = pneg %p188
        %p644 = pneg %p212
        %p645 = pneg %p209
        %p646 = pneg %p233
        %p647 = pneg %p230
        %p648 = pneg %p254
        %p649 = pneg %p251
        %p650 = pneg %p275
        %p651 = pneg %p272
        %p652 = pneg %p296
        %p653 = pneg %p293
        %p654 = pneg %p317
        %p655 = pneg %p314
        %p656 = pneg %p338
        %p657 = pneg %p335
        %p658 = pneg %p359
        %p659 = pneg %p356
        %p660 = pneg %p385
        %p661 = pneg %p382
        %s662 = sand.u32 %s372, 1
        %s663 = scalar_lea.sflag [#allocation4], %s662
        %s664 = sand.u32 %s372, 1
        %s665 = smul.addr %s664, 16
        %s666 = scalar_lea.vmem [#allocation19], %s665
        %s667 = smul.u32 16, %s39
        %s668 = smul.u32 2, %s39
        %s669 = smul.u32 2, %s39
        %v671 = vld [vmem:[%s574] sm:$0xf]
        %v672 = vld [vmem:[%s574 + $0x4] sm:$0xf]
        %v673 = vld [vmem:[%s574 + $0x8] sm:$0xf]
        %v674 = vld [vmem:[%s574 + $0xc] sm:$0xf]
        %v675 = vld [vmem:[%s574 + $0x10] sm:$0xf]
        %v676 = vld [vmem:[%s574 + $0x14] sm:$0xf]
        %v677 = vld [vmem:[%s574 + $0x18] sm:$0xf]
        %v678 = vld [vmem:[%s574 + $0x1c] sm:$0xf]
        %v679 = vld [vmem:[%s574 + $0x20] sm:$0xf]
        %v680 = vld [vmem:[%s574 + $0x24] sm:$0xf]
        %v681 = vld [vmem:[%s574 + $0x28] sm:$0xf]
        %v682 = vld [vmem:[%s574 + $0x2c] sm:$0xf]
        %v683 = vld [vmem:[%s574 + $0x30] sm:$0xf]
        %v684 = vld [vmem:[%s574 + $0x34] sm:$0xf]
        %v685 = vld [vmem:[%s574 + $0x38] sm:$0xf]
        %v686 = vld [vmem:[%s574 + $0x3c] sm:$0xf]
        %v687 = vld [vmem:[#allocation7] sm:$0xff]
        %v688 = vld [vmem:[#allocation7 + $0x8] sm:$0xff]
        %v689 = vld [vmem:[#allocation7 + $0x10] sm:$0xff]
        %v690 = vld [vmem:[#allocation7 + $0x18] sm:$0xff]
        %v691 = vld [vmem:[#allocation7 + $0x20] sm:$0xff]
        %v692 = vld [vmem:[#allocation7 + $0x28] sm:$0xff]
        %v693 = vld [vmem:[#allocation7 + $0x30] sm:$0xff]
        %v694 = vld [vmem:[#allocation7 + $0x38] sm:$0xff]
        %v695 = vld [vmem:[#allocation7 + $0x40] sm:$0xff]
        %v696 = vld [vmem:[#allocation7 + $0x48] sm:$0xff]
        %v697 = vld [vmem:[#allocation7 + $0x50] sm:$0xff]
        %v698 = vld [vmem:[#allocation7 + $0x58] sm:$0xff]
        %v699 = vld [vmem:[#allocation7 + $0x60] sm:$0xff]
        %v700 = vld [vmem:[#allocation7 + $0x68] sm:$0xff]
        %v701 = vld [vmem:[#allocation7 + $0x70] sm:$0xff]
        %v702 = vld [vmem:[#allocation7 + $0x78] sm:$0xff]
        %v703 = vld [vmem:[#allocation8] sm:$0x3]
        %v705 = vlaneseq
        %v706 = vshrl.u32 %v705, 7
        %v707 = vsub.s32 0, %v706
        %v708 = vrot.slane %v703, %v707
        %v709 = vlaneseq
        %v710 = vshrl.u32 %v709, 7
        %v711 = vsub.s32 1, %v710
        %v712 = vrot.slane %v703, %v711
        %v731 = vunpack.c.l.b16 %v671
        %v732 = vunpack.c.l.b16 %v672
        %v733 = vunpack.c.l.b16 %v673
        %v734 = vunpack.c.l.b16 %v674
        %v735 = vunpack.c.l.b16 %v675
        %v736 = vunpack.c.l.b16 %v676
        %v737 = vunpack.c.l.b16 %v677
        %v738 = vunpack.c.l.b16 %v678
        %v739 = vunpack.c.l.b16 %v679
        %v740 = vunpack.c.l.b16 %v680
        %v741 = vunpack.c.l.b16 %v681
        %v742 = vunpack.c.l.b16 %v682
        %v743 = vunpack.c.l.b16 %v683
        %v744 = vunpack.c.l.b16 %v684
        %v745 = vunpack.c.l.b16 %v685
        %v746 = vunpack.c.l.b16 %v686
        %v747 = vpack.c.b16 %v732, %v731
        %v748 = vpack.c.b16 %v734, %v733
        %v749 = vpack.c.b16 %v736, %v735
        %v750 = vpack.c.b16 %v738, %v737
        %v751 = vpack.c.b16 %v740, %v739
        %v752 = vpack.c.b16 %v742, %v741
        %v753 = vpack.c.b16 %v744, %v743
        %v754 = vpack.c.b16 %v746, %v745
        %v779 = vunpack.c.l.b16 %v687
        %v780 = vunpack.c.h.b16 %v687
        %v781 = vunpack.c.l.b16 %v688
        %v782 = vunpack.c.h.b16 %v688
        %v783 = vunpack.c.l.b16 %v689
        %v784 = vunpack.c.h.b16 %v689
        %v785 = vunpack.c.l.b16 %v690
        %v786 = vunpack.c.h.b16 %v690
        %v787 = vunpack.c.l.b16 %v691
        %v788 = vunpack.c.h.b16 %v691
        %v789 = vunpack.c.l.b16 %v692
        %v790 = vunpack.c.h.b16 %v692
        %v791 = vunpack.c.l.b16 %v693
        %v792 = vunpack.c.h.b16 %v693
        %v793 = vunpack.c.l.b16 %v694
        %v794 = vunpack.c.h.b16 %v694
        %v795 = vunpack.c.l.b16 %v695
        %v796 = vunpack.c.h.b16 %v695
        %v797 = vunpack.c.l.b16 %v696
        %v798 = vunpack.c.h.b16 %v696
        %v799 = vunpack.c.l.b16 %v697
        %v800 = vunpack.c.h.b16 %v697
        %v801 = vunpack.c.l.b16 %v698
        %v802 = vunpack.c.h.b16 %v698
        %v803 = vunpack.c.l.b16 %v699
        %v804 = vunpack.c.h.b16 %v699
        %v805 = vunpack.c.l.b16 %v700
        %v806 = vunpack.c.h.b16 %v700
        %v807 = vunpack.c.l.b16 %v701
        %v808 = vunpack.c.h.b16 %v701
        %v809 = vunpack.c.l.b16 %v702
        %v810 = vunpack.c.h.b16 %v702
        %v811 = vpack.c.b16 %v781, %v779
        %v812 = vpack.c.b16 %v782, %v780
        %v813 = vpack.c.b16 %v785, %v783
        %v814 = vpack.c.b16 %v786, %v784
        %v815 = vpack.c.b16 %v789, %v787
        %v816 = vpack.c.b16 %v790, %v788
        %v817 = vpack.c.b16 %v793, %v791
        %v818 = vpack.c.b16 %v794, %v792
        %v819 = vpack.c.b16 %v797, %v795
        %v820 = vpack.c.b16 %v798, %v796
        %v821 = vpack.c.b16 %v801, %v799
        %v822 = vpack.c.b16 %v802, %v800
        %v823 = vpack.c.b16 %v805, %v803
        %v824 = vpack.c.b16 %v806, %v804
        %v825 = vpack.c.b16 %v809, %v807
        %v826 = vpack.c.b16 %v810, %v808
        %843 = vmatprep.subr.bf16.mxu0 %v826
        %844 = vmatpush1.bf16.msra.mxu0 %v825
        %845 = vmatprep.subr.bf16.mxu0 %v824
        %846 = vmatpush1.bf16.msra.mxu0 %v823
        %847 = vmatprep.subr.bf16.mxu0 %v822
        %848 = vmatpush1.bf16.msra.mxu0 %v821
        %849 = vmatprep.subr.bf16.mxu0 %v820
        %850 = vmatpush1.bf16.msra.mxu0 %v819
        %851 = vmatprep.subr.bf16.mxu0 %v818
        %852 = vmatpush1.bf16.msra.mxu0 %v817
        %853 = vmatprep.subr.bf16.mxu0 %v816
        %854 = vmatpush1.bf16.msra.mxu0 %v815
        %855 = vmatprep.subr.bf16.mxu0 %v814
        %856 = vmatpush1.bf16.msra.mxu0 %v813
        %857 = vmatprep.subr.bf16.mxu0 %v812
        %858 = vmatpush1.bf16.msra.mxu0 %v811
        %859 = vmatprep.subr.bf16.mxu0 0
        %860 = vmatpush2.bf16.msra.mxu0 0
        %861 = vmatprep.subr.bf16.mxu0 0
        %862 = vmatpush2.bf16.msra.mxu0 0
        %863 = vmatprep.subr.bf16.mxu0 0
        %864 = vmatpush2.bf16.msra.mxu0 0
        %865 = vmatprep.subr.bf16.mxu0 0
        %866 = vmatpush2.bf16.msra.mxu0 0
        %867 = vmatprep.subr.bf16.mxu0 0
        %868 = vmatpush2.bf16.msra.mxu0 0
        %869 = vmatprep.subr.bf16.mxu0 0
        %870 = vmatpush2.bf16.msra.mxu0 0
        %871 = vmatprep.subr.bf16.mxu0 0
        %872 = vmatpush2.bf16.msra.mxu0 0
        %873 = vmatprep.subr.bf16.mxu0 0
        %874 = vmatpush2.bf16.msra.mxu0 0
        %875 = vmatprep.mubr.bf16.mxu0 0
        %876 = vmatmul.mubr.bf16.gmra.mxu0 %v747
        %v877 = vpop.f32.mrf.mxu0
        %v878 = vadd.f32 %v708, %v877
        %v879 = vpop.f32.mrf.mxu0
        %v880 = vadd.f32 %v712, %v879
        %v881 = vpop.f32.mrf.mxu0
        %v882 = vadd.f32 %v708, %v881
        %v883 = vpop.f32.mrf.mxu0
        %v884 = vadd.f32 %v712, %v883
        %885 = vmatprep.mubr.bf16.mxu0 0
        %886 = vmatmul.mubr.bf16.gmra.mxu0 %v748
        %v887 = vpop.f32.mrf.mxu0
        %v888 = vadd.f32 %v708, %v887
        %v889 = vpop.f32.mrf.mxu0
        %v890 = vadd.f32 %v712, %v889
        %v891 = vpop.f32.mrf.mxu0
        %v892 = vadd.f32 %v708, %v891
        %v893 = vpop.f32.mrf.mxu0
        %v894 = vadd.f32 %v712, %v893
        %895 = vmatprep.mubr.bf16.mxu0 0
        %896 = vmatmul.mubr.bf16.gmra.mxu0 %v749
        %v897 = vpop.f32.mrf.mxu0
        %v898 = vadd.f32 %v708, %v897
        %v899 = vpop.f32.mrf.mxu0
        %v900 = vadd.f32 %v712, %v899
        %v901 = vpop.f32.mrf.mxu0
        %v902 = vadd.f32 %v708, %v901
        %v903 = vpop.f32.mrf.mxu0
        %v904 = vadd.f32 %v712, %v903
        %905 = vmatprep.mubr.bf16.mxu0 0
        %906 = vmatmul.mubr.bf16.gmra.mxu0 %v750
        %v907 = vpop.f32.mrf.mxu0
        %v908 = vadd.f32 %v708, %v907
        %v909 = vpop.f32.mrf.mxu0
        %v910 = vadd.f32 %v712, %v909
        %v911 = vpop.f32.mrf.mxu0
        %v912 = vadd.f32 %v708, %v911
        %v913 = vpop.f32.mrf.mxu0
        %v914 = vadd.f32 %v712, %v913
        %915 = vmatprep.mubr.bf16.mxu0 0
        %916 = vmatmul.mubr.bf16.gmra.mxu0 %v751
        %v917 = vpop.f32.mrf.mxu0
        %v918 = vadd.f32 %v708, %v917
        %v919 = vpop.f32.mrf.mxu0
        %v920 = vadd.f32 %v712, %v919
        %v921 = vpop.f32.mrf.mxu0
        %v922 = vadd.f32 %v708, %v921
        %v923 = vpop.f32.mrf.mxu0
        %v924 = vadd.f32 %v712, %v923
        %925 = vmatprep.mubr.bf16.mxu0 0
        %926 = vmatmul.mubr.bf16.gmra.mxu0 %v752
        %v927 = vpop.f32.mrf.mxu0
        %v928 = vadd.f32 %v708, %v927
        %v929 = vpop.f32.mrf.mxu0
        %v930 = vadd.f32 %v712, %v929
        %v931 = vpop.f32.mrf.mxu0
        %v932 = vadd.f32 %v708, %v931
        %v933 = vpop.f32.mrf.mxu0
        %v934 = vadd.f32 %v712, %v933
        %935 = vmatprep.mubr.bf16.mxu0 0
        %936 = vmatmul.mubr.bf16.gmra.mxu0 %v753
        %v937 = vpop.f32.mrf.mxu0
        %v938 = vadd.f32 %v708, %v937
        %v939 = vpop.f32.mrf.mxu0
        %v940 = vadd.f32 %v712, %v939
        %v941 = vpop.f32.mrf.mxu0
        %v942 = vadd.f32 %v708, %v941
        %v943 = vpop.f32.mrf.mxu0
        %v944 = vadd.f32 %v712, %v943
        %945 = vmatprep.mubr.bf16.mxu0 0
        %946 = vmatmul.mubr.bf16.gmra.mxu0 %v754
        %v947 = vpop.f32.mrf.mxu0
        %v948 = vadd.f32 %v708, %v947
        %v949 = vpop.f32.mrf.mxu0
        %v950 = vadd.f32 %v712, %v949
        %v951 = vpop.f32.mrf.mxu0
        %v952 = vadd.f32 %v708, %v951
        %v953 = vpop.f32.mrf.mxu0
        %v954 = vadd.f32 %v712, %v953
        %955 = vdwg.mxu0
        %v956 = vmax.f32 %v878, 0.0
        %v957 = vmax.f32 %v880, 0.0
        %v958 = vmax.f32 %v882, 0.0
        %v959 = vmax.f32 %v884, 0.0
        %v960 = vmax.f32 %v888, 0.0
        %v961 = vmax.f32 %v890, 0.0
        %v962 = vmax.f32 %v892, 0.0
        %v963 = vmax.f32 %v894, 0.0
        %v964 = vmax.f32 %v898, 0.0
        %v965 = vmax.f32 %v900, 0.0
        %v966 = vmax.f32 %v902, 0.0
        %v967 = vmax.f32 %v904, 0.0
        %v968 = vmax.f32 %v908, 0.0
        %v969 = vmax.f32 %v910, 0.0
        %v970 = vmax.f32 %v912, 0.0
        %v971 = vmax.f32 %v914, 0.0
        %v972 = vmax.f32 %v918, 0.0
        %v973 = vmax.f32 %v920, 0.0
        %v974 = vmax.f32 %v922, 0.0
        %v975 = vmax.f32 %v924, 0.0
        %v976 = vmax.f32 %v928, 0.0
        %v977 = vmax.f32 %v930, 0.0
        %v978 = vmax.f32 %v932, 0.0
        %v979 = vmax.f32 %v934, 0.0
        %v980 = vmax.f32 %v938, 0.0
        %v981 = vmax.f32 %v940, 0.0
        %v982 = vmax.f32 %v942, 0.0
        %v983 = vmax.f32 %v944, 0.0
        %v984 = vmax.f32 %v948, 0.0
        %v985 = vmax.f32 %v950, 0.0
        %v986 = vmax.f32 %v952, 0.0
        %v987 = vmax.f32 %v954, 0.0
        %v988 = vpack.c.bf16 %v958, %v956
        %v989 = vpack.c.bf16 %v959, %v957
        %v990 = vpack.c.bf16 %v962, %v960
        %v991 = vpack.c.bf16 %v963, %v961
        %v992 = vpack.c.bf16 %v966, %v964
        %v993 = vpack.c.bf16 %v967, %v965
        %v994 = vpack.c.bf16 %v970, %v968
        %v995 = vpack.c.bf16 %v971, %v969
        %v996 = vpack.c.bf16 %v974, %v972
        %v997 = vpack.c.bf16 %v975, %v973
        %v998 = vpack.c.bf16 %v978, %v976
        %v999 = vpack.c.bf16 %v979, %v977
        %v1000 = vpack.c.bf16 %v982, %v980
        %v1001 = vpack.c.bf16 %v983, %v981
        %v1002 = vpack.c.bf16 %v986, %v984
        %v1003 = vpack.c.bf16 %v987, %v985
        %v1004 = vld [vmem:[#allocation10] sm:$0xf]
        %v1005 = vld [vmem:[#allocation10 + $0x4] sm:$0xf]
        %v1006 = vld [vmem:[#allocation10 + $0x8] sm:$0xf]
        %v1007 = vld [vmem:[#allocation10 + $0xc] sm:$0xf]
        %v1008 = vld [vmem:[#allocation10 + $0x10] sm:$0xf]
        %v1009 = vld [vmem:[#allocation10 + $0x14] sm:$0xf]
        %v1010 = vld [vmem:[#allocation10 + $0x18] sm:$0xf]
        %v1011 = vld [vmem:[#allocation10 + $0x1c] sm:$0xf]
        %v1012 = vld [vmem:[#allocation10 + $0x20] sm:$0xf]
        %v1013 = vld [vmem:[#allocation10 + $0x24] sm:$0xf]
        %v1014 = vld [vmem:[#allocation10 + $0x28] sm:$0xf]
        %v1015 = vld [vmem:[#allocation10 + $0x2c] sm:$0xf]
        %v1016 = vld [vmem:[#allocation10 + $0x30] sm:$0xf]
        %v1017 = vld [vmem:[#allocation10 + $0x34] sm:$0xf]
        %v1018 = vld [vmem:[#allocation10 + $0x38] sm:$0xf]
        %v1019 = vld [vmem:[#allocation10 + $0x3c] sm:$0xf]
        %v1020 = vld [vmem:[#allocation10 + $0x40] sm:$0xf]
        %v1021 = vld [vmem:[#allocation10 + $0x44] sm:$0xf]
        %v1022 = vld [vmem:[#allocation10 + $0x48] sm:$0xf]
        %v1023 = vld [vmem:[#allocation10 + $0x4c] sm:$0xf]
        %v1024 = vld [vmem:[#allocation10 + $0x50] sm:$0xf]
        %v1025 = vld [vmem:[#allocation10 + $0x54] sm:$0xf]
        %v1026 = vld [vmem:[#allocation10 + $0x58] sm:$0xf]
        %v1027 = vld [vmem:[#allocation10 + $0x5c] sm:$0xf]
        %v1028 = vld [vmem:[#allocation10 + $0x60] sm:$0xf]
        %v1029 = vld [vmem:[#allocation10 + $0x64] sm:$0xf]
        %v1030 = vld [vmem:[#allocation10 + $0x68] sm:$0xf]
        %v1031 = vld [vmem:[#allocation10 + $0x6c] sm:$0xf]
        %v1032 = vld [vmem:[#allocation10 + $0x70] sm:$0xf]
        %v1033 = vld [vmem:[#allocation10 + $0x74] sm:$0xf]
        %v1034 = vld [vmem:[#allocation10 + $0x78] sm:$0xf]
        %v1035 = vld [vmem:[#allocation10 + $0x7c] sm:$0xf]
        %v1036 = vld [vmem:[%s5] sm:$0x1]
        %v1038 = vlaneseq
        %v1039 = vshrl.u32 %v1038, 7
        %v1040 = vsub.s32 0, %v1039
        %v1041 = vrot.slane %v1036, %v1040
        %v1075 = vunpack.c.l.b16 %v1004
        %v1076 = vunpack.c.l.b16 %v1005
        %v1077 = vunpack.c.l.b16 %v1006
        %v1078 = vunpack.c.l.b16 %v1007
        %v1079 = vunpack.c.l.b16 %v1008
        %v1080 = vunpack.c.l.b16 %v1009
        %v1081 = vunpack.c.l.b16 %v1010
        %v1082 = vunpack.c.l.b16 %v1011
        %v1083 = vunpack.c.l.b16 %v1012
        %v1084 = vunpack.c.l.b16 %v1013
        %v1085 = vunpack.c.l.b16 %v1014
        %v1086 = vunpack.c.l.b16 %v1015
        %v1087 = vunpack.c.l.b16 %v1016
        %v1088 = vunpack.c.l.b16 %v1017
        %v1089 = vunpack.c.l.b16 %v1018
        %v1090 = vunpack.c.l.b16 %v1019
        %v1091 = vunpack.c.l.b16 %v1020
        %v1092 = vunpack.c.l.b16 %v1021
        %v1093 = vunpack.c.l.b16 %v1022
        %v1094 = vunpack.c.l.b16 %v1023
        %v1095 = vunpack.c.l.b16 %v1024
        %v1096 = vunpack.c.l.b16 %v1025
        %v1097 = vunpack.c.l.b16 %v1026
        %v1098 = vunpack.c.l.b16 %v1027
        %v1099 = vunpack.c.l.b16 %v1028
        %v1100 = vunpack.c.l.b16 %v1029
        %v1101 = vunpack.c.l.b16 %v1030
        %v1102 = vunpack.c.l.b16 %v1031
        %v1103 = vunpack.c.l.b16 %v1032
        %v1104 = vunpack.c.l.b16 %v1033
        %v1105 = vunpack.c.l.b16 %v1034
        %v1106 = vunpack.c.l.b16 %v1035
        %v1107 = vpack.c.b16 %v1076, %v1075
        %v1108 = vpack.c.b16 %v1078, %v1077
        %v1109 = vpack.c.b16 %v1080, %v1079
        %v1110 = vpack.c.b16 %v1082, %v1081
        %v1111 = vpack.c.b16 %v1084, %v1083
        %v1112 = vpack.c.b16 %v1086, %v1085
        %v1113 = vpack.c.b16 %v1088, %v1087
        %v1114 = vpack.c.b16 %v1090, %v1089
        %v1115 = vpack.c.b16 %v1092, %v1091
        %v1116 = vpack.c.b16 %v1094, %v1093
        %v1117 = vpack.c.b16 %v1096, %v1095
        %v1118 = vpack.c.b16 %v1098, %v1097
        %v1119 = vpack.c.b16 %v1100, %v1099
        %v1120 = vpack.c.b16 %v1102, %v1101
        %v1121 = vpack.c.b16 %v1104, %v1103
        %v1122 = vpack.c.b16 %v1106, %v1105
        %1139 = vmatprep.subr.bf16.mxu0 0
        %1140 = vmatpush1.bf16.msra.mxu0 %v1114
        %1141 = vmatprep.subr.bf16.mxu0 0
        %1142 = vmatpush1.bf16.msra.mxu0 %v1113
        %1143 = vmatprep.subr.bf16.mxu0 0
        %1144 = vmatpush1.bf16.msra.mxu0 %v1112
        %1145 = vmatprep.subr.bf16.mxu0 0
        %1146 = vmatpush1.bf16.msra.mxu0 %v1111
        %1147 = vmatprep.subr.bf16.mxu0 0
        %1148 = vmatpush1.bf16.msra.mxu0 %v1110
        %1149 = vmatprep.subr.bf16.mxu0 0
        %1150 = vmatpush1.bf16.msra.mxu0 %v1109
        %1151 = vmatprep.subr.bf16.mxu0 0
        %1152 = vmatpush1.bf16.msra.mxu0 %v1108
        %1153 = vmatprep.subr.bf16.mxu0 0
        %1154 = vmatpush1.bf16.msra.mxu0 %v1107
        %1155 = vmatprep.subr.bf16.mxu0 0
        %1156 = vmatpush2.bf16.msra.mxu0 %v1122
        %1157 = vmatprep.subr.bf16.mxu0 0
        %1158 = vmatpush2.bf16.msra.mxu0 %v1121
        %1159 = vmatprep.subr.bf16.mxu0 0
        %1160 = vmatpush2.bf16.msra.mxu0 %v1120
        %1161 = vmatprep.subr.bf16.mxu0 0
        %1162 = vmatpush2.bf16.msra.mxu0 %v1119
        %1163 = vmatprep.subr.bf16.mxu0 0
        %1164 = vmatpush2.bf16.msra.mxu0 %v1118
        %1165 = vmatprep.subr.bf16.mxu0 0
        %1166 = vmatpush2.bf16.msra.mxu0 %v1117
        %1167 = vmatprep.subr.bf16.mxu0 0
        %1168 = vmatpush2.bf16.msra.mxu0 %v1116
        %1169 = vmatprep.subr.bf16.mxu0 0
        %1170 = vmatpush2.bf16.msra.mxu0 %v1115
        %1171 = vmatprep.mubr.bf16.mxu0 %v989
        %1172 = vmatmul.mubr.bf16.gmra.mxu0 %v988
        %v1173 = vpop.f32.mrf.mxu0
        %v1174 = vadd.f32 %v1041, %v1173
        %v1175 = vpop.f32.mrf.mxu0
        %v1176 = vpop.f32.mrf.mxu0
        %v1177 = vadd.f32 %v1041, %v1176
        %v1178 = vpop.f32.mrf.mxu0
        %1179 = vmatprep.mubr.bf16.mxu0 %v991
        %1180 = vmatmul.mubr.bf16.gmra.mxu0 %v990
        %v1181 = vpop.f32.mrf.mxu0
        %v1182 = vadd.f32 %v1041, %v1181
        %v1183 = vpop.f32.mrf.mxu0
        %v1184 = vpop.f32.mrf.mxu0
        %v1185 = vadd.f32 %v1041, %v1184
        %v1186 = vpop.f32.mrf.mxu0
        %1187 = vmatprep.mubr.bf16.mxu0 %v993
        %1188 = vmatmul.mubr.bf16.gmra.mxu0 %v992
        %v1189 = vpop.f32.mrf.mxu0
        %v1190 = vadd.f32 %v1041, %v1189
        %v1191 = vpop.f32.mrf.mxu0
        %v1192 = vpop.f32.mrf.mxu0
        %v1193 = vadd.f32 %v1041, %v1192
        %v1194 = vpop.f32.mrf.mxu0
        %1195 = vmatprep.mubr.bf16.mxu0 %v995
        %1196 = vmatmul.mubr.bf16.gmra.mxu0 %v994
        %v1197 = vpop.f32.mrf.mxu0
        %v1198 = vadd.f32 %v1041, %v1197
        %v1199 = vpop.f32.mrf.mxu0
        %v1200 = vpop.f32.mrf.mxu0
        %v1201 = vadd.f32 %v1041, %v1200
        %v1202 = vpop.f32.mrf.mxu0
        %1203 = vmatprep.mubr.bf16.mxu0 %v997
        %1204 = vmatmul.mubr.bf16.gmra.mxu0 %v996
        %v1205 = vpop.f32.mrf.mxu0
        %v1206 = vadd.f32 %v1041, %v1205
        %v1207 = vpop.f32.mrf.mxu0
        %v1208 = vpop.f32.mrf.mxu0
        %v1209 = vadd.f32 %v1041, %v1208
        %v1210 = vpop.f32.mrf.mxu0
        %1211 = vmatprep.mubr.bf16.mxu0 %v999
        %1212 = vmatmul.mubr.bf16.gmra.mxu0 %v998
        %v1213 = vpop.f32.mrf.mxu0
        %v1214 = vadd.f32 %v1041, %v1213
        %v1215 = vpop.f32.mrf.mxu0
        %v1216 = vpop.f32.mrf.mxu0
        %v1217 = vadd.f32 %v1041, %v1216
        %v1218 = vpop.f32.mrf.mxu0
        %1219 = vmatprep.mubr.bf16.mxu0 %v1001
        %1220 = vmatmul.mubr.bf16.gmra.mxu0 %v1000
        %v1221 = vpop.f32.mrf.mxu0
        %v1222 = vadd.f32 %v1041, %v1221
        %v1223 = vpop.f32.mrf.mxu0
        %v1224 = vpop.f32.mrf.mxu0
        %v1225 = vadd.f32 %v1041, %v1224
        %v1226 = vpop.f32.mrf.mxu0
        %1227 = vmatprep.mubr.bf16.mxu0 %v1003
        %1228 = vmatmul.mubr.bf16.gmra.mxu0 %v1002
        %v1229 = vpop.f32.mrf.mxu0
        %v1230 = vadd.f32 %v1041, %v1229
        %v1231 = vpop.f32.mrf.mxu0
        %v1232 = vpop.f32.mrf.mxu0
        %v1233 = vadd.f32 %v1041, %v1232
        %v1234 = vpop.f32.mrf.mxu0
        %1235 = vdwg.mxu0
        %v1236 = vmax.f32 %v1174, 0.0
        %v1237 = vmax.f32 %v1177, 0.0
        %v1238 = vmax.f32 %v1182, 0.0
        %v1239 = vmax.f32 %v1185, 0.0
        %v1240 = vmax.f32 %v1190, 0.0
        %v1241 = vmax.f32 %v1193, 0.0
        %v1242 = vmax.f32 %v1198, 0.0
        %v1243 = vmax.f32 %v1201, 0.0
        %v1244 = vmax.f32 %v1206, 0.0
        %v1245 = vmax.f32 %v1209, 0.0
        %v1246 = vmax.f32 %v1214, 0.0
        %v1247 = vmax.f32 %v1217, 0.0
        %v1248 = vmax.f32 %v1222, 0.0
        %v1249 = vmax.f32 %v1225, 0.0
        %v1250 = vmax.f32 %v1230, 0.0
        %v1251 = vmax.f32 %v1233, 0.0
        %v1252 = vrot.slane %v1236, 4
        %v1253 = vadd.f32 %v1236, %v1252
        %v1254 = vrot.slane %v1253, 2
        %v1255 = vadd.f32 %v1253, %v1254
        %v1256 = vrot.slane %v1255, 1
        %v1257 = vadd.f32 %v1255, %v1256
        %v1258 = vrot.slane %v1237, 4
        %v1259 = vadd.f32 %v1237, %v1258
        %v1260 = vrot.slane %v1259, 2
        %v1261 = vadd.f32 %v1259, %v1260
        %v1262 = vrot.slane %v1261, 1
        %v1263 = vadd.f32 %v1261, %v1262
        %v1264 = vrot.slane %v1238, 4
        %v1265 = vadd.f32 %v1238, %v1264
        %v1266 = vrot.slane %v1265, 2
        %v1267 = vadd.f32 %v1265, %v1266
        %v1268 = vrot.slane %v1267, 1
        %v1269 = vadd.f32 %v1267, %v1268
        %v1270 = vrot.slane %v1239, 4
        %v1271 = vadd.f32 %v1239, %v1270
        %v1272 = vrot.slane %v1271, 2
        %v1273 = vadd.f32 %v1271, %v1272
        %v1274 = vrot.slane %v1273, 1
        %v1275 = vadd.f32 %v1273, %v1274
        %v1276 = vrot.slane %v1240, 4
        %v1277 = vadd.f32 %v1240, %v1276
        %v1278 = vrot.slane %v1277, 2
        %v1279 = vadd.f32 %v1277, %v1278
        %v1280 = vrot.slane %v1279, 1
        %v1281 = vadd.f32 %v1279, %v1280
        %v1282 = vrot.slane %v1241, 4
        %v1283 = vadd.f32 %v1241, %v1282
        %v1284 = vrot.slane %v1283, 2
        %v1285 = vadd.f32 %v1283, %v1284
        %v1286 = vrot.slane %v1285, 1
        %v1287 = vadd.f32 %v1285, %v1286
        %v1288 = vrot.slane %v1242, 4
        %v1289 = vadd.f32 %v1242, %v1288
        %v1290 = vrot.slane %v1289, 2
        %v1291 = vadd.f32 %v1289, %v1290
        %v1292 = vrot.slane %v1291, 1
        %v1293 = vadd.f32 %v1291, %v1292
        %v1294 = vrot.slane %v1243, 4
        %v1295 = vadd.f32 %v1243, %v1294
        %v1296 = vrot.slane %v1295, 2
        %v1297 = vadd.f32 %v1295, %v1296
        %v1298 = vrot.slane %v1297, 1
        %v1299 = vadd.f32 %v1297, %v1298
        %v1300 = vrot.slane %v1244, 4
        %v1301 = vadd.f32 %v1244, %v1300
        %v1302 = vrot.slane %v1301, 2
        %v1303 = vadd.f32 %v1301, %v1302
        %v1304 = vrot.slane %v1303, 1
        %v1305 = vadd.f32 %v1303, %v1304
        %v1306 = vrot.slane %v1245, 4
        %v1307 = vadd.f32 %v1245, %v1306
        %v1308 = vrot.slane %v1307, 2
        %v1309 = vadd.f32 %v1307, %v1308
        %v1310 = vrot.slane %v1309, 1
        %v1311 = vadd.f32 %v1309, %v1310
        %v1312 = vrot.slane %v1246, 4
        %v1313 = vadd.f32 %v1246, %v1312
        %v1314 = vrot.slane %v1313, 2
        %v1315 = vadd.f32 %v1313, %v1314
        %v1316 = vrot.slane %v1315, 1
        %v1317 = vadd.f32 %v1315, %v1316
        %v1318 = vrot.slane %v1247, 4
        %v1319 = vadd.f32 %v1247, %v1318
        %v1320 = vrot.slane %v1319, 2
        %v1321 = vadd.f32 %v1319, %v1320
        %v1322 = vrot.slane %v1321, 1
        %v1323 = vadd.f32 %v1321, %v1322
        %v1324 = vrot.slane %v1248, 4
        %v1325 = vadd.f32 %v1248, %v1324
        %v1326 = vrot.slane %v1325, 2
        %v1327 = vadd.f32 %v1325, %v1326
        %v1328 = vrot.slane %v1327, 1
        %v1329 = vadd.f32 %v1327, %v1328
        %v1330 = vrot.slane %v1249, 4
        %v1331 = vadd.f32 %v1249, %v1330
        %v1332 = vrot.slane %v1331, 2
        %v1333 = vadd.f32 %v1331, %v1332
        %v1334 = vrot.slane %v1333, 1
        %v1335 = vadd.f32 %v1333, %v1334
        %v1336 = vrot.slane %v1250, 4
        %v1337 = vadd.f32 %v1250, %v1336
        %v1338 = vrot.slane %v1337, 2
        %v1339 = vadd.f32 %v1337, %v1338
        %v1340 = vrot.slane %v1339, 1
        %v1341 = vadd.f32 %v1339, %v1340
        %v1342 = vrot.slane %v1251, 4
        %v1343 = vadd.f32 %v1251, %v1342
        %v1344 = vrot.slane %v1343, 2
        %v1345 = vadd.f32 %v1343, %v1344
        %v1346 = vrot.slane %v1345, 1
        %v1347 = vadd.f32 %v1345, %v1346
        %v1348 = vmul.f32 %v1257, 0.125
        %v1349 = vmul.f32 %v1263, 0.125
        %v1350 = vmul.f32 %v1269, 0.125
        %v1351 = vmul.f32 %v1275, 0.125
        %v1352 = vmul.f32 %v1281, 0.125
        %v1353 = vmul.f32 %v1287, 0.125
        %v1354 = vmul.f32 %v1293, 0.125
        %v1355 = vmul.f32 %v1299, 0.125
        %v1356 = vmul.f32 %v1305, 0.125
        %v1357 = vmul.f32 %v1311, 0.125
        %v1358 = vmul.f32 %v1317, 0.125
        %v1359 = vmul.f32 %v1323, 0.125
        %v1360 = vmul.f32 %v1329, 0.125
        %v1361 = vmul.f32 %v1335, 0.125
        %v1362 = vmul.f32 %v1341, 0.125
        %v1363 = vmul.f32 %v1347, 0.125
        %v1364 = vpack.c.bf16 %v1348, %v1348
        %v1365 = vpack.c.bf16 %v1349, %v1349
        %v1366 = vpack.c.bf16 %v1350, %v1350
        %v1367 = vpack.c.bf16 %v1351, %v1351
        %v1368 = vpack.c.bf16 %v1352, %v1352
        %v1369 = vpack.c.bf16 %v1353, %v1353
        %v1370 = vpack.c.bf16 %v1354, %v1354
        %v1371 = vpack.c.bf16 %v1355, %v1355
        %v1372 = vpack.c.bf16 %v1356, %v1356
        %v1373 = vpack.c.bf16 %v1357, %v1357
        %v1374 = vpack.c.bf16 %v1358, %v1358
        %v1375 = vpack.c.bf16 %v1359, %v1359
        %v1376 = vpack.c.bf16 %v1360, %v1360
        %v1377 = vpack.c.bf16 %v1361, %v1361
        %v1378 = vpack.c.bf16 %v1362, %v1362
        %v1379 = vpack.c.bf16 %v1363, %v1363
        %v1380 = vld [vmem:[#allocation11] sm:$0xff]
        %v1381 = vld [vmem:[#allocation11 + $0x8] sm:$0xff]
        %v1382 = vld [vmem:[#allocation11 + $0x10] sm:$0xff]
        %v1383 = vld [vmem:[#allocation11 + $0x18] sm:$0xff]
        %v1384 = vld [vmem:[#allocation11 + $0x20] sm:$0xff]
        %v1385 = vld [vmem:[#allocation11 + $0x28] sm:$0xff]
        %v1386 = vld [vmem:[#allocation11 + $0x30] sm:$0xff]
        %v1387 = vld [vmem:[#allocation11 + $0x38] sm:$0xff]
        %v1388 = vld [vmem:[#allocation11 + $0x40] sm:$0xff]
        %v1389 = vld [vmem:[#allocation11 + $0x48] sm:$0xff]
        %v1390 = vld [vmem:[#allocation11 + $0x50] sm:$0xff]
        %v1391 = vld [vmem:[#allocation11 + $0x58] sm:$0xff]
        %v1392 = vld [vmem:[#allocation11 + $0x60] sm:$0xff]
        %v1393 = vld [vmem:[#allocation11 + $0x68] sm:$0xff]
        %v1394 = vld [vmem:[#allocation11 + $0x70] sm:$0xff]
        %v1395 = vld [vmem:[#allocation11 + $0x78] sm:$0xff]
        %v1396 = vld [vmem:[#allocation11 + $0x80] sm:$0xff]
        %v1397 = vld [vmem:[#allocation11 + $0x88] sm:$0xff]
        %v1398 = vld [vmem:[#allocation11 + $0x90] sm:$0xff]
        %v1399 = vld [vmem:[#allocation11 + $0x98] sm:$0xff]
        %v1400 = vld [vmem:[#allocation11 + $0xa0] sm:$0xff]
        %v1401 = vld [vmem:[#allocation11 + $0xa8] sm:$0xff]
        %v1402 = vld [vmem:[#allocation11 + $0xb0] sm:$0xff]
        %v1403 = vld [vmem:[#allocation11 + $0xb8] sm:$0xff]
        %v1404 = vld [vmem:[#allocation11 + $0xc0] sm:$0xff]
        %v1405 = vld [vmem:[#allocation11 + $0xc8] sm:$0xff]
        %v1406 = vld [vmem:[#allocation11 + $0xd0] sm:$0xff]
        %v1407 = vld [vmem:[#allocation11 + $0xd8] sm:$0xff]
        %v1408 = vld [vmem:[#allocation11 + $0xe0] sm:$0xff]
        %v1409 = vld [vmem:[#allocation11 + $0xe8] sm:$0xff]
        %v1410 = vld [vmem:[#allocation11 + $0xf0] sm:$0xff]
        %v1411 = vld [vmem:[#allocation11 + $0xf8] sm:$0xff]
        %v1412 = vld [vmem:[%s583] sm:$0xf]
        %v1413 = vld [vmem:[%s583 + $0x4] sm:$0xf]
        %v1414 = vld [vmem:[#allocation13] sm:$0xff]
        %v1415 = vld [vmem:[#allocation13 + $0x8] sm:$0xff]
        %v1416 = vld [vmem:[#allocation13 + $0x10] sm:$0xff]
        %v1417 = vld [vmem:[#allocation13 + $0x18] sm:$0xff]
        %v1418 = vld [vmem:[#allocation13 + $0x20] sm:$0xff]
        %v1419 = vld [vmem:[#allocation13 + $0x28] sm:$0xff]
        %v1420 = vld [vmem:[#allocation13 + $0x30] sm:$0xff]
        %v1421 = vld [vmem:[#allocation13 + $0x38] sm:$0xff]
        %v1422 = vld [vmem:[#allocation13 + $0x40] sm:$0xff]
        %v1423 = vld [vmem:[#allocation13 + $0x48] sm:$0xff]
        %v1424 = vld [vmem:[#allocation13 + $0x50] sm:$0xff]
        %v1425 = vld [vmem:[#allocation13 + $0x58] sm:$0xff]
        %v1426 = vld [vmem:[#allocation13 + $0x60] sm:$0xff]
        %v1427 = vld [vmem:[#allocation13 + $0x68] sm:$0xff]
        %v1428 = vld [vmem:[#allocation13 + $0x70] sm:$0xff]
        %v1429 = vld [vmem:[#allocation13 + $0x78] sm:$0xff]
        %v1430 = vld [vmem:[#allocation13 + $0x80] sm:$0xff]
        %v1431 = vld [vmem:[#allocation13 + $0x88] sm:$0xff]
        %v1432 = vld [vmem:[#allocation13 + $0x90] sm:$0xff]
        %v1433 = vld [vmem:[#allocation13 + $0x98] sm:$0xff]
        %v1434 = vld [vmem:[#allocation13 + $0xa0] sm:$0xff]
        %v1435 = vld [vmem:[#allocation13 + $0xa8] sm:$0xff]
        %v1436 = vld [vmem:[#allocation13 + $0xb0] sm:$0xff]
        %v1437 = vld [vmem:[#allocation13 + $0xb8] sm:$0xff]
        %v1438 = vld [vmem:[#allocation13 + $0xc0] sm:$0xff]
        %v1439 = vld [vmem:[#allocation13 + $0xc8] sm:$0xff]
        %v1440 = vld [vmem:[#allocation13 + $0xd0] sm:$0xff]
        %v1441 = vld [vmem:[#allocation13 + $0xd8] sm:$0xff]
        %v1442 = vld [vmem:[#allocation13 + $0xe0] sm:$0xff]
        %v1443 = vld [vmem:[#allocation13 + $0xe8] sm:$0xff]
        %v1444 = vld [vmem:[#allocation13 + $0xf0] sm:$0xff]
        %v1445 = vld [vmem:[#allocation13 + $0xf8] sm:$0xff]
        %v1448 = vunpack.c.l.b16 %v1412
        %v1449 = vunpack.c.l.b16 %v1413
        %v1450 = vpack.c.b16 %v1449, %v1448
        %v1484 = vunpack.c.l.b16 %v1414
        %v1485 = vunpack.c.h.b16 %v1414
        %v1486 = vunpack.c.l.b16 %v1415
        %v1487 = vunpack.c.h.b16 %v1415
        %v1488 = vunpack.c.l.b16 %v1416
        %v1489 = vunpack.c.h.b16 %v1416
        %v1490 = vunpack.c.l.b16 %v1417
        %v1491 = vunpack.c.h.b16 %v1417
        %v1492 = vunpack.c.l.b16 %v1418
        %v1493 = vunpack.c.h.b16 %v1418
        %v1494 = vunpack.c.l.b16 %v1419
        %v1495 = vunpack.c.h.b16 %v1419
        %v1496 = vunpack.c.l.b16 %v1420
        %v1497 = vunpack.c.h.b16 %v1420
        %v1498 = vunpack.c.l.b16 %v1421
        %v1499 = vunpack.c.h.b16 %v1421
        %v1500 = vunpack.c.l.b16 %v1422
        %v1501 = vunpack.c.h.b16 %v1422
        %v1502 = vunpack.c.l.b16 %v1423
        %v1503 = vunpack.c.h.b16 %v1423
        %v1504 = vunpack.c.l.b16 %v1424
        %v1505 = vunpack.c.h.b16 %v1424
        %v1506 = vunpack.c.l.b16 %v1425
        %v1507 = vunpack.c.h.b16 %v1425
        %v1508 = vunpack.c.l.b16 %v1426
        %v1509 = vunpack.c.h.b16 %v1426
        %v1510 = vunpack.c.l.b16 %v1427
        %v1511 = vunpack.c.h.b16 %v1427
        %v1512 = vunpack.c.l.b16 %v1428
        %v1513 = vunpack.c.h.b16 %v1428
        %v1514 = vunpack.c.l.b16 %v1429
        %v1515 = vunpack.c.h.b16 %v1429
        %v1516 = vunpack.c.l.b16 %v1430
        %v1517 = vunpack.c.h.b16 %v1430
        %v1518 = vunpack.c.l.b16 %v1431
        %v1519 = vunpack.c.h.b16 %v1431
        %v1520 = vunpack.c.l.b16 %v1432
        %v1521 = vunpack.c.h.b16 %v1432
        %v1522 = vunpack.c.l.b16 %v1433
        %v1523 = vunpack.c.h.b16 %v1433
        %v1524 = vunpack.c.l.b16 %v1434
        %v1525 = vunpack.c.h.b16 %v1434
        %v1526 = vunpack.c.l.b16 %v1435
        %v1527 = vunpack.c.h.b16 %v1435
        %v1528 = vunpack.c.l.b16 %v1436
        %v1529 = vunpack.c.h.b16 %v1436
        %v1530 = vunpack.c.l.b16 %v1437
        %v1531 = vunpack.c.h.b16 %v1437
        %v1532 = vunpack.c.l.b16 %v1438
        %v1533 = vunpack.c.h.b16 %v1438
        %v1534 = vunpack.c.l.b16 %v1439
        %v1535 = vunpack.c.h.b16 %v1439
        %v1536 = vunpack.c.l.b16 %v1440
        %v1537 = vunpack.c.h.b16 %v1440
        %v1538 = vunpack.c.l.b16 %v1441
        %v1539 = vunpack.c.h.b16 %v1441
        %v1540 = vunpack.c.l.b16 %v1442
        %v1541 = vunpack.c.h.b16 %v1442
        %v1542 = vunpack.c.l.b16 %v1443
        %v1543 = vunpack.c.h.b16 %v1443
        %v1544 = vunpack.c.l.b16 %v1444
        %v1545 = vunpack.c.h.b16 %v1444
        %v1546 = vunpack.c.l.b16 %v1445
        %v1547 = vunpack.c.h.b16 %v1445
        %v1548 = vpack.c.b16 %v1488, %v1484
        %v1549 = vpack.c.b16 %v1489, %v1485
        %v1550 = vpack.c.b16 %v1490, %v1486
        %v1551 = vpack.c.b16 %v1491, %v1487
        %v1552 = vpack.c.b16 %v1496, %v1492
        %v1553 = vpack.c.b16 %v1497, %v1493
        %v1554 = vpack.c.b16 %v1498, %v1494
        %v1555 = vpack.c.b16 %v1499, %v1495
        %v1556 = vpack.c.b16 %v1504, %v1500
        %v1557 = vpack.c.b16 %v1505, %v1501
        %v1558 = vpack.c.b16 %v1506, %v1502
        %v1559 = vpack.c.b16 %v1507, %v1503
        %v1560 = vpack.c.b16 %v1512, %v1508
        %v1561 = vpack.c.b16 %v1513, %v1509
        %v1562 = vpack.c.b16 %v1514, %v1510
        %v1563 = vpack.c.b16 %v1515, %v1511
        %v1564 = vpack.c.b16 %v1520, %v1516
        %v1565 = vpack.c.b16 %v1521, %v1517
        %v1566 = vpack.c.b16 %v1522, %v1518
        %v1567 = vpack.c.b16 %v1523, %v1519
        %v1568 = vpack.c.b16 %v1528, %v1524
        %v1569 = vpack.c.b16 %v1529, %v1525
        %v1570 = vpack.c.b16 %v1530, %v1526
        %v1571 = vpack.c.b16 %v1531, %v1527
        %v1572 = vpack.c.b16 %v1536, %v1532
        %v1573 = vpack.c.b16 %v1537, %v1533
        %v1574 = vpack.c.b16 %v1538, %v1534
        %v1575 = vpack.c.b16 %v1539, %v1535
        %v1576 = vpack.c.b16 %v1544, %v1540
        %v1577 = vpack.c.b16 %v1545, %v1541
        %v1578 = vpack.c.b16 %v1546, %v1542
        %v1579 = vpack.c.b16 %v1547, %v1543
        %1612 = vmatprep.subr.bf16.mxu0 %v1577
        %1613 = vmatpush1.bf16.msra.mxu0 %v1576
        %1614 = vmatprep.subr.bf16.mxu0 %v1573
        %1615 = vmatpush1.bf16.msra.mxu0 %v1572
        %1616 = vmatprep.subr.bf16.mxu0 %v1569
        %1617 = vmatpush1.bf16.msra.mxu0 %v1568
        %1618 = vmatprep.subr.bf16.mxu0 %v1565
        %1619 = vmatpush1.bf16.msra.mxu0 %v1564
        %1620 = vmatprep.subr.bf16.mxu0 %v1561
        %1621 = vmatpush1.bf16.msra.mxu0 %v1560
        %1622 = vmatprep.subr.bf16.mxu0 %v1557
        %1623 = vmatpush1.bf16.msra.mxu0 %v1556
        %1624 = vmatprep.subr.bf16.mxu0 %v1553
        %1625 = vmatpush1.bf16.msra.mxu0 %v1552
        %1626 = vmatprep.subr.bf16.mxu0 %v1549
        %1627 = vmatpush1.bf16.msra.mxu0 %v1548
        %1628 = vmatprep.subr.bf16.mxu0 0
        %1629 = vmatpush2.bf16.msra.mxu0 0
        %1630 = vmatprep.subr.bf16.mxu0 0
        %1631 = vmatpush2.bf16.msra.mxu0 0
        %1632 = vmatprep.subr.bf16.mxu0 0
        %1633 = vmatpush2.bf16.msra.mxu0 0
        %1634 = vmatprep.subr.bf16.mxu0 0
        %1635 = vmatpush2.bf16.msra.mxu0 0
        %1636 = vmatprep.subr.bf16.mxu0 0
        %1637 = vmatpush2.bf16.msra.mxu0 0
        %1638 = vmatprep.subr.bf16.mxu0 0
        %1639 = vmatpush2.bf16.msra.mxu0 0
        %1640 = vmatprep.subr.bf16.mxu0 0
        %1641 = vmatpush2.bf16.msra.mxu0 0
        %1642 = vmatprep.subr.bf16.mxu0 0
        %1643 = vmatpush2.bf16.msra.mxu0 0
        %1644 = vmatprep.mubr.bf16.mxu0 0
        %1645 = vmatmul.mubr.bf16.gmra.mxu0 %v1450
        %v1646 = vpop.f32.mrf.mxu0
        %v1647 = vadd.f32 0.0, %v1646
        %v1648 = vpop.f32.mrf.mxu0
        %v1649 = vadd.f32 0.0, %v1648
        %v1650 = vpop.f32.mrf.mxu0
        %v1651 = vadd.f32 0.0, %v1650
        %v1652 = vpop.f32.mrf.mxu0
        %v1653 = vadd.f32 0.0, %v1652
        %1654 = vdwg.mxu0
        %1655 = vmatprep.subr.bf16.mxu0 %v1579
        %1656 = vmatpush1.bf16.msra.mxu0 %v1578
        %1657 = vmatprep.subr.bf16.mxu0 %v1575
        %1658 = vmatpush1.bf16.msra.mxu0 %v1574
        %1659 = vmatprep.subr.bf16.mxu0 %v1571
        %1660 = vmatpush1.bf16.msra.mxu0 %v1570
        %1661 = vmatprep.subr.bf16.mxu0 %v1567
        %1662 = vmatpush1.bf16.msra.mxu0 %v1566
        %1663 = vmatprep.subr.bf16.mxu0 %v1563
        %1664 = vmatpush1.bf16.msra.mxu0 %v1562
        %1665 = vmatprep.subr.bf16.mxu0 %v1559
        %1666 = vmatpush1.bf16.msra.mxu0 %v1558
        %1667 = vmatprep.subr.bf16.mxu0 %v1555
        %1668 = vmatpush1.bf16.msra.mxu0 %v1554
        %1669 = vmatprep.subr.bf16.mxu0 %v1551
        %1670 = vmatpush1.bf16.msra.mxu0 %v1550
        %1671 = vmatprep.subr.bf16.mxu0 0
        %1672 = vmatpush2.bf16.msra.mxu0 0
        %1673 = vmatprep.subr.bf16.mxu0 0
        %1674 = vmatpush2.bf16.msra.mxu0 0
        %1675 = vmatprep.subr.bf16.mxu0 0
        %1676 = vmatpush2.bf16.msra.mxu0 0
        %1677 = vmatprep.subr.bf16.mxu0 0
        %1678 = vmatpush2.bf16.msra.mxu0 0
        %1679 = vmatprep.subr.bf16.mxu0 0
        %1680 = vmatpush2.bf16.msra.mxu0 0
        %1681 = vmatprep.subr.bf16.mxu0 0
        %1682 = vmatpush2.bf16.msra.mxu0 0
        %1683 = vmatprep.subr.bf16.mxu0 0
        %1684 = vmatpush2.bf16.msra.mxu0 0
        %1685 = vmatprep.subr.bf16.mxu0 0
        %1686 = vmatpush2.bf16.msra.mxu0 0
        %1687 = vmatprep.mubr.bf16.mxu0 0
        %1688 = vmatmul.mubr.bf16.gmra.mxu0 %v1450
        %v1689 = vpop.f32.mrf.mxu0
        %v1690 = vadd.f32 0.0, %v1689
        %v1691 = vpop.f32.mrf.mxu0
        %v1692 = vadd.f32 0.0, %v1691
        %v1693 = vpop.f32.mrf.mxu0
        %v1694 = vadd.f32 0.0, %v1693
        %v1695 = vpop.f32.mrf.mxu0
        %v1696 = vadd.f32 0.0, %v1695
        %1697 = vdwg.mxu0
        %v1714 = vunpack.c.l.b16 %v1364
        %v1715 = vunpack.c.l.b16 %v1365
        %v1716 = vunpack.c.l.b16 %v1366
        %v1717 = vunpack.c.l.b16 %v1367
        %v1718 = vunpack.c.l.b16 %v1368
        %v1719 = vunpack.c.l.b16 %v1369
        %v1720 = vunpack.c.l.b16 %v1370
        %v1721 = vunpack.c.l.b16 %v1371
        %v1722 = vunpack.c.l.b16 %v1372
        %v1723 = vunpack.c.l.b16 %v1373
        %v1724 = vunpack.c.l.b16 %v1374
        %v1725 = vunpack.c.l.b16 %v1375
        %v1726 = vunpack.c.l.b16 %v1376
        %v1727 = vunpack.c.l.b16 %v1377
        %v1728 = vunpack.c.l.b16 %v1378
        %v1729 = vunpack.c.l.b16 %v1379
        %vm1730 = vcmask 1041409
        %v1731 = vsel %vm1730, %v1715, %v1714
        %vm1732 = vcmask 1042434
        %v1733 = vsel %vm1732, %v1716, %v1731
        %vm1734 = vcmask 1043459
        %v1735 = vsel %vm1734, %v1717, %v1733
        %vm1736 = vcmask 1044484
        %v1737 = vsel %vm1736, %v1718, %v1735
        %vm1738 = vcmask 1045509
        %v1739 = vsel %vm1738, %v1719, %v1737
        %vm1740 = vcmask 1046534
        %v1741 = vsel %vm1740, %v1720, %v1739
        %vm1742 = vcmask 1047559
        %v1743 = vsel %vm1742, %v1721, %v1741
        %v1744 = vsel %vm1730, %v1723, %v1722
        %v1745 = vsel %vm1732, %v1724, %v1744
        %v1746 = vsel %vm1734, %v1725, %v1745
        %v1747 = vsel %vm1736, %v1726, %v1746
        %v1748 = vsel %vm1738, %v1727, %v1747
        %v1749 = vsel %vm1740, %v1728, %v1748
        %v1750 = vsel %vm1742, %v1729, %v1749
        %v1751 = vpack.c.b16 %v1750, %v1743
        %v1785 = vunpack.c.l.b16 %v1380
        %v1786 = vunpack.c.h.b16 %v1380
        %v1787 = vunpack.c.l.b16 %v1381
        %v1788 = vunpack.c.h.b16 %v1381
        %v1789 = vunpack.c.l.b16 %v1382
        %v1790 = vunpack.c.h.b16 %v1382
        %v1791 = vunpack.c.l.b16 %v1383
        %v1792 = vunpack.c.h.b16 %v1383
        %v1793 = vunpack.c.l.b16 %v1384
        %v1794 = vunpack.c.h.b16 %v1384
        %v1795 = vunpack.c.l.b16 %v1385
        %v1796 = vunpack.c.h.b16 %v1385
        %v1797 = vunpack.c.l.b16 %v1386
        %v1798 = vunpack.c.h.b16 %v1386
        %v1799 = vunpack.c.l.b16 %v1387
        %v1800 = vunpack.c.h.b16 %v1387
        %v1801 = vunpack.c.l.b16 %v1388
        %v1802 = vunpack.c.h.b16 %v1388
        %v1803 = vunpack.c.l.b16 %v1389
        %v1804 = vunpack.c.h.b16 %v1389
        %v1805 = vunpack.c.l.b16 %v1390
        %v1806 = vunpack.c.h.b16 %v1390
        %v1807 = vunpack.c.l.b16 %v1391
        %v1808 = vunpack.c.h.b16 %v1391
        %v1809 = vunpack.c.l.b16 %v1392
        %v1810 = vunpack.c.h.b16 %v1392
        %v1811 = vunpack.c.l.b16 %v1393
        %v1812 = vunpack.c.h.b16 %v1393
        %v1813 = vunpack.c.l.b16 %v1394
        %v1814 = vunpack.c.h.b16 %v1394
        %v1815 = vunpack.c.l.b16 %v1395
        %v1816 = vunpack.c.h.b16 %v1395
        %v1817 = vunpack.c.l.b16 %v1396
        %v1818 = vunpack.c.h.b16 %v1396
        %v1819 = vunpack.c.l.b16 %v1397
        %v1820 = vunpack.c.h.b16 %v1397
        %v1821 = vunpack.c.l.b16 %v1398
        %v1822 = vunpack.c.h.b16 %v1398
        %v1823 = vunpack.c.l.b16 %v1399
        %v1824 = vunpack.c.h.b16 %v1399
        %v1825 = vunpack.c.l.b16 %v1400
        %v1826 = vunpack.c.h.b16 %v1400
        %v1827 = vunpack.c.l.b16 %v1401
        %v1828 = vunpack.c.h.b16 %v1401
        %v1829 = vunpack.c.l.b16 %v1402
        %v1830 = vunpack.c.h.b16 %v1402
        %v1831 = vunpack.c.l.b16 %v1403
        %v1832 = vunpack.c.h.b16 %v1403
        %v1833 = vunpack.c.l.b16 %v1404
        %v1834 = vunpack.c.h.b16 %v1404
        %v1835 = vunpack.c.l.b16 %v1405
        %v1836 = vunpack.c.h.b16 %v1405
        %v1837 = vunpack.c.l.b16 %v1406
        %v1838 = vunpack.c.h.b16 %v1406
        %v1839 = vunpack.c.l.b16 %v1407
        %v1840 = vunpack.c.h.b16 %v1407
        %v1841 = vunpack.c.l.b16 %v1408
        %v1842 = vunpack.c.h.b16 %v1408
        %v1843 = vunpack.c.l.b16 %v1409
        %v1844 = vunpack.c.h.b16 %v1409
        %v1845 = vunpack.c.l.b16 %v1410
        %v1846 = vunpack.c.h.b16 %v1410
        %v1847 = vunpack.c.l.b16 %v1411
        %v1848 = vunpack.c.h.b16 %v1411
        %v1849 = vpack.c.b16 %v1789, %v1785
        %v1850 = vpack.c.b16 %v1790, %v1786
        %v1851 = vpack.c.b16 %v1791, %v1787
        %v1852 = vpack.c.b16 %v1792, %v1788
        %v1853 = vpack.c.b16 %v1797, %v1793
        %v1854 = vpack.c.b16 %v1798, %v1794
        %v1855 = vpack.c.b16 %v1799, %v1795
        %v1856 = vpack.c.b16 %v1800, %v1796
        %v1857 = vpack.c.b16 %v1805, %v1801
        %v1858 = vpack.c.b16 %v1806, %v1802
        %v1859 = vpack.c.b16 %v1807, %v1803
        %v1860 = vpack.c.b16 %v1808, %v1804
        %v1861 = vpack.c.b16 %v1813, %v1809
        %v1862 = vpack.c.b16 %v1814, %v1810
        %v1863 = vpack.c.b16 %v1815, %v1811
        %v1864 = vpack.c.b16 %v1816, %v1812
        %v1865 = vpack.c.b16 %v1821, %v1817
        %v1866 = vpack.c.b16 %v1822, %v1818
        %v1867 = vpack.c.b16 %v1823, %v1819
        %v1868 = vpack.c.b16 %v1824, %v1820
        %v1869 = vpack.c.b16 %v1829, %v1825
        %v1870 = vpack.c.b16 %v1830, %v1826
        %v1871 = vpack.c.b16 %v1831, %v1827
        %v1872 = vpack.c.b16 %v1832, %v1828
        %v1873 = vpack.c.b16 %v1837, %v1833
        %v1874 = vpack.c.b16 %v1838, %v1834
        %v1875 = vpack.c.b16 %v1839, %v1835
        %v1876 = vpack.c.b16 %v1840, %v1836
        %v1877 = vpack.c.b16 %v1845, %v1841
        %v1878 = vpack.c.b16 %v1846, %v1842
        %v1879 = vpack.c.b16 %v1847, %v1843
        %v1880 = vpack.c.b16 %v1848, %v1844
        %1913 = vmatprep.subr.bf16.mxu0 %v1878
        %1914 = vmatpush1.bf16.msra.mxu0 %v1877
        %1915 = vmatprep.subr.bf16.mxu0 %v1874
        %1916 = vmatpush1.bf16.msra.mxu0 %v1873
        %1917 = vmatprep.subr.bf16.mxu0 %v1870
        %1918 = vmatpush1.bf16.msra.mxu0 %v1869
        %1919 = vmatprep.subr.bf16.mxu0 %v1866
        %1920 = vmatpush1.bf16.msra.mxu0 %v1865
        %1921 = vmatprep.subr.bf16.mxu0 %v1862
        %1922 = vmatpush1.bf16.msra.mxu0 %v1861
        %1923 = vmatprep.subr.bf16.mxu0 %v1858
        %1924 = vmatpush1.bf16.msra.mxu0 %v1857
        %1925 = vmatprep.subr.bf16.mxu0 %v1854
        %1926 = vmatpush1.bf16.msra.mxu0 %v1853
        %1927 = vmatprep.subr.bf16.mxu0 %v1850
        %1928 = vmatpush1.bf16.msra.mxu0 %v1849
        %1929 = vmatprep.subr.bf16.mxu0 0
        %1930 = vmatpush2.bf16.msra.mxu0 0
        %1931 = vmatprep.subr.bf16.mxu0 0
        %1932 = vmatpush2.bf16.msra.mxu0 0
        %1933 = vmatprep.subr.bf16.mxu0 0
        %1934 = vmatpush2.bf16.msra.mxu0 0
        %1935 = vmatprep.subr.bf16.mxu0 0
        %1936 = vmatpush2.bf16.msra.mxu0 0
        %1937 = vmatprep.subr.bf16.mxu0 0
        %1938 = vmatpush2.bf16.msra.mxu0 0
        %1939 = vmatprep.subr.bf16.mxu0 0
        %1940 = vmatpush2.bf16.msra.mxu0 0
        %1941 = vmatprep.subr.bf16.mxu0 0
        %1942 = vmatpush2.bf16.msra.mxu0 0
        %1943 = vmatprep.subr.bf16.mxu0 0
        %1944 = vmatpush2.bf16.msra.mxu0 0
        %1945 = vmatprep.mubr.bf16.mxu0 0
        %1946 = vmatmul.mubr.bf16.gmra.mxu0 %v1751
        %v1947 = vpop.f32.mrf.mxu0
        %v1948 = vadd.f32 %v1647, %v1947
        %v1949 = vpop.f32.mrf.mxu0
        %v1950 = vadd.f32 %v1649, %v1949
        %v1951 = vpop.f32.mrf.mxu0
        %v1952 = vadd.f32 %v1651, %v1951
        %v1953 = vpop.f32.mrf.mxu0
        %v1954 = vadd.f32 %v1653, %v1953
        %1955 = vdwg.mxu0
        %1956 = vmatprep.subr.bf16.mxu0 %v1880
        %1957 = vmatpush1.bf16.msra.mxu0 %v1879
        %1958 = vmatprep.subr.bf16.mxu0 %v1876
        %1959 = vmatpush1.bf16.msra.mxu0 %v1875
        %1960 = vmatprep.subr.bf16.mxu0 %v1872
        %1961 = vmatpush1.bf16.msra.mxu0 %v1871
        %1962 = vmatprep.subr.bf16.mxu0 %v1868
        %1963 = vmatpush1.bf16.msra.mxu0 %v1867
        %1964 = vmatprep.subr.bf16.mxu0 %v1864
        %1965 = vmatpush1.bf16.msra.mxu0 %v1863
        %1966 = vmatprep.subr.bf16.mxu0 %v1860
        %1967 = vmatpush1.bf16.msra.mxu0 %v1859
        %1968 = vmatprep.subr.bf16.mxu0 %v1856
        %1969 = vmatpush1.bf16.msra.mxu0 %v1855
        %1970 = vmatprep.subr.bf16.mxu0 %v1852
        %1971 = vmatpush1.bf16.msra.mxu0 %v1851
        %1972 = vmatprep.subr.bf16.mxu0 0
        %1973 = vmatpush2.bf16.msra.mxu0 0
        %1974 = vmatprep.subr.bf16.mxu0 0
        %1975 = vmatpush2.bf16.msra.mxu0 0
        %1976 = vmatprep.subr.bf16.mxu0 0
        %1977 = vmatpush2.bf16.msra.mxu0 0
        %1978 = vmatprep.subr.bf16.mxu0 0
        %1979 = vmatpush2.bf16.msra.mxu0 0
        %1980 = vmatprep.subr.bf16.mxu0 0
        %1981 = vmatpush2.bf16.msra.mxu0 0
        %1982 = vmatprep.subr.bf16.mxu0 0
        %1983 = vmatpush2.bf16.msra.mxu0 0
        %1984 = vmatprep.subr.bf16.mxu0 0
        %1985 = vmatpush2.bf16.msra.mxu0 0
        %1986 = vmatprep.subr.bf16.mxu0 0
        %1987 = vmatpush2.bf16.msra.mxu0 0
        %1988 = vmatprep.mubr.bf16.mxu0 0
        %1989 = vmatmul.mubr.bf16.gmra.mxu0 %v1751
        %v1990 = vpop.f32.mrf.mxu0
        %v1991 = vadd.f32 %v1690, %v1990
        %v1992 = vpop.f32.mrf.mxu0
        %v1993 = vadd.f32 %v1692, %v1992
        %v1994 = vpop.f32.mrf.mxu0
        %v1995 = vadd.f32 %v1694, %v1994
        %v1996 = vpop.f32.mrf.mxu0
        %v1997 = vadd.f32 %v1696, %v1996
        %1998 = vdwg.mxu0
        %v1999 = vld [vmem:[%s8] sm:$0xf]
        %v2001 = vlaneseq
        %v2002 = vshrl.u32 %v2001, 7
        %v2003 = vsub.s32 0, %v2002
        %v2004 = vrot.slane %v1999, %v2003
        %v2005 = vlaneseq
        %v2006 = vshrl.u32 %v2005, 7
        %v2007 = vsub.s32 1, %v2006
        %v2008 = vrot.slane %v1999, %v2007
        %v2009 = vlaneseq
        %v2010 = vshrl.u32 %v2009, 7
        %v2011 = vsub.s32 2, %v2010
        %v2012 = vrot.slane %v1999, %v2011
        %v2013 = vlaneseq
        %v2014 = vshrl.u32 %v2013, 7
        %v2015 = vsub.s32 3, %v2014
        %v2016 = vrot.slane %v1999, %v2015
        %v2021 = vadd.f32 %v1948, %v2004
        %v2022 = vadd.f32 %v1950, %v2008
        %v2023 = vadd.f32 %v1991, %v2012
        %v2024 = vadd.f32 %v1993, %v2016
        %v2025 = vadd.f32 %v1952, %v2004
        %v2026 = vadd.f32 %v1954, %v2008
        %v2027 = vadd.f32 %v1995, %v2012
        %v2028 = vadd.f32 %v1997, %v2016
        %v2029 = vmax.f32 %v2021, 0.0
        %v2030 = vmax.f32 %v2022, 0.0
        %v2031 = vmax.f32 %v2023, 0.0
        %v2032 = vmax.f32 %v2024, 0.0
        %v2033 = vmax.f32 %v2025, 0.0
        %v2034 = vmax.f32 %v2026, 0.0
        %v2035 = vmax.f32 %v2027, 0.0
        %v2036 = vmax.f32 %v2028, 0.0
        %v2037 = vpack.c.bf16 %v2033, %v2029
        %v2038 = vpack.c.bf16 %v2034, %v2030
        %v2039 = vpack.c.bf16 %v2035, %v2031
        %v2040 = vpack.c.bf16 %v2036, %v2032
        %v2041 = vld [vmem:[#allocation14] sm:$0xff]
        %v2042 = vld [vmem:[#allocation14 + $0x8] sm:$0xff]
        %v2043 = vld [vmem:[#allocation14 + $0x10] sm:$0xff]
        %v2044 = vld [vmem:[#allocation14 + $0x18] sm:$0xff]
        %v2045 = vld [vmem:[#allocation14 + $0x20] sm:$0xff]
        %v2046 = vld [vmem:[#allocation14 + $0x28] sm:$0xff]
        %v2047 = vld [vmem:[#allocation14 + $0x30] sm:$0xff]
        %v2048 = vld [vmem:[#allocation14 + $0x38] sm:$0xff]
        %v2049 = vld [vmem:[#allocation14 + $0x40] sm:$0xff]
        %v2050 = vld [vmem:[#allocation14 + $0x48] sm:$0xff]
        %v2051 = vld [vmem:[#allocation14 + $0x50] sm:$0xff]
        %v2052 = vld [vmem:[#allocation14 + $0x58] sm:$0xff]
        %v2053 = vld [vmem:[#allocation14 + $0x60] sm:$0xff]
        %v2054 = vld [vmem:[#allocation14 + $0x68] sm:$0xff]
        %v2055 = vld [vmem:[#allocation14 + $0x70] sm:$0xff]
        %v2056 = vld [vmem:[#allocation14 + $0x78] sm:$0xff]
        %v2057 = vld [vmem:[#allocation14 + $0x80] sm:$0xff]
        %v2058 = vld [vmem:[#allocation14 + $0x88] sm:$0xff]
        %v2059 = vld [vmem:[#allocation14 + $0x90] sm:$0xff]
        %v2060 = vld [vmem:[#allocation14 + $0x98] sm:$0xff]
        %v2061 = vld [vmem:[#allocation14 + $0xa0] sm:$0xff]
        %v2062 = vld [vmem:[#allocation14 + $0xa8] sm:$0xff]
        %v2063 = vld [vmem:[#allocation14 + $0xb0] sm:$0xff]
        %v2064 = vld [vmem:[#allocation14 + $0xb8] sm:$0xff]
        %v2065 = vld [vmem:[#allocation14 + $0xc0] sm:$0xff]
        %v2066 = vld [vmem:[#allocation14 + $0xc8] sm:$0xff]
        %v2067 = vld [vmem:[#allocation14 + $0xd0] sm:$0xff]
        %v2068 = vld [vmem:[#allocation14 + $0xd8] sm:$0xff]
        %v2069 = vld [vmem:[#allocation14 + $0xe0] sm:$0xff]
        %v2070 = vld [vmem:[#allocation14 + $0xe8] sm:$0xff]
        %v2071 = vld [vmem:[#allocation14 + $0xf0] sm:$0xff]
        %v2072 = vld [vmem:[#allocation14 + $0xf8] sm:$0xff]
        %v2073 = vld [vmem:[#allocation14 + $0x100] sm:$0xff]
        %v2074 = vld [vmem:[#allocation14 + $0x108] sm:$0xff]
        %v2075 = vld [vmem:[#allocation14 + $0x110] sm:$0xff]
        %v2076 = vld [vmem:[#allocation14 + $0x118] sm:$0xff]
        %v2077 = vld [vmem:[#allocation14 + $0x120] sm:$0xff]
        %v2078 = vld [vmem:[#allocation14 + $0x128] sm:$0xff]
        %v2079 = vld [vmem:[#allocation14 + $0x130] sm:$0xff]
        %v2080 = vld [vmem:[#allocation14 + $0x138] sm:$0xff]
        %v2081 = vld [vmem:[#allocation14 + $0x140] sm:$0xff]
        %v2082 = vld [vmem:[#allocation14 + $0x148] sm:$0xff]
        %v2083 = vld [vmem:[#allocation14 + $0x150] sm:$0xff]
        %v2084 = vld [vmem:[#allocation14 + $0x158] sm:$0xff]
        %v2085 = vld [vmem:[#allocation14 + $0x160] sm:$0xff]
        %v2086 = vld [vmem:[#allocation14 + $0x168] sm:$0xff]
        %v2087 = vld [vmem:[#allocation14 + $0x170] sm:$0xff]
        %v2088 = vld [vmem:[#allocation14 + $0x178] sm:$0xff]
        %v2089 = vld [vmem:[#allocation14 + $0x180] sm:$0xff]
        %v2090 = vld [vmem:[#allocation14 + $0x188] sm:$0xff]
        %v2091 = vld [vmem:[#allocation14 + $0x190] sm:$0xff]
        %v2092 = vld [vmem:[#allocation14 + $0x198] sm:$0xff]
        %v2093 = vld [vmem:[#allocation14 + $0x1a0] sm:$0xff]
        %v2094 = vld [vmem:[#allocation14 + $0x1a8] sm:$0xff]
        %v2095 = vld [vmem:[#allocation14 + $0x1b0] sm:$0xff]
        %v2096 = vld [vmem:[#allocation14 + $0x1b8] sm:$0xff]
        %v2097 = vld [vmem:[#allocation14 + $0x1c0] sm:$0xff]
        %v2098 = vld [vmem:[#allocation14 + $0x1c8] sm:$0xff]
        %v2099 = vld [vmem:[#allocation14 + $0x1d0] sm:$0xff]
        %v2100 = vld [vmem:[#allocation14 + $0x1d8] sm:$0xff]
        %v2101 = vld [vmem:[#allocation14 + $0x1e0] sm:$0xff]
        %v2102 = vld [vmem:[#allocation14 + $0x1e8] sm:$0xff]
        %v2103 = vld [vmem:[#allocation14 + $0x1f0] sm:$0xff]
        %v2104 = vld [vmem:[#allocation14 + $0x1f8] sm:$0xff]
        %v2105 = vld [vmem:[#allocation14 + $0x200] sm:$0xff]
        %v2106 = vld [vmem:[#allocation14 + $0x208] sm:$0xff]
        %v2107 = vld [vmem:[#allocation14 + $0x210] sm:$0xff]
        %v2108 = vld [vmem:[#allocation14 + $0x218] sm:$0xff]
        %v2109 = vld [vmem:[#allocation14 + $0x220] sm:$0xff]
        %v2110 = vld [vmem:[#allocation14 + $0x228] sm:$0xff]
        %v2111 = vld [vmem:[#allocation14 + $0x230] sm:$0xff]
        %v2112 = vld [vmem:[#allocation14 + $0x238] sm:$0xff]
        %v2113 = vld [vmem:[#allocation14 + $0x240] sm:$0xff]
        %v2114 = vld [vmem:[#allocation14 + $0x248] sm:$0xff]
        %v2115 = vld [vmem:[#allocation14 + $0x250] sm:$0xff]
        %v2116 = vld [vmem:[#allocation14 + $0x258] sm:$0xff]
        %v2117 = vld [vmem:[#allocation14 + $0x260] sm:$0xff]
        %v2118 = vld [vmem:[#allocation14 + $0x268] sm:$0xff]
        %v2119 = vld [vmem:[#allocation14 + $0x270] sm:$0xff]
        %v2120 = vld [vmem:[#allocation14 + $0x278] sm:$0xff]
        %v2121 = vld [vmem:[#allocation14 + $0x280] sm:$0xff]
        %v2122 = vld [vmem:[#allocation14 + $0x288] sm:$0xff]
        %v2123 = vld [vmem:[#allocation14 + $0x290] sm:$0xff]
        %v2124 = vld [vmem:[#allocation14 + $0x298] sm:$0xff]
        %v2125 = vld [vmem:[#allocation14 + $0x2a0] sm:$0xff]
        %v2126 = vld [vmem:[#allocation14 + $0x2a8] sm:$0xff]
        %v2127 = vld [vmem:[#allocation14 + $0x2b0] sm:$0xff]
        %v2128 = vld [vmem:[#allocation14 + $0x2b8] sm:$0xff]
        %v2129 = vld [vmem:[#allocation14 + $0x2c0] sm:$0xff]
        %v2130 = vld [vmem:[#allocation14 + $0x2c8] sm:$0xff]
        %v2131 = vld [vmem:[#allocation14 + $0x2d0] sm:$0xff]
        %v2132 = vld [vmem:[#allocation14 + $0x2d8] sm:$0xff]
        %v2133 = vld [vmem:[#allocation14 + $0x2e0] sm:$0xff]
        %v2134 = vld [vmem:[#allocation14 + $0x2e8] sm:$0xff]
        %v2135 = vld [vmem:[#allocation14 + $0x2f0] sm:$0xff]
        %v2136 = vld [vmem:[#allocation14 + $0x2f8] sm:$0xff]
        %v2137 = vld [vmem:[#allocation14 + $0x300] sm:$0xff]
        %v2138 = vld [vmem:[#allocation14 + $0x308] sm:$0xff]
        %v2139 = vld [vmem:[#allocation14 + $0x310] sm:$0xff]
        %v2140 = vld [vmem:[#allocation14 + $0x318] sm:$0xff]
        %v2141 = vld [vmem:[#allocation14 + $0x320] sm:$0xff]
        %v2142 = vld [vmem:[#allocation14 + $0x328] sm:$0xff]
        %v2143 = vld [vmem:[#allocation14 + $0x330] sm:$0xff]
        %v2144 = vld [vmem:[#allocation14 + $0x338] sm:$0xff]
        %v2145 = vld [vmem:[#allocation14 + $0x340] sm:$0xff]
        %v2146 = vld [vmem:[#allocation14 + $0x348] sm:$0xff]
        %v2147 = vld [vmem:[#allocation14 + $0x350] sm:$0xff]
        %v2148 = vld [vmem:[#allocation14 + $0x358] sm:$0xff]
        %v2149 = vld [vmem:[#allocation14 + $0x360] sm:$0xff]
        %v2150 = vld [vmem:[#allocation14 + $0x368] sm:$0xff]
        %v2151 = vld [vmem:[#allocation14 + $0x370] sm:$0xff]
        %v2152 = vld [vmem:[#allocation14 + $0x378] sm:$0xff]
        %v2153 = vld [vmem:[#allocation14 + $0x380] sm:$0xff]
        %v2154 = vld [vmem:[#allocation14 + $0x388] sm:$0xff]
        %v2155 = vld [vmem:[#allocation14 + $0x390] sm:$0xff]
        %v2156 = vld [vmem:[#allocation14 + $0x398] sm:$0xff]
        %v2157 = vld [vmem:[#allocation14 + $0x3a0] sm:$0xff]
        %v2158 = vld [vmem:[#allocation14 + $0x3a8] sm:$0xff]
        %v2159 = vld [vmem:[#allocation14 + $0x3b0] sm:$0xff]
        %v2160 = vld [vmem:[#allocation14 + $0x3b8] sm:$0xff]
        %v2161 = vld [vmem:[#allocation14 + $0x3c0] sm:$0xff]
        %v2162 = vld [vmem:[#allocation14 + $0x3c8] sm:$0xff]
        %v2163 = vld [vmem:[#allocation14 + $0x3d0] sm:$0xff]
        %v2164 = vld [vmem:[#allocation14 + $0x3d8] sm:$0xff]
        %v2165 = vld [vmem:[#allocation14 + $0x3e0] sm:$0xff]
        %v2166 = vld [vmem:[#allocation14 + $0x3e8] sm:$0xff]
        %v2167 = vld [vmem:[#allocation14 + $0x3f0] sm:$0xff]
        %v2168 = vld [vmem:[#allocation14 + $0x3f8] sm:$0xff]
        %v2169 = vld [vmem:[%s10] sm:$0xf]
        %v2171 = vlaneseq
        %v2172 = vshrl.u32 %v2171, 7
        %v2173 = vsub.s32 0, %v2172
        %v2174 = vrot.slane %v2169, %v2173
        %v2175 = vlaneseq
        %v2176 = vshrl.u32 %v2175, 7
        %v2177 = vsub.s32 1, %v2176
        %v2178 = vrot.slane %v2169, %v2177
        %v2179 = vlaneseq
        %v2180 = vshrl.u32 %v2179, 7
        %v2181 = vsub.s32 2, %v2180
        %v2182 = vrot.slane %v2169, %v2181
        %v2183 = vlaneseq
        %v2184 = vshrl.u32 %v2183, 7
        %v2185 = vsub.s32 3, %v2184
        %v2186 = vrot.slane %v2169, %v2185
        %v2319 = vunpack.c.l.b16 %v2041
        %v2320 = vunpack.c.h.b16 %v2041
        %v2321 = vunpack.c.l.b16 %v2042
        %v2322 = vunpack.c.h.b16 %v2042
        %v2323 = vunpack.c.l.b16 %v2043
        %v2324 = vunpack.c.h.b16 %v2043
        %v2325 = vunpack.c.l.b16 %v2044
        %v2326 = vunpack.c.h.b16 %v2044
        %v2327 = vunpack.c.l.b16 %v2045
        %v2328 = vunpack.c.h.b16 %v2045
        %v2329 = vunpack.c.l.b16 %v2046
        %v2330 = vunpack.c.h.b16 %v2046
        %v2331 = vunpack.c.l.b16 %v2047
        %v2332 = vunpack.c.h.b16 %v2047
        %v2333 = vunpack.c.l.b16 %v2048
        %v2334 = vunpack.c.h.b16 %v2048
        %v2335 = vunpack.c.l.b16 %v2049
        %v2336 = vunpack.c.h.b16 %v2049
        %v2337 = vunpack.c.l.b16 %v2050
        %v2338 = vunpack.c.h.b16 %v2050
        %v2339 = vunpack.c.l.b16 %v2051
        %v2340 = vunpack.c.h.b16 %v2051
        %v2341 = vunpack.c.l.b16 %v2052
        %v2342 = vunpack.c.h.b16 %v2052
        %v2343 = vunpack.c.l.b16 %v2053
        %v2344 = vunpack.c.h.b16 %v2053
        %v2345 = vunpack.c.l.b16 %v2054
        %v2346 = vunpack.c.h.b16 %v2054
        %v2347 = vunpack.c.l.b16 %v2055
        %v2348 = vunpack.c.h.b16 %v2055
        %v2349 = vunpack.c.l.b16 %v2056
        %v2350 = vunpack.c.h.b16 %v2056
        %v2351 = vunpack.c.l.b16 %v2057
        %v2352 = vunpack.c.h.b16 %v2057
        %v2353 = vunpack.c.l.b16 %v2058
        %v2354 = vunpack.c.h.b16 %v2058
        %v2355 = vunpack.c.l.b16 %v2059
        %v2356 = vunpack.c.h.b16 %v2059
        %v2357 = vunpack.c.l.b16 %v2060
        %v2358 = vunpack.c.h.b16 %v2060
        %v2359 = vunpack.c.l.b16 %v2061
        %v2360 = vunpack.c.h.b16 %v2061
        %v2361 = vunpack.c.l.b16 %v2062
        %v2362 = vunpack.c.h.b16 %v2062
        %v2363 = vunpack.c.l.b16 %v2063
        %v2364 = vunpack.c.h.b16 %v2063
        %v2365 = vunpack.c.l.b16 %v2064
        %v2366 = vunpack.c.h.b16 %v2064
        %v2367 = vunpack.c.l.b16 %v2065
        %v2368 = vunpack.c.h.b16 %v2065
        %v2369 = vunpack.c.l.b16 %v2066
        %v2370 = vunpack.c.h.b16 %v2066
        %v2371 = vunpack.c.l.b16 %v2067
        %v2372 = vunpack.c.h.b16 %v2067
        %v2373 = vunpack.c.l.b16 %v2068
        %v2374 = vunpack.c.h.b16 %v2068
        %v2375 = vunpack.c.l.b16 %v2069
        %v2376 = vunpack.c.h.b16 %v2069
        %v2377 = vunpack.c.l.b16 %v2070
        %v2378 = vunpack.c.h.b16 %v2070
        %v2379 = vunpack.c.l.b16 %v2071
        %v2380 = vunpack.c.h.b16 %v2071
        %v2381 = vunpack.c.l.b16 %v2072
        %v2382 = vunpack.c.h.b16 %v2072
        %v2383 = vunpack.c.l.b16 %v2073
        %v2384 = vunpack.c.h.b16 %v2073
        %v2385 = vunpack.c.l.b16 %v2074
        %v2386 = vunpack.c.h.b16 %v2074
        %v2387 = vunpack.c.l.b16 %v2075
        %v2388 = vunpack.c.h.b16 %v2075
        %v2389 = vunpack.c.l.b16 %v2076
        %v2390 = vunpack.c.h.b16 %v2076
        %v2391 = vunpack.c.l.b16 %v2077
        %v2392 = vunpack.c.h.b16 %v2077
        %v2393 = vunpack.c.l.b16 %v2078
        %v2394 = vunpack.c.h.b16 %v2078
        %v2395 = vunpack.c.l.b16 %v2079
        %v2396 = vunpack.c.h.b16 %v2079
        %v2397 = vunpack.c.l.b16 %v2080
        %v2398 = vunpack.c.h.b16 %v2080
        %v2399 = vunpack.c.l.b16 %v2081
        %v2400 = vunpack.c.h.b16 %v2081
        %v2401 = vunpack.c.l.b16 %v2082
        %v2402 = vunpack.c.h.b16 %v2082
        %v2403 = vunpack.c.l.b16 %v2083
        %v2404 = vunpack.c.h.b16 %v2083
        %v2405 = vunpack.c.l.b16 %v2084
        %v2406 = vunpack.c.h.b16 %v2084
        %v2407 = vunpack.c.l.b16 %v2085
        %v2408 = vunpack.c.h.b16 %v2085
        %v2409 = vunpack.c.l.b16 %v2086
        %v2410 = vunpack.c.h.b16 %v2086
        %v2411 = vunpack.c.l.b16 %v2087
        %v2412 = vunpack.c.h.b16 %v2087
        %v2413 = vunpack.c.l.b16 %v2088
        %v2414 = vunpack.c.h.b16 %v2088
        %v2415 = vunpack.c.l.b16 %v2089
        %v2416 = vunpack.c.h.b16 %v2089
        %v2417 = vunpack.c.l.b16 %v2090
        %v2418 = vunpack.c.h.b16 %v2090
        %v2419 = vunpack.c.l.b16 %v2091
        %v2420 = vunpack.c.h.b16 %v2091
        %v2421 = vunpack.c.l.b16 %v2092
        %v2422 = vunpack.c.h.b16 %v2092
        %v2423 = vunpack.c.l.b16 %v2093
        %v2424 = vunpack.c.h.b16 %v2093
        %v2425 = vunpack.c.l.b16 %v2094
        %v2426 = vunpack.c.h.b16 %v2094
        %v2427 = vunpack.c.l.b16 %v2095
        %v2428 = vunpack.c.h.b16 %v2095
        %v2429 = vunpack.c.l.b16 %v2096
        %v2430 = vunpack.c.h.b16 %v2096
        %v2431 = vunpack.c.l.b16 %v2097
        %v2432 = vunpack.c.h.b16 %v2097
        %v2433 = vunpack.c.l.b16 %v2098
        %v2434 = vunpack.c.h.b16 %v2098
        %v2435 = vunpack.c.l.b16 %v2099
        %v2436 = vunpack.c.h.b16 %v2099
        %v2437 = vunpack.c.l.b16 %v2100
        %v2438 = vunpack.c.h.b16 %v2100
        %v2439 = vunpack.c.l.b16 %v2101
        %v2440 = vunpack.c.h.b16 %v2101
        %v2441 = vunpack.c.l.b16 %v2102
        %v2442 = vunpack.c.h.b16 %v2102
        %v2443 = vunpack.c.l.b16 %v2103
        %v2444 = vunpack.c.h.b16 %v2103
        %v2445 = vunpack.c.l.b16 %v2104
        %v2446 = vunpack.c.h.b16 %v2104
        %v2447 = vunpack.c.l.b16 %v2105
        %v2448 = vunpack.c.h.b16 %v2105
        %v2449 = vunpack.c.l.b16 %v2106
        %v2450 = vunpack.c.h.b16 %v2106
        %v2451 = vunpack.c.l.b16 %v2107
        %v2452 = vunpack.c.h.b16 %v2107
        %v2453 = vunpack.c.l.b16 %v2108
        %v2454 = vunpack.c.h.b16 %v2108
        %v2455 = vunpack.c.l.b16 %v2109
        %v2456 = vunpack.c.h.b16 %v2109
        %v2457 = vunpack.c.l.b16 %v2110
        %v2458 = vunpack.c.h.b16 %v2110
        %v2459 = vunpack.c.l.b16 %v2111
        %v2460 = vunpack.c.h.b16 %v2111
        %v2461 = vunpack.c.l.b16 %v2112
        %v2462 = vunpack.c.h.b16 %v2112
        %v2463 = vunpack.c.l.b16 %v2113
        %v2464 = vunpack.c.h.b16 %v2113
        %v2465 = vunpack.c.l.b16 %v2114
        %v2466 = vunpack.c.h.b16 %v2114
        %v2467 = vunpack.c.l.b16 %v2115
        %v2468 = vunpack.c.h.b16 %v2115
        %v2469 = vunpack.c.l.b16 %v2116
        %v2470 = vunpack.c.h.b16 %v2116
        %v2471 = vunpack.c.l.b16 %v2117
        %v2472 = vunpack.c.h.b16 %v2117
        %v2473 = vunpack.c.l.b16 %v2118
        %v2474 = vunpack.c.h.b16 %v2118
        %v2475 = vunpack.c.l.b16 %v2119
        %v2476 = vunpack.c.h.b16 %v2119
        %v2477 = vunpack.c.l.b16 %v2120
        %v2478 = vunpack.c.h.b16 %v2120
        %v2479 = vunpack.c.l.b16 %v2121
        %v2480 = vunpack.c.h.b16 %v2121
        %v2481 = vunpack.c.l.b16 %v2122
        %v2482 = vunpack.c.h.b16 %v2122
        %v2483 = vunpack.c.l.b16 %v2123
        %v2484 = vunpack.c.h.b16 %v2123
        %v2485 = vunpack.c.l.b16 %v2124
        %v2486 = vunpack.c.h.b16 %v2124
        %v2487 = vunpack.c.l.b16 %v2125
        %v2488 = vunpack.c.h.b16 %v2125
        %v2489 = vunpack.c.l.b16 %v2126
        %v2490 = vunpack.c.h.b16 %v2126
        %v2491 = vunpack.c.l.b16 %v2127
        %v2492 = vunpack.c.h.b16 %v2127
        %v2493 = vunpack.c.l.b16 %v2128
        %v2494 = vunpack.c.h.b16 %v2128
        %v2495 = vunpack.c.l.b16 %v2129
        %v2496 = vunpack.c.h.b16 %v2129
        %v2497 = vunpack.c.l.b16 %v2130
        %v2498 = vunpack.c.h.b16 %v2130
        %v2499 = vunpack.c.l.b16 %v2131
        %v2500 = vunpack.c.h.b16 %v2131
        %v2501 = vunpack.c.l.b16 %v2132
        %v2502 = vunpack.c.h.b16 %v2132
        %v2503 = vunpack.c.l.b16 %v2133
        %v2504 = vunpack.c.h.b16 %v2133
        %v2505 = vunpack.c.l.b16 %v2134
        %v2506 = vunpack.c.h.b16 %v2134
        %v2507 = vunpack.c.l.b16 %v2135
        %v2508 = vunpack.c.h.b16 %v2135
        %v2509 = vunpack.c.l.b16 %v2136
        %v2510 = vunpack.c.h.b16 %v2136
        %v2511 = vunpack.c.l.b16 %v2137
        %v2512 = vunpack.c.h.b16 %v2137
        %v2513 = vunpack.c.l.b16 %v2138
        %v2514 = vunpack.c.h.b16 %v2138
        %v2515 = vunpack.c.l.b16 %v2139
        %v2516 = vunpack.c.h.b16 %v2139
        %v2517 = vunpack.c.l.b16 %v2140
        %v2518 = vunpack.c.h.b16 %v2140
        %v2519 = vunpack.c.l.b16 %v2141
        %v2520 = vunpack.c.h.b16 %v2141
        %v2521 = vunpack.c.l.b16 %v2142
        %v2522 = vunpack.c.h.b16 %v2142
        %v2523 = vunpack.c.l.b16 %v2143
        %v2524 = vunpack.c.h.b16 %v2143
        %v2525 = vunpack.c.l.b16 %v2144
        %v2526 = vunpack.c.h.b16 %v2144
        %v2527 = vunpack.c.l.b16 %v2145
        %v2528 = vunpack.c.h.b16 %v2145
        %v2529 = vunpack.c.l.b16 %v2146
        %v2530 = vunpack.c.h.b16 %v2146
        %v2531 = vunpack.c.l.b16 %v2147
        %v2532 = vunpack.c.h.b16 %v2147
        %v2533 = vunpack.c.l.b16 %v2148
        %v2534 = vunpack.c.h.b16 %v2148
        %v2535 = vunpack.c.l.b16 %v2149
        %v2536 = vunpack.c.h.b16 %v2149
        %v2537 = vunpack.c.l.b16 %v2150
        %v2538 = vunpack.c.h.b16 %v2150
        %v2539 = vunpack.c.l.b16 %v2151
        %v2540 = vunpack.c.h.b16 %v2151
        %v2541 = vunpack.c.l.b16 %v2152
        %v2542 = vunpack.c.h.b16 %v2152
        %v2543 = vunpack.c.l.b16 %v2153
        %v2544 = vunpack.c.h.b16 %v2153
        %v2545 = vunpack.c.l.b16 %v2154
        %v2546 = vunpack.c.h.b16 %v2154
        %v2547 = vunpack.c.l.b16 %v2155
        %v2548 = vunpack.c.h.b16 %v2155
        %v2549 = vunpack.c.l.b16 %v2156
        %v2550 = vunpack.c.h.b16 %v2156
        %v2551 = vunpack.c.l.b16 %v2157
        %v2552 = vunpack.c.h.b16 %v2157
        %v2553 = vunpack.c.l.b16 %v2158
        %v2554 = vunpack.c.h.b16 %v2158
        %v2555 = vunpack.c.l.b16 %v2159
        %v2556 = vunpack.c.h.b16 %v2159
        %v2557 = vunpack.c.l.b16 %v2160
        %v2558 = vunpack.c.h.b16 %v2160
        %v2559 = vunpack.c.l.b16 %v2161
        %v2560 = vunpack.c.h.b16 %v2161
        %v2561 = vunpack.c.l.b16 %v2162
        %v2562 = vunpack.c.h.b16 %v2162
        %v2563 = vunpack.c.l.b16 %v2163
        %v2564 = vunpack.c.h.b16 %v2163
        %v2565 = vunpack.c.l.b16 %v2164
        %v2566 = vunpack.c.h.b16 %v2164
        %v2567 = vunpack.c.l.b16 %v2165
        %v2568 = vunpack.c.h.b16 %v2165
        %v2569 = vunpack.c.l.b16 %v2166
        %v2570 = vunpack.c.h.b16 %v2166
        %v2571 = vunpack.c.l.b16 %v2167
        %v2572 = vunpack.c.h.b16 %v2167
        %v2573 = vunpack.c.l.b16 %v2168
        %v2574 = vunpack.c.h.b16 %v2168
        %v2575 = vpack.c.b16 %v2323, %v2319
        %v2576 = vpack.c.b16 %v2324, %v2320
        %v2577 = vpack.c.b16 %v2325, %v2321
        %v2578 = vpack.c.b16 %v2326, %v2322
        %v2579 = vpack.c.b16 %v2331, %v2327
        %v2580 = vpack.c.b16 %v2332, %v2328
        %v2581 = vpack.c.b16 %v2333, %v2329
        %v2582 = vpack.c.b16 %v2334, %v2330
        %v2583 = vpack.c.b16 %v2339, %v2335
        %v2584 = vpack.c.b16 %v2340, %v2336
        %v2585 = vpack.c.b16 %v2341, %v2337
        %v2586 = vpack.c.b16 %v2342, %v2338
        %v2587 = vpack.c.b16 %v2347, %v2343
        %v2588 = vpack.c.b16 %v2348, %v2344
        %v2589 = vpack.c.b16 %v2349, %v2345
        %v2590 = vpack.c.b16 %v2350, %v2346
        %v2591 = vpack.c.b16 %v2355, %v2351
        %v2592 = vpack.c.b16 %v2356, %v2352
        %v2593 = vpack.c.b16 %v2357, %v2353
        %v2594 = vpack.c.b16 %v2358, %v2354
        %v2595 = vpack.c.b16 %v2363, %v2359
        %v2596 = vpack.c.b16 %v2364, %v2360
        %v2597 = vpack.c.b16 %v2365, %v2361
        %v2598 = vpack.c.b16 %v2366, %v2362
        %v2599 = vpack.c.b16 %v2371, %v2367
        %v2600 = vpack.c.b16 %v2372, %v2368
        %v2601 = vpack.c.b16 %v2373, %v2369
        %v2602 = vpack.c.b16 %v2374, %v2370
        %v2603 = vpack.c.b16 %v2379, %v2375
        %v2604 = vpack.c.b16 %v2380, %v2376
        %v2605 = vpack.c.b16 %v2381, %v2377
        %v2606 = vpack.c.b16 %v2382, %v2378
        %v2607 = vpack.c.b16 %v2387, %v2383
        %v2608 = vpack.c.b16 %v2388, %v2384
        %v2609 = vpack.c.b16 %v2389, %v2385
        %v2610 = vpack.c.b16 %v2390, %v2386
        %v2611 = vpack.c.b16 %v2395, %v2391
        %v2612 = vpack.c.b16 %v2396, %v2392
        %v2613 = vpack.c.b16 %v2397, %v2393
        %v2614 = vpack.c.b16 %v2398, %v2394
        %v2615 = vpack.c.b16 %v2403, %v2399
        %v2616 = vpack.c.b16 %v2404, %v2400
        %v2617 = vpack.c.b16 %v2405, %v2401
        %v2618 = vpack.c.b16 %v2406, %v2402
        %v2619 = vpack.c.b16 %v2411, %v2407
        %v2620 = vpack.c.b16 %v2412, %v2408
        %v2621 = vpack.c.b16 %v2413, %v2409
        %v2622 = vpack.c.b16 %v2414, %v2410
        %v2623 = vpack.c.b16 %v2419, %v2415
        %v2624 = vpack.c.b16 %v2420, %v2416
        %v2625 = vpack.c.b16 %v2421, %v2417
        %v2626 = vpack.c.b16 %v2422, %v2418
        %v2627 = vpack.c.b16 %v2427, %v2423
        %v2628 = vpack.c.b16 %v2428, %v2424
        %v2629 = vpack.c.b16 %v2429, %v2425
        %v2630 = vpack.c.b16 %v2430, %v2426
        %v2631 = vpack.c.b16 %v2435, %v2431
        %v2632 = vpack.c.b16 %v2436, %v2432
        %v2633 = vpack.c.b16 %v2437, %v2433
        %v2634 = vpack.c.b16 %v2438, %v2434
        %v2635 = vpack.c.b16 %v2443, %v2439
        %v2636 = vpack.c.b16 %v2444, %v2440
        %v2637 = vpack.c.b16 %v2445, %v2441
        %v2638 = vpack.c.b16 %v2446, %v2442
        %v2639 = vpack.c.b16 %v2451, %v2447
        %v2640 = vpack.c.b16 %v2452, %v2448
        %v2641 = vpack.c.b16 %v2453, %v2449
        %v2642 = vpack.c.b16 %v2454, %v2450
        %v2643 = vpack.c.b16 %v2459, %v2455
        %v2644 = vpack.c.b16 %v2460, %v2456
        %v2645 = vpack.c.b16 %v2461, %v2457
        %v2646 = vpack.c.b16 %v2462, %v2458
        %v2647 = vpack.c.b16 %v2467, %v2463
        %v2648 = vpack.c.b16 %v2468, %v2464
        %v2649 = vpack.c.b16 %v2469, %v2465
        %v2650 = vpack.c.b16 %v2470, %v2466
        %v2651 = vpack.c.b16 %v2475, %v2471
        %v2652 = vpack.c.b16 %v2476, %v2472
        %v2653 = vpack.c.b16 %v2477, %v2473
        %v2654 = vpack.c.b16 %v2478, %v2474
        %v2655 = vpack.c.b16 %v2483, %v2479
        %v2656 = vpack.c.b16 %v2484, %v2480
        %v2657 = vpack.c.b16 %v2485, %v2481
        %v2658 = vpack.c.b16 %v2486, %v2482
        %v2659 = vpack.c.b16 %v2491, %v2487
        %v2660 = vpack.c.b16 %v2492, %v2488
        %v2661 = vpack.c.b16 %v2493, %v2489
        %v2662 = vpack.c.b16 %v2494, %v2490
        %v2663 = vpack.c.b16 %v2499, %v2495
        %v2664 = vpack.c.b16 %v2500, %v2496
        %v2665 = vpack.c.b16 %v2501, %v2497
        %v2666 = vpack.c.b16 %v2502, %v2498
        %v2667 = vpack.c.b16 %v2507, %v2503
        %v2668 = vpack.c.b16 %v2508, %v2504
        %v2669 = vpack.c.b16 %v2509, %v2505
        %v2670 = vpack.c.b16 %v2510, %v2506
        %v2671 = vpack.c.b16 %v2515, %v2511
        %v2672 = vpack.c.b16 %v2516, %v2512
        %v2673 = vpack.c.b16 %v2517, %v2513
        %v2674 = vpack.c.b16 %v2518, %v2514
        %v2675 = vpack.c.b16 %v2523, %v2519
        %v2676 = vpack.c.b16 %v2524, %v2520
        %v2677 = vpack.c.b16 %v2525, %v2521
        %v2678 = vpack.c.b16 %v2526, %v2522
        %v2679 = vpack.c.b16 %v2531, %v2527
        %v2680 = vpack.c.b16 %v2532, %v2528
        %v2681 = vpack.c.b16 %v2533, %v2529
        %v2682 = vpack.c.b16 %v2534, %v2530
        %v2683 = vpack.c.b16 %v2539, %v2535
        %v2684 = vpack.c.b16 %v2540, %v2536
        %v2685 = vpack.c.b16 %v2541, %v2537
        %v2686 = vpack.c.b16 %v2542, %v2538
        %v2687 = vpack.c.b16 %v2547, %v2543
        %v2688 = vpack.c.b16 %v2548, %v2544
        %v2689 = vpack.c.b16 %v2549, %v2545
        %v2690 = vpack.c.b16 %v2550, %v2546
        %v2691 = vpack.c.b16 %v2555, %v2551
        %v2692 = vpack.c.b16 %v2556, %v2552
        %v2693 = vpack.c.b16 %v2557, %v2553
        %v2694 = vpack.c.b16 %v2558, %v2554
        %v2695 = vpack.c.b16 %v2563, %v2559
        %v2696 = vpack.c.b16 %v2564, %v2560
        %v2697 = vpack.c.b16 %v2565, %v2561
        %v2698 = vpack.c.b16 %v2566, %v2562
        %v2699 = vpack.c.b16 %v2571, %v2567
        %v2700 = vpack.c.b16 %v2572, %v2568
        %v2701 = vpack.c.b16 %v2573, %v2569
        %v2702 = vpack.c.b16 %v2574, %v2570
        %2831 = vmatprep.subr.bf16.mxu0 %v2604
        %2832 = vmatpush1.bf16.msra.mxu0 %v2603
        %2833 = vmatprep.subr.bf16.mxu0 %v2600
        %2834 = vmatpush1.bf16.msra.mxu0 %v2599
        %2835 = vmatprep.subr.bf16.mxu0 %v2596
        %2836 = vmatpush1.bf16.msra.mxu0 %v2595
        %2837 = vmatprep.subr.bf16.mxu0 %v2592
        %2838 = vmatpush1.bf16.msra.mxu0 %v2591
        %2839 = vmatprep.subr.bf16.mxu0 %v2588
        %2840 = vmatpush1.bf16.msra.mxu0 %v2587
        %2841 = vmatprep.subr.bf16.mxu0 %v2584
        %2842 = vmatpush1.bf16.msra.mxu0 %v2583
        %2843 = vmatprep.subr.bf16.mxu0 %v2580
        %2844 = vmatpush1.bf16.msra.mxu0 %v2579
        %2845 = vmatprep.subr.bf16.mxu0 %v2576
        %2846 = vmatpush1.bf16.msra.mxu0 %v2575
        %2847 = vmatprep.subr.bf16.mxu0 %v2636
        %2848 = vmatpush2.bf16.msra.mxu0 %v2635
        %2849 = vmatprep.subr.bf16.mxu0 %v2632
        %2850 = vmatpush2.bf16.msra.mxu0 %v2631
        %2851 = vmatprep.subr.bf16.mxu0 %v2628
        %2852 = vmatpush2.bf16.msra.mxu0 %v2627
        %2853 = vmatprep.subr.bf16.mxu0 %v2624
        %2854 = vmatpush2.bf16.msra.mxu0 %v2623
        %2855 = vmatprep.subr.bf16.mxu0 %v2620
        %2856 = vmatpush2.bf16.msra.mxu0 %v2619
        %2857 = vmatprep.subr.bf16.mxu0 %v2616
        %2858 = vmatpush2.bf16.msra.mxu0 %v2615
        %2859 = vmatprep.subr.bf16.mxu0 %v2612
        %2860 = vmatpush2.bf16.msra.mxu0 %v2611
        %2861 = vmatprep.subr.bf16.mxu0 %v2608
        %2862 = vmatpush2.bf16.msra.mxu0 %v2607
        %2863 = vmatprep.mubr.bf16.mxu0 %v2038
        %2864 = vmatmul.mubr.bf16.gmra.mxu0 %v2037
        %v2865 = vpop.f32.mrf.mxu0
        %v2866 = vadd.f32 %v2174, %v2865
        %v2867 = vpop.f32.mrf.mxu0
        %v2868 = vadd.f32 %v2178, %v2867
        %v2869 = vpop.f32.mrf.mxu0
        %v2870 = vadd.f32 %v2174, %v2869
        %v2871 = vpop.f32.mrf.mxu0
        %v2872 = vadd.f32 %v2178, %v2871
        %2873 = vdwg.mxu0
        %2874 = vmatprep.subr.bf16.mxu0 %v2668
        %2875 = vmatpush1.bf16.msra.mxu0 %v2667
        %2876 = vmatprep.subr.bf16.mxu0 %v2664
        %2877 = vmatpush1.bf16.msra.mxu0 %v2663
        %2878 = vmatprep.subr.bf16.mxu0 %v2660
        %2879 = vmatpush1.bf16.msra.mxu0 %v2659
        %2880 = vmatprep.subr.bf16.mxu0 %v2656
        %2881 = vmatpush1.bf16.msra.mxu0 %v2655
        %2882 = vmatprep.subr.bf16.mxu0 %v2652
        %2883 = vmatpush1.bf16.msra.mxu0 %v2651
        %2884 = vmatprep.subr.bf16.mxu0 %v2648
        %2885 = vmatpush1.bf16.msra.mxu0 %v2647
        %2886 = vmatprep.subr.bf16.mxu0 %v2644
        %2887 = vmatpush1.bf16.msra.mxu0 %v2643
        %2888 = vmatprep.subr.bf16.mxu0 %v2640
        %2889 = vmatpush1.bf16.msra.mxu0 %v2639
        %2890 = vmatprep.subr.bf16.mxu0 %v2700
        %2891 = vmatpush2.bf16.msra.mxu0 %v2699
        %2892 = vmatprep.subr.bf16.mxu0 %v2696
        %2893 = vmatpush2.bf16.msra.mxu0 %v2695
        %2894 = vmatprep.subr.bf16.mxu0 %v2692
        %2895 = vmatpush2.bf16.msra.mxu0 %v2691
        %2896 = vmatprep.subr.bf16.mxu0 %v2688
        %2897 = vmatpush2.bf16.msra.mxu0 %v2687
        %2898 = vmatprep.subr.bf16.mxu0 %v2684
        %2899 = vmatpush2.bf16.msra.mxu0 %v2683
        %2900 = vmatprep.subr.bf16.mxu0 %v2680
        %2901 = vmatpush2.bf16.msra.mxu0 %v2679
        %2902 = vmatprep.subr.bf16.mxu0 %v2676
        %2903 = vmatpush2.bf16.msra.mxu0 %v2675
        %2904 = vmatprep.subr.bf16.mxu0 %v2672
        %2905 = vmatpush2.bf16.msra.mxu0 %v2671
        %2906 = vmatprep.mubr.bf16.mxu0 %v2040
        %2907 = vmatmul.mubr.bf16.gmra.mxu0 %v2039
        %v2908 = vpop.f32.mrf.mxu0
        %v2909 = vadd.f32 %v2866, %v2908
        %v2910 = vpop.f32.mrf.mxu0
        %v2911 = vadd.f32 %v2868, %v2910
        %v2912 = vpop.f32.mrf.mxu0
        %v2913 = vadd.f32 %v2870, %v2912
        %v2914 = vpop.f32.mrf.mxu0
        %v2915 = vadd.f32 %v2872, %v2914
        %2916 = vdwg.mxu0
        %2917 = vmatprep.subr.bf16.mxu0 %v2606
        %2918 = vmatpush1.bf16.msra.mxu0 %v2605
        %2919 = vmatprep.subr.bf16.mxu0 %v2602
        %2920 = vmatpush1.bf16.msra.mxu0 %v2601
        %2921 = vmatprep.subr.bf16.mxu0 %v2598
        %2922 = vmatpush1.bf16.msra.mxu0 %v2597
        %2923 = vmatprep.subr.bf16.mxu0 %v2594
        %2924 = vmatpush1.bf16.msra.mxu0 %v2593
        %2925 = vmatprep.subr.bf16.mxu0 %v2590
        %2926 = vmatpush1.bf16.msra.mxu0 %v2589
        %2927 = vmatprep.subr.bf16.mxu0 %v2586
        %2928 = vmatpush1.bf16.msra.mxu0 %v2585
        %2929 = vmatprep.subr.bf16.mxu0 %v2582
        %2930 = vmatpush1.bf16.msra.mxu0 %v2581
        %2931 = vmatprep.subr.bf16.mxu0 %v2578
        %2932 = vmatpush1.bf16.msra.mxu0 %v2577
        %2933 = vmatprep.subr.bf16.mxu0 %v2638
        %2934 = vmatpush2.bf16.msra.mxu0 %v2637
        %2935 = vmatprep.subr.bf16.mxu0 %v2634
        %2936 = vmatpush2.bf16.msra.mxu0 %v2633
        %2937 = vmatprep.subr.bf16.mxu0 %v2630
        %2938 = vmatpush2.bf16.msra.mxu0 %v2629
        %2939 = vmatprep.subr.bf16.mxu0 %v2626
        %2940 = vmatpush2.bf16.msra.mxu0 %v2625
        %2941 = vmatprep.subr.bf16.mxu0 %v2622
        %2942 = vmatpush2.bf16.msra.mxu0 %v2621
        %2943 = vmatprep.subr.bf16.mxu0 %v2618
        %2944 = vmatpush2.bf16.msra.mxu0 %v2617
        %2945 = vmatprep.subr.bf16.mxu0 %v2614
        %2946 = vmatpush2.bf16.msra.mxu0 %v2613
        %2947 = vmatprep.subr.bf16.mxu0 %v2610
        %2948 = vmatpush2.bf16.msra.mxu0 %v2609
        %2949 = vmatprep.mubr.bf16.mxu0 %v2038
        %2950 = vmatmul.mubr.bf16.gmra.mxu0 %v2037
        %v2951 = vpop.f32.mrf.mxu0
        %v2952 = vadd.f32 %v2182, %v2951
        %v2953 = vpop.f32.mrf.mxu0
        %v2954 = vadd.f32 %v2186, %v2953
        %v2955 = vpop.f32.mrf.mxu0
        %v2956 = vadd.f32 %v2182, %v2955
        %v2957 = vpop.f32.mrf.mxu0
        %v2958 = vadd.f32 %v2186, %v2957
        %2959 = vdwg.mxu0
        %2960 = vmatprep.subr.bf16.mxu0 %v2670
        %2961 = vmatpush1.bf16.msra.mxu0 %v2669
        %2962 = vmatprep.subr.bf16.mxu0 %v2666
        %2963 = vmatpush1.bf16.msra.mxu0 %v2665
        %2964 = vmatprep.subr.bf16.mxu0 %v2662
        %2965 = vmatpush1.bf16.msra.mxu0 %v2661
        %2966 = vmatprep.subr.bf16.mxu0 %v2658
        %2967 = vmatpush1.bf16.msra.mxu0 %v2657
        %2968 = vmatprep.subr.bf16.mxu0 %v2654
        %2969 = vmatpush1.bf16.msra.mxu0 %v2653
        %2970 = vmatprep.subr.bf16.mxu0 %v2650
        %2971 = vmatpush1.bf16.msra.mxu0 %v2649
        %2972 = vmatprep.subr.bf16.mxu0 %v2646
        %2973 = vmatpush1.bf16.msra.mxu0 %v2645
        %2974 = vmatprep.subr.bf16.mxu0 %v2642
        %2975 = vmatpush1.bf16.msra.mxu0 %v2641
        %2976 = vmatprep.subr.bf16.mxu0 %v2702
        %2977 = vmatpush2.bf16.msra.mxu0 %v2701
        %2978 = vmatprep.subr.bf16.mxu0 %v2698
        %2979 = vmatpush2.bf16.msra.mxu0 %v2697
        %2980 = vmatprep.subr.bf16.mxu0 %v2694
        %2981 = vmatpush2.bf16.msra.mxu0 %v2693
        %2982 = vmatprep.subr.bf16.mxu0 %v2690
        %2983 = vmatpush2.bf16.msra.mxu0 %v2689
        %2984 = vmatprep.subr.bf16.mxu0 %v2686
        %2985 = vmatpush2.bf16.msra.mxu0 %v2685
        %2986 = vmatprep.subr.bf16.mxu0 %v2682
        %2987 = vmatpush2.bf16.msra.mxu0 %v2681
        %2988 = vmatprep.subr.bf16.mxu0 %v2678
        %2989 = vmatpush2.bf16.msra.mxu0 %v2677
        %2990 = vmatprep.subr.bf16.mxu0 %v2674
        %2991 = vmatpush2.bf16.msra.mxu0 %v2673
        %2992 = vmatprep.mubr.bf16.mxu0 %v2040
        %2993 = vmatmul.mubr.bf16.gmra.mxu0 %v2039
        %v2994 = vpop.f32.mrf.mxu0
        %v2995 = vadd.f32 %v2952, %v2994
        %v2996 = vpop.f32.mrf.mxu0
        %v2997 = vadd.f32 %v2954, %v2996
        %v2998 = vpop.f32.mrf.mxu0
        %v2999 = vadd.f32 %v2956, %v2998
        %v3000 = vpop.f32.mrf.mxu0
        %v3001 = vadd.f32 %v2958, %v3000
        %3002 = vdwg.mxu0
        %v3003 = vmax.f32 %v2909, 0.0
        %v3004 = vmax.f32 %v2911, 0.0
        %v3005 = vmax.f32 %v2995, 0.0
        %v3006 = vmax.f32 %v2997, 0.0
        %v3007 = vmax.f32 %v2913, 0.0
        %v3008 = vmax.f32 %v2915, 0.0
        %v3009 = vmax.f32 %v2999, 0.0
        %v3010 = vmax.f32 %v3001, 0.0
        %v3011 = vpack.c.bf16 %v3007, %v3003
        %v3012 = vpack.c.bf16 %v3008, %v3004
        %v3013 = vpack.c.bf16 %v3009, %v3005
        %v3014 = vpack.c.bf16 %v3010, %v3006
        %v3015 = vld [vmem:[#allocation16] sm:$0xff]
        %v3016 = vld [vmem:[#allocation16 + $0x8] sm:$0xf]
        %v3017 = vld [vmem:[#allocation16 + $0xc] sm:$0xff]
        %v3018 = vld [vmem:[#allocation16 + $0x14] sm:$0xf]
        %v3019 = vld [vmem:[#allocation16 + $0x18] sm:$0xff]
        %v3020 = vld [vmem:[#allocation16 + $0x20] sm:$0xf]
        %v3021 = vld [vmem:[#allocation16 + $0x24] sm:$0xff]
        %v3022 = vld [vmem:[#allocation16 + $0x2c] sm:$0xf]
        %v3023 = vld [vmem:[#allocation16 + $0x30] sm:$0xff]
        %v3024 = vld [vmem:[#allocation16 + $0x38] sm:$0xf]
        %v3025 = vld [vmem:[#allocation16 + $0x3c] sm:$0xff]
        %v3026 = vld [vmem:[#allocation16 + $0x44] sm:$0xf]
        %v3027 = vld [vmem:[#allocation16 + $0x48] sm:$0xff]
        %v3028 = vld [vmem:[#allocation16 + $0x50] sm:$0xf]
        %v3029 = vld [vmem:[#allocation16 + $0x54] sm:$0xff]
        %v3030 = vld [vmem:[#allocation16 + $0x5c] sm:$0xf]
        %v3031 = vld [vmem:[#allocation16 + $0x60] sm:$0xff]
        %v3032 = vld [vmem:[#allocation16 + $0x68] sm:$0xf]
        %v3033 = vld [vmem:[#allocation16 + $0x6c] sm:$0xff]
        %v3034 = vld [vmem:[#allocation16 + $0x74] sm:$0xf]
        %v3035 = vld [vmem:[#allocation16 + $0x78] sm:$0xff]
        %v3036 = vld [vmem:[#allocation16 + $0x80] sm:$0xf]
        %v3037 = vld [vmem:[#allocation16 + $0x84] sm:$0xff]
        %v3038 = vld [vmem:[#allocation16 + $0x8c] sm:$0xf]
        %v3039 = vld [vmem:[#allocation16 + $0x90] sm:$0xff]
        %v3040 = vld [vmem:[#allocation16 + $0x98] sm:$0xf]
        %v3041 = vld [vmem:[#allocation16 + $0x9c] sm:$0xff]
        %v3042 = vld [vmem:[#allocation16 + $0xa4] sm:$0xf]
        %v3043 = vld [vmem:[#allocation16 + $0xa8] sm:$0xff]
        %v3044 = vld [vmem:[#allocation16 + $0xb0] sm:$0xf]
        %v3045 = vld [vmem:[#allocation16 + $0xb4] sm:$0xff]
        %v3046 = vld [vmem:[#allocation16 + $0xbc] sm:$0xf]
        %v3047 = vld [vmem:[#allocation16 + $0xc0] sm:$0xff]
        %v3048 = vld [vmem:[#allocation16 + $0xc8] sm:$0xf]
        %v3049 = vld [vmem:[#allocation16 + $0xcc] sm:$0xff]
        %v3050 = vld [vmem:[#allocation16 + $0xd4] sm:$0xf]
        %v3051 = vld [vmem:[#allocation16 + $0xd8] sm:$0xff]
        %v3052 = vld [vmem:[#allocation16 + $0xe0] sm:$0xf]
        %v3053 = vld [vmem:[#allocation16 + $0xe4] sm:$0xff]
        %v3054 = vld [vmem:[#allocation16 + $0xec] sm:$0xf]
        %v3055 = vld [vmem:[#allocation16 + $0xf0] sm:$0xff]
        %v3056 = vld [vmem:[#allocation16 + $0xf8] sm:$0xf]
        %v3057 = vld [vmem:[#allocation16 + $0xfc] sm:$0xff]
        %v3058 = vld [vmem:[#allocation16 + $0x104] sm:$0xf]
        %v3059 = vld [vmem:[#allocation16 + $0x108] sm:$0xff]
        %v3060 = vld [vmem:[#allocation16 + $0x110] sm:$0xf]
        %v3061 = vld [vmem:[#allocation16 + $0x114] sm:$0xff]
        %v3062 = vld [vmem:[#allocation16 + $0x11c] sm:$0xf]
        %v3063 = vld [vmem:[#allocation16 + $0x120] sm:$0xff]
        %v3064 = vld [vmem:[#allocation16 + $0x128] sm:$0xf]
        %v3065 = vld [vmem:[#allocation16 + $0x12c] sm:$0xff]
        %v3066 = vld [vmem:[#allocation16 + $0x134] sm:$0xf]
        %v3067 = vld [vmem:[#allocation16 + $0x138] sm:$0xff]
        %v3068 = vld [vmem:[#allocation16 + $0x140] sm:$0xf]
        %v3069 = vld [vmem:[#allocation16 + $0x144] sm:$0xff]
        %v3070 = vld [vmem:[#allocation16 + $0x14c] sm:$0xf]
        %v3071 = vld [vmem:[#allocation16 + $0x150] sm:$0xff]
        %v3072 = vld [vmem:[#allocation16 + $0x158] sm:$0xf]
        %v3073 = vld [vmem:[#allocation16 + $0x15c] sm:$0xff]
        %v3074 = vld [vmem:[#allocation16 + $0x164] sm:$0xf]
        %v3075 = vld [vmem:[#allocation16 + $0x168] sm:$0xff]
        %v3076 = vld [vmem:[#allocation16 + $0x170] sm:$0xf]
        %v3077 = vld [vmem:[#allocation16 + $0x174] sm:$0xff]
        %v3078 = vld [vmem:[#allocation16 + $0x17c] sm:$0xf]
        %v3079 = vld [vmem:[#allocation16 + $0x180] sm:$0xff]
        %v3080 = vld [vmem:[#allocation16 + $0x188] sm:$0xf]
        %v3081 = vld [vmem:[#allocation16 + $0x18c] sm:$0xff]
        %v3082 = vld [vmem:[#allocation16 + $0x194] sm:$0xf]
        %v3083 = vld [vmem:[#allocation16 + $0x198] sm:$0xff]
        %v3084 = vld [vmem:[#allocation16 + $0x1a0] sm:$0xf]
        %v3085 = vld [vmem:[#allocation16 + $0x1a4] sm:$0xff]
        %v3086 = vld [vmem:[#allocation16 + $0x1ac] sm:$0xf]
        %v3087 = vld [vmem:[#allocation16 + $0x1b0] sm:$0xff]
        %v3088 = vld [vmem:[#allocation16 + $0x1b8] sm:$0xf]
        %v3089 = vld [vmem:[#allocation16 + $0x1bc] sm:$0xff]
        %v3090 = vld [vmem:[#allocation16 + $0x1c4] sm:$0xf]
        %v3091 = vld [vmem:[#allocation16 + $0x1c8] sm:$0xff]
        %v3092 = vld [vmem:[#allocation16 + $0x1d0] sm:$0xf]
        %v3093 = vld [vmem:[#allocation16 + $0x1d4] sm:$0xff]
        %v3094 = vld [vmem:[#allocation16 + $0x1dc] sm:$0xf]
        %v3095 = vld [vmem:[#allocation16 + $0x1e0] sm:$0xff]
        %v3096 = vld [vmem:[#allocation16 + $0x1e8] sm:$0xf]
        %v3097 = vld [vmem:[#allocation16 + $0x1ec] sm:$0xff]
        %v3098 = vld [vmem:[#allocation16 + $0x1f4] sm:$0xf]
        %v3099 = vld [vmem:[#allocation16 + $0x1f8] sm:$0xff]
        %v3100 = vld [vmem:[#allocation16 + $0x200] sm:$0xf]
        %v3101 = vld [vmem:[#allocation16 + $0x204] sm:$0xff]
        %v3102 = vld [vmem:[#allocation16 + $0x20c] sm:$0xf]
        %v3103 = vld [vmem:[#allocation16 + $0x210] sm:$0xff]
        %v3104 = vld [vmem:[#allocation16 + $0x218] sm:$0xf]
        %v3105 = vld [vmem:[#allocation16 + $0x21c] sm:$0xff]
        %v3106 = vld [vmem:[#allocation16 + $0x224] sm:$0xf]
        %v3107 = vld [vmem:[#allocation16 + $0x228] sm:$0xff]
        %v3108 = vld [vmem:[#allocation16 + $0x230] sm:$0xf]
        %v3109 = vld [vmem:[#allocation16 + $0x234] sm:$0xff]
        %v3110 = vld [vmem:[#allocation16 + $0x23c] sm:$0xf]
        %v3111 = vld [vmem:[#allocation16 + $0x240] sm:$0xff]
        %v3112 = vld [vmem:[#allocation16 + $0x248] sm:$0xf]
        %v3113 = vld [vmem:[#allocation16 + $0x24c] sm:$0xff]
        %v3114 = vld [vmem:[#allocation16 + $0x254] sm:$0xf]
        %v3115 = vld [vmem:[#allocation16 + $0x258] sm:$0xff]
        %v3116 = vld [vmem:[#allocation16 + $0x260] sm:$0xf]
        %v3117 = vld [vmem:[#allocation16 + $0x264] sm:$0xff]
        %v3118 = vld [vmem:[#allocation16 + $0x26c] sm:$0xf]
        %v3119 = vld [vmem:[#allocation16 + $0x270] sm:$0xff]
        %v3120 = vld [vmem:[#allocation16 + $0x278] sm:$0xf]
        %v3121 = vld [vmem:[#allocation16 + $0x27c] sm:$0xff]
        %v3122 = vld [vmem:[#allocation16 + $0x284] sm:$0xf]
        %v3123 = vld [vmem:[#allocation16 + $0x288] sm:$0xff]
        %v3124 = vld [vmem:[#allocation16 + $0x290] sm:$0xf]
        %v3125 = vld [vmem:[#allocation16 + $0x294] sm:$0xff]
        %v3126 = vld [vmem:[#allocation16 + $0x29c] sm:$0xf]
        %v3127 = vld [vmem:[#allocation16 + $0x2a0] sm:$0xff]
        %v3128 = vld [vmem:[#allocation16 + $0x2a8] sm:$0xf]
        %v3129 = vld [vmem:[#allocation16 + $0x2ac] sm:$0xff]
        %v3130 = vld [vmem:[#allocation16 + $0x2b4] sm:$0xf]
        %v3131 = vld [vmem:[#allocation16 + $0x2b8] sm:$0xff]
        %v3132 = vld [vmem:[#allocation16 + $0x2c0] sm:$0xf]
        %v3133 = vld [vmem:[#allocation16 + $0x2c4] sm:$0xff]
        %v3134 = vld [vmem:[#allocation16 + $0x2cc] sm:$0xf]
        %v3135 = vld [vmem:[#allocation16 + $0x2d0] sm:$0xff]
        %v3136 = vld [vmem:[#allocation16 + $0x2d8] sm:$0xf]
        %v3137 = vld [vmem:[#allocation16 + $0x2dc] sm:$0xff]
        %v3138 = vld [vmem:[#allocation16 + $0x2e4] sm:$0xf]
        %v3139 = vld [vmem:[#allocation16 + $0x2e8] sm:$0xff]
        %v3140 = vld [vmem:[#allocation16 + $0x2f0] sm:$0xf]
        %v3141 = vld [vmem:[#allocation16 + $0x2f4] sm:$0xff]
        %v3142 = vld [vmem:[#allocation16 + $0x2fc] sm:$0xf]
        %v3143 = vld [vmem:[%s12] sm:$0x7]
        %v3145 = vlaneseq
        %v3146 = vshrl.u32 %v3145, 7
        %v3147 = vsub.s32 0, %v3146
        %v3148 = vrot.slane %v3143, %v3147
        %v3149 = vlaneseq
        %v3150 = vshrl.u32 %v3149, 7
        %v3151 = vsub.s32 1, %v3150
        %v3152 = vrot.slane %v3143, %v3151
        %v3153 = vlaneseq
        %v3154 = vshrl.u32 %v3153, 7
        %v3155 = vsub.s32 2, %v3154
        %v3156 = vrot.slane %v3143, %v3155
        %v3288 = vunpack.c.l.b16 %v3015
        %v3289 = vunpack.c.h.b16 %v3015
        %v3290 = vunpack.c.l.b16 %v3016
        %v3291 = vunpack.c.l.b16 %v3017
        %v3292 = vunpack.c.h.b16 %v3017
        %v3293 = vunpack.c.l.b16 %v3018
        %v3294 = vunpack.c.l.b16 %v3019
        %v3295 = vunpack.c.h.b16 %v3019
        %v3296 = vunpack.c.l.b16 %v3020
        %v3297 = vunpack.c.l.b16 %v3021
        %v3298 = vunpack.c.h.b16 %v3021
        %v3299 = vunpack.c.l.b16 %v3022
        %v3300 = vunpack.c.l.b16 %v3023
        %v3301 = vunpack.c.h.b16 %v3023
        %v3302 = vunpack.c.l.b16 %v3024
        %v3303 = vunpack.c.l.b16 %v3025
        %v3304 = vunpack.c.h.b16 %v3025
        %v3305 = vunpack.c.l.b16 %v3026
        %v3306 = vunpack.c.l.b16 %v3027
        %v3307 = vunpack.c.h.b16 %v3027
        %v3308 = vunpack.c.l.b16 %v3028
        %v3309 = vunpack.c.l.b16 %v3029
        %v3310 = vunpack.c.h.b16 %v3029
        %v3311 = vunpack.c.l.b16 %v3030
        %v3312 = vunpack.c.l.b16 %v3031
        %v3313 = vunpack.c.h.b16 %v3031
        %v3314 = vunpack.c.l.b16 %v3032
        %v3315 = vunpack.c.l.b16 %v3033
        %v3316 = vunpack.c.h.b16 %v3033
        %v3317 = vunpack.c.l.b16 %v3034
        %v3318 = vunpack.c.l.b16 %v3035
        %v3319 = vunpack.c.h.b16 %v3035
        %v3320 = vunpack.c.l.b16 %v3036
        %v3321 = vunpack.c.l.b16 %v3037
        %v3322 = vunpack.c.h.b16 %v3037
        %v3323 = vunpack.c.l.b16 %v3038
        %v3324 = vunpack.c.l.b16 %v3039
        %v3325 = vunpack.c.h.b16 %v3039
        %v3326 = vunpack.c.l.b16 %v3040
        %v3327 = vunpack.c.l.b16 %v3041
        %v3328 = vunpack.c.h.b16 %v3041
        %v3329 = vunpack.c.l.b16 %v3042
        %v3330 = vunpack.c.l.b16 %v3043
        %v3331 = vunpack.c.h.b16 %v3043
        %v3332 = vunpack.c.l.b16 %v3044
        %v3333 = vunpack.c.l.b16 %v3045
        %v3334 = vunpack.c.h.b16 %v3045
        %v3335 = vunpack.c.l.b16 %v3046
        %v3336 = vunpack.c.l.b16 %v3047
        %v3337 = vunpack.c.h.b16 %v3047
        %v3338 = vunpack.c.l.b16 %v3048
        %v3339 = vunpack.c.l.b16 %v3049
        %v3340 = vunpack.c.h.b16 %v3049
        %v3341 = vunpack.c.l.b16 %v3050
        %v3342 = vunpack.c.l.b16 %v3051
        %v3343 = vunpack.c.h.b16 %v3051
        %v3344 = vunpack.c.l.b16 %v3052
        %v3345 = vunpack.c.l.b16 %v3053
        %v3346 = vunpack.c.h.b16 %v3053
        %v3347 = vunpack.c.l.b16 %v3054
        %v3348 = vunpack.c.l.b16 %v3055
        %v3349 = vunpack.c.h.b16 %v3055
        %v3350 = vunpack.c.l.b16 %v3056
        %v3351 = vunpack.c.l.b16 %v3057
        %v3352 = vunpack.c.h.b16 %v3057
        %v3353 = vunpack.c.l.b16 %v3058
        %v3354 = vunpack.c.l.b16 %v3059
        %v3355 = vunpack.c.h.b16 %v3059
        %v3356 = vunpack.c.l.b16 %v3060
        %v3357 = vunpack.c.l.b16 %v3061
        %v3358 = vunpack.c.h.b16 %v3061
        %v3359 = vunpack.c.l.b16 %v3062
        %v3360 = vunpack.c.l.b16 %v3063
        %v3361 = vunpack.c.h.b16 %v3063
        %v3362 = vunpack.c.l.b16 %v3064
        %v3363 = vunpack.c.l.b16 %v3065
        %v3364 = vunpack.c.h.b16 %v3065
        %v3365 = vunpack.c.l.b16 %v3066
        %v3366 = vunpack.c.l.b16 %v3067
        %v3367 = vunpack.c.h.b16 %v3067
        %v3368 = vunpack.c.l.b16 %v3068
        %v3369 = vunpack.c.l.b16 %v3069
        %v3370 = vunpack.c.h.b16 %v3069
        %v3371 = vunpack.c.l.b16 %v3070
        %v3372 = vunpack.c.l.b16 %v3071
        %v3373 = vunpack.c.h.b16 %v3071
        %v3374 = vunpack.c.l.b16 %v3072
        %v3375 = vunpack.c.l.b16 %v3073
        %v3376 = vunpack.c.h.b16 %v3073
        %v3377 = vunpack.c.l.b16 %v3074
        %v3378 = vunpack.c.l.b16 %v3075
        %v3379 = vunpack.c.h.b16 %v3075
        %v3380 = vunpack.c.l.b16 %v3076
        %v3381 = vunpack.c.l.b16 %v3077
        %v3382 = vunpack.c.h.b16 %v3077
        %v3383 = vunpack.c.l.b16 %v3078
        %v3384 = vunpack.c.l.b16 %v3079
        %v3385 = vunpack.c.h.b16 %v3079
        %v3386 = vunpack.c.l.b16 %v3080
        %v3387 = vunpack.c.l.b16 %v3081
        %v3388 = vunpack.c.h.b16 %v3081
        %v3389 = vunpack.c.l.b16 %v3082
        %v3390 = vunpack.c.l.b16 %v3083
        %v3391 = vunpack.c.h.b16 %v3083
        %v3392 = vunpack.c.l.b16 %v3084
        %v3393 = vunpack.c.l.b16 %v3085
        %v3394 = vunpack.c.h.b16 %v3085
        %v3395 = vunpack.c.l.b16 %v3086
        %v3396 = vunpack.c.l.b16 %v3087
        %v3397 = vunpack.c.h.b16 %v3087
        %v3398 = vunpack.c.l.b16 %v3088
        %v3399 = vunpack.c.l.b16 %v3089
        %v3400 = vunpack.c.h.b16 %v3089
        %v3401 = vunpack.c.l.b16 %v3090
        %v3402 = vunpack.c.l.b16 %v3091
        %v3403 = vunpack.c.h.b16 %v3091
        %v3404 = vunpack.c.l.b16 %v3092
        %v3405 = vunpack.c.l.b16 %v3093
        %v3406 = vunpack.c.h.b16 %v3093
        %v3407 = vunpack.c.l.b16 %v3094
        %v3408 = vunpack.c.l.b16 %v3095
        %v3409 = vunpack.c.h.b16 %v3095
        %v3410 = vunpack.c.l.b16 %v3096
        %v3411 = vunpack.c.l.b16 %v3097
        %v3412 = vunpack.c.h.b16 %v3097
        %v3413 = vunpack.c.l.b16 %v3098
        %v3414 = vunpack.c.l.b16 %v3099
        %v3415 = vunpack.c.h.b16 %v3099
        %v3416 = vunpack.c.l.b16 %v3100
        %v3417 = vunpack.c.l.b16 %v3101
        %v3418 = vunpack.c.h.b16 %v3101
        %v3419 = vunpack.c.l.b16 %v3102
        %v3420 = vunpack.c.l.b16 %v3103
        %v3421 = vunpack.c.h.b16 %v3103
        %v3422 = vunpack.c.l.b16 %v3104
        %v3423 = vunpack.c.l.b16 %v3105
        %v3424 = vunpack.c.h.b16 %v3105
        %v3425 = vunpack.c.l.b16 %v3106
        %v3426 = vunpack.c.l.b16 %v3107
        %v3427 = vunpack.c.h.b16 %v3107
        %v3428 = vunpack.c.l.b16 %v3108
        %v3429 = vunpack.c.l.b16 %v3109
        %v3430 = vunpack.c.h.b16 %v3109
        %v3431 = vunpack.c.l.b16 %v3110
        %v3432 = vunpack.c.l.b16 %v3111
        %v3433 = vunpack.c.h.b16 %v3111
        %v3434 = vunpack.c.l.b16 %v3112
        %v3435 = vunpack.c.l.b16 %v3113
        %v3436 = vunpack.c.h.b16 %v3113
        %v3437 = vunpack.c.l.b16 %v3114
        %v3438 = vunpack.c.l.b16 %v3115
        %v3439 = vunpack.c.h.b16 %v3115
        %v3440 = vunpack.c.l.b16 %v3116
        %v3441 = vunpack.c.l.b16 %v3117
        %v3442 = vunpack.c.h.b16 %v3117
        %v3443 = vunpack.c.l.b16 %v3118
        %v3444 = vunpack.c.l.b16 %v3119
        %v3445 = vunpack.c.h.b16 %v3119
        %v3446 = vunpack.c.l.b16 %v3120
        %v3447 = vunpack.c.l.b16 %v3121
        %v3448 = vunpack.c.h.b16 %v3121
        %v3449 = vunpack.c.l.b16 %v3122
        %v3450 = vunpack.c.l.b16 %v3123
        %v3451 = vunpack.c.h.b16 %v3123
        %v3452 = vunpack.c.l.b16 %v3124
        %v3453 = vunpack.c.l.b16 %v3125
        %v3454 = vunpack.c.h.b16 %v3125
        %v3455 = vunpack.c.l.b16 %v3126
        %v3456 = vunpack.c.l.b16 %v3127
        %v3457 = vunpack.c.h.b16 %v3127
        %v3458 = vunpack.c.l.b16 %v3128
        %v3459 = vunpack.c.l.b16 %v3129
        %v3460 = vunpack.c.h.b16 %v3129
        %v3461 = vunpack.c.l.b16 %v3130
        %v3462 = vunpack.c.l.b16 %v3131
        %v3463 = vunpack.c.h.b16 %v3131
        %v3464 = vunpack.c.l.b16 %v3132
        %v3465 = vunpack.c.l.b16 %v3133
        %v3466 = vunpack.c.h.b16 %v3133
        %v3467 = vunpack.c.l.b16 %v3134
        %v3468 = vunpack.c.l.b16 %v3135
        %v3469 = vunpack.c.h.b16 %v3135
        %v3470 = vunpack.c.l.b16 %v3136
        %v3471 = vunpack.c.l.b16 %v3137
        %v3472 = vunpack.c.h.b16 %v3137
        %v3473 = vunpack.c.l.b16 %v3138
        %v3474 = vunpack.c.l.b16 %v3139
        %v3475 = vunpack.c.h.b16 %v3139
        %v3476 = vunpack.c.l.b16 %v3140
        %v3477 = vunpack.c.l.b16 %v3141
        %v3478 = vunpack.c.h.b16 %v3141
        %v3479 = vunpack.c.l.b16 %v3142
        %v3480 = vpack.c.b16 %v3291, %v3288
        %v3481 = vpack.c.b16 %v3292, %v3289
        %v3482 = vpack.c.b16 %v3293, %v3290
        %v3483 = vpack.c.b16 %v3297, %v3294
        %v3484 = vpack.c.b16 %v3298, %v3295
        %v3485 = vpack.c.b16 %v3299, %v3296
        %v3486 = vpack.c.b16 %v3303, %v3300
        %v3487 = vpack.c.b16 %v3304, %v3301
        %v3488 = vpack.c.b16 %v3305, %v3302
        %v3489 = vpack.c.b16 %v3309, %v3306
        %v3490 = vpack.c.b16 %v3310, %v3307
        %v3491 = vpack.c.b16 %v3311, %v3308
        %v3492 = vpack.c.b16 %v3315, %v3312
        %v3493 = vpack.c.b16 %v3316, %v3313
        %v3494 = vpack.c.b16 %v3317, %v3314
        %v3495 = vpack.c.b16 %v3321, %v3318
        %v3496 = vpack.c.b16 %v3322, %v3319
        %v3497 = vpack.c.b16 %v3323, %v3320
        %v3498 = vpack.c.b16 %v3327, %v3324
        %v3499 = vpack.c.b16 %v3328, %v3325
        %v3500 = vpack.c.b16 %v3329, %v3326
        %v3501 = vpack.c.b16 %v3333, %v3330
        %v3502 = vpack.c.b16 %v3334, %v3331
        %v3503 = vpack.c.b16 %v3335, %v3332
        %v3504 = vpack.c.b16 %v3339, %v3336
        %v3505 = vpack.c.b16 %v3340, %v3337
        %v3506 = vpack.c.b16 %v3341, %v3338
        %v3507 = vpack.c.b16 %v3345, %v3342
        %v3508 = vpack.c.b16 %v3346, %v3343
        %v3509 = vpack.c.b16 %v3347, %v3344
        %v3510 = vpack.c.b16 %v3351, %v3348
        %v3511 = vpack.c.b16 %v3352, %v3349
        %v3512 = vpack.c.b16 %v3353, %v3350
        %v3513 = vpack.c.b16 %v3357, %v3354
        %v3514 = vpack.c.b16 %v3358, %v3355
        %v3515 = vpack.c.b16 %v3359, %v3356
        %v3516 = vpack.c.b16 %v3363, %v3360
        %v3517 = vpack.c.b16 %v3364, %v3361
        %v3518 = vpack.c.b16 %v3365, %v3362
        %v3519 = vpack.c.b16 %v3369, %v3366
        %v3520 = vpack.c.b16 %v3370, %v3367
        %v3521 = vpack.c.b16 %v3371, %v3368
        %v3522 = vpack.c.b16 %v3375, %v3372
        %v3523 = vpack.c.b16 %v3376, %v3373
        %v3524 = vpack.c.b16 %v3377, %v3374
        %v3525 = vpack.c.b16 %v3381, %v3378
        %v3526 = vpack.c.b16 %v3382, %v3379
        %v3527 = vpack.c.b16 %v3383, %v3380
        %v3528 = vpack.c.b16 %v3387, %v3384
        %v3529 = vpack.c.b16 %v3388, %v3385
        %v3530 = vpack.c.b16 %v3389, %v3386
        %v3531 = vpack.c.b16 %v3393, %v3390
        %v3532 = vpack.c.b16 %v3394, %v3391
        %v3533 = vpack.c.b16 %v3395, %v3392
        %v3534 = vpack.c.b16 %v3399, %v3396
        %v3535 = vpack.c.b16 %v3400, %v3397
        %v3536 = vpack.c.b16 %v3401, %v3398
        %v3537 = vpack.c.b16 %v3405, %v3402
        %v3538 = vpack.c.b16 %v3406, %v3403
        %v3539 = vpack.c.b16 %v3407, %v3404
        %v3540 = vpack.c.b16 %v3411, %v3408
        %v3541 = vpack.c.b16 %v3412, %v3409
        %v3542 = vpack.c.b16 %v3413, %v3410
        %v3543 = vpack.c.b16 %v3417, %v3414
        %v3544 = vpack.c.b16 %v3418, %v3415
        %v3545 = vpack.c.b16 %v3419, %v3416
        %v3546 = vpack.c.b16 %v3423, %v3420
        %v3547 = vpack.c.b16 %v3424, %v3421
        %v3548 = vpack.c.b16 %v3425, %v3422
        %v3549 = vpack.c.b16 %v3429, %v3426
        %v3550 = vpack.c.b16 %v3430, %v3427
        %v3551 = vpack.c.b16 %v3431, %v3428
        %v3552 = vpack.c.b16 %v3435, %v3432
        %v3553 = vpack.c.b16 %v3436, %v3433
        %v3554 = vpack.c.b16 %v3437, %v3434
        %v3555 = vpack.c.b16 %v3441, %v3438
        %v3556 = vpack.c.b16 %v3442, %v3439
        %v3557 = vpack.c.b16 %v3443, %v3440
        %v3558 = vpack.c.b16 %v3447, %v3444
        %v3559 = vpack.c.b16 %v3448, %v3445
        %v3560 = vpack.c.b16 %v3449, %v3446
        %v3561 = vpack.c.b16 %v3453, %v3450
        %v3562 = vpack.c.b16 %v3454, %v3451
        %v3563 = vpack.c.b16 %v3455, %v3452
        %v3564 = vpack.c.b16 %v3459, %v3456
        %v3565 = vpack.c.b16 %v3460, %v3457
        %v3566 = vpack.c.b16 %v3461, %v3458
        %v3567 = vpack.c.b16 %v3465, %v3462
        %v3568 = vpack.c.b16 %v3466, %v3463
        %v3569 = vpack.c.b16 %v3467, %v3464
        %v3570 = vpack.c.b16 %v3471, %v3468
        %v3571 = vpack.c.b16 %v3472, %v3469
        %v3572 = vpack.c.b16 %v3473, %v3470
        %v3573 = vpack.c.b16 %v3477, %v3474
        %v3574 = vpack.c.b16 %v3478, %v3475
        %v3575 = vpack.c.b16 %v3479, %v3476
        %3672 = vmatprep.subr.bf16.mxu0 %v3502
        %3673 = vmatpush1.bf16.msra.mxu0 %v3501
        %3674 = vmatprep.subr.bf16.mxu0 %v3499
        %3675 = vmatpush1.bf16.msra.mxu0 %v3498
        %3676 = vmatprep.subr.bf16.mxu0 %v3496
        %3677 = vmatpush1.bf16.msra.mxu0 %v3495
        %3678 = vmatprep.subr.bf16.mxu0 %v3493
        %3679 = vmatpush1.bf16.msra.mxu0 %v3492
        %3680 = vmatprep.subr.bf16.mxu0 %v3490
        %3681 = vmatpush1.bf16.msra.mxu0 %v3489
        %3682 = vmatprep.subr.bf16.mxu0 %v3487
        %3683 = vmatpush1.bf16.msra.mxu0 %v3486
        %3684 = vmatprep.subr.bf16.mxu0 %v3484
        %3685 = vmatpush1.bf16.msra.mxu0 %v3483
        %3686 = vmatprep.subr.bf16.mxu0 %v3481
        %3687 = vmatpush1.bf16.msra.mxu0 %v3480
        %3688 = vmatprep.subr.bf16.mxu0 %v3526
        %3689 = vmatpush2.bf16.msra.mxu0 %v3525
        %3690 = vmatprep.subr.bf16.mxu0 %v3523
        %3691 = vmatpush2.bf16.msra.mxu0 %v3522
        %3692 = vmatprep.subr.bf16.mxu0 %v3520
        %3693 = vmatpush2.bf16.msra.mxu0 %v3519
        %3694 = vmatprep.subr.bf16.mxu0 %v3517
        %3695 = vmatpush2.bf16.msra.mxu0 %v3516
        %3696 = vmatprep.subr.bf16.mxu0 %v3514
        %3697 = vmatpush2.bf16.msra.mxu0 %v3513
        %3698 = vmatprep.subr.bf16.mxu0 %v3511
        %3699 = vmatpush2.bf16.msra.mxu0 %v3510
        %3700 = vmatprep.subr.bf16.mxu0 %v3508
        %3701 = vmatpush2.bf16.msra.mxu0 %v3507
        %3702 = vmatprep.subr.bf16.mxu0 %v3505
        %3703 = vmatpush2.bf16.msra.mxu0 %v3504
        %3704 = vmatprep.mubr.bf16.mxu0 %v3012
        %3705 = vmatmul.mubr.bf16.gmra.mxu0 %v3011
        %v3706 = vpop.f32.mrf.mxu0
        %v3707 = vadd.f32 %v3148, %v3706
        %v3708 = vpop.f32.mrf.mxu0
        %v3709 = vadd.f32 %v3152, %v3708
        %v3710 = vpop.f32.mrf.mxu0
        %v3711 = vadd.f32 %v3148, %v3710
        %v3712 = vpop.f32.mrf.mxu0
        %v3713 = vadd.f32 %v3152, %v3712
        %3714 = vdwg.mxu0
        %3715 = vmatprep.subr.bf16.mxu0 %v3550
        %3716 = vmatpush1.bf16.msra.mxu0 %v3549
        %3717 = vmatprep.subr.bf16.mxu0 %v3547
        %3718 = vmatpush1.bf16.msra.mxu0 %v3546
        %3719 = vmatprep.subr.bf16.mxu0 %v3544
        %3720 = vmatpush1.bf16.msra.mxu0 %v3543
        %3721 = vmatprep.subr.bf16.mxu0 %v3541
        %3722 = vmatpush1.bf16.msra.mxu0 %v3540
        %3723 = vmatprep.subr.bf16.mxu0 %v3538
        %3724 = vmatpush1.bf16.msra.mxu0 %v3537
        %3725 = vmatprep.subr.bf16.mxu0 %v3535
        %3726 = vmatpush1.bf16.msra.mxu0 %v3534
        %3727 = vmatprep.subr.bf16.mxu0 %v3532
        %3728 = vmatpush1.bf16.msra.mxu0 %v3531
        %3729 = vmatprep.subr.bf16.mxu0 %v3529
        %3730 = vmatpush1.bf16.msra.mxu0 %v3528
        %3731 = vmatprep.subr.bf16.mxu0 %v3574
        %3732 = vmatpush2.bf16.msra.mxu0 %v3573
        %3733 = vmatprep.subr.bf16.mxu0 %v3571
        %3734 = vmatpush2.bf16.msra.mxu0 %v3570
        %3735 = vmatprep.subr.bf16.mxu0 %v3568
        %3736 = vmatpush2.bf16.msra.mxu0 %v3567
        %3737 = vmatprep.subr.bf16.mxu0 %v3565
        %3738 = vmatpush2.bf16.msra.mxu0 %v3564
        %3739 = vmatprep.subr.bf16.mxu0 %v3562
        %3740 = vmatpush2.bf16.msra.mxu0 %v3561
        %3741 = vmatprep.subr.bf16.mxu0 %v3559
        %3742 = vmatpush2.bf16.msra.mxu0 %v3558
        %3743 = vmatprep.subr.bf16.mxu0 %v3556
        %3744 = vmatpush2.bf16.msra.mxu0 %v3555
        %3745 = vmatprep.subr.bf16.mxu0 %v3553
        %3746 = vmatpush2.bf16.msra.mxu0 %v3552
        %3747 = vmatprep.mubr.bf16.mxu0 %v3014
        %3748 = vmatmul.mubr.bf16.gmra.mxu0 %v3013
        %v3749 = vpop.f32.mrf.mxu0
        %v3750 = vadd.f32 %v3707, %v3749
        %v3751 = vpop.f32.mrf.mxu0
        %v3752 = vadd.f32 %v3709, %v3751
        %v3753 = vpop.f32.mrf.mxu0
        %v3754 = vadd.f32 %v3711, %v3753
        %v3755 = vpop.f32.mrf.mxu0
        %v3756 = vadd.f32 %v3713, %v3755
        %3757 = vdwg.mxu0
        %3758 = vmatprep.subr.bf16.mxu0 0
        %3759 = vmatpush1.bf16.msra.mxu0 %v3503
        %3760 = vmatprep.subr.bf16.mxu0 0
        %3761 = vmatpush1.bf16.msra.mxu0 %v3500
        %3762 = vmatprep.subr.bf16.mxu0 0
        %3763 = vmatpush1.bf16.msra.mxu0 %v3497
        %3764 = vmatprep.subr.bf16.mxu0 0
        %3765 = vmatpush1.bf16.msra.mxu0 %v3494
        %3766 = vmatprep.subr.bf16.mxu0 0
        %3767 = vmatpush1.bf16.msra.mxu0 %v3491
        %3768 = vmatprep.subr.bf16.mxu0 0
        %3769 = vmatpush1.bf16.msra.mxu0 %v3488
        %3770 = vmatprep.subr.bf16.mxu0 0
        %3771 = vmatpush1.bf16.msra.mxu0 %v3485
        %3772 = vmatprep.subr.bf16.mxu0 0
        %3773 = vmatpush1.bf16.msra.mxu0 %v3482
        %3774 = vmatprep.subr.bf16.mxu0 0
        %3775 = vmatpush2.bf16.msra.mxu0 %v3527
        %3776 = vmatprep.subr.bf16.mxu0 0
        %3777 = vmatpush2.bf16.msra.mxu0 %v3524
        %3778 = vmatprep.subr.bf16.mxu0 0
        %3779 = vmatpush2.bf16.msra.mxu0 %v3521
        %3780 = vmatprep.subr.bf16.mxu0 0
        %3781 = vmatpush2.bf16.msra.mxu0 %v3518
        %3782 = vmatprep.subr.bf16.mxu0 0
        %3783 = vmatpush2.bf16.msra.mxu0 %v3515
        %3784 = vmatprep.subr.bf16.mxu0 0
        %3785 = vmatpush2.bf16.msra.mxu0 %v3512
        %3786 = vmatprep.subr.bf16.mxu0 0
        %3787 = vmatpush2.bf16.msra.mxu0 %v3509
        %3788 = vmatprep.subr.bf16.mxu0 0
        %3789 = vmatpush2.bf16.msra.mxu0 %v3506
        %3790 = vmatprep.mubr.bf16.mxu0 %v3012
        %3791 = vmatmul.mubr.bf16.gmra.mxu0 %v3011
        %v3792 = vpop.f32.mrf.mxu0
        %v3793 = vadd.f32 %v3156, %v3792
        %v3794 = vpop.f32.mrf.mxu0
        %v3795 = vpop.f32.mrf.mxu0
        %v3796 = vadd.f32 %v3156, %v3795
        %v3797 = vpop.f32.mrf.mxu0
        %3798 = vdwg.mxu0
        %3799 = vmatprep.subr.bf16.mxu0 0
        %3800 = vmatpush1.bf16.msra.mxu0 %v3551
        %3801 = vmatprep.subr.bf16.mxu0 0
        %3802 = vmatpush1.bf16.msra.mxu0 %v3548
        %3803 = vmatprep.subr.bf16.mxu0 0
        %3804 = vmatpush1.bf16.msra.mxu0 %v3545
        %3805 = vmatprep.subr.bf16.mxu0 0
        %3806 = vmatpush1.bf16.msra.mxu0 %v3542
        %3807 = vmatprep.subr.bf16.mxu0 0
        %3808 = vmatpush1.bf16.msra.mxu0 %v3539
        %3809 = vmatprep.subr.bf16.mxu0 0
        %3810 = vmatpush1.bf16.msra.mxu0 %v3536
        %3811 = vmatprep.subr.bf16.mxu0 0
        %3812 = vmatpush1.bf16.msra.mxu0 %v3533
        %3813 = vmatprep.subr.bf16.mxu0 0
        %3814 = vmatpush1.bf16.msra.mxu0 %v3530
        %3815 = vmatprep.subr.bf16.mxu0 0
        %3816 = vmatpush2.bf16.msra.mxu0 %v3575
        %3817 = vmatprep.subr.bf16.mxu0 0
        %3818 = vmatpush2.bf16.msra.mxu0 %v3572
        %3819 = vmatprep.subr.bf16.mxu0 0
        %3820 = vmatpush2.bf16.msra.mxu0 %v3569
        %3821 = vmatprep.subr.bf16.mxu0 0
        %3822 = vmatpush2.bf16.msra.mxu0 %v3566
        %3823 = vmatprep.subr.bf16.mxu0 0
        %3824 = vmatpush2.bf16.msra.mxu0 %v3563
        %3825 = vmatprep.subr.bf16.mxu0 0
        %3826 = vmatpush2.bf16.msra.mxu0 %v3560
        %3827 = vmatprep.subr.bf16.mxu0 0
        %3828 = vmatpush2.bf16.msra.mxu0 %v3557
        %3829 = vmatprep.subr.bf16.mxu0 0
        %3830 = vmatpush2.bf16.msra.mxu0 %v3554
        %3831 = vmatprep.mubr.bf16.mxu0 %v3014
        %3832 = vmatmul.mubr.bf16.gmra.mxu0 %v3013
        %v3833 = vpop.f32.mrf.mxu0
        %v3834 = vadd.f32 %v3793, %v3833
        %v3835 = vpop.f32.mrf.mxu0
        %v3836 = vpop.f32.mrf.mxu0
        %v3837 = vadd.f32 %v3796, %v3836
        %v3838 = vpop.f32.mrf.mxu0
        %3839 = vdwg.mxu0
        %v3840 = vmax.f32 %v3750, 0.0
        %v3841 = vmax.f32 %v3752, 0.0
        %v3842 = vmax.f32 %v3834, 0.0
        %v3843 = vmax.f32 %v3754, 0.0
        %v3844 = vmax.f32 %v3756, 0.0
        %v3845 = vmax.f32 %v3837, 0.0
        %v3846 = vpack.c.bf16 %v3843, %v3840
        %v3847 = vpack.c.bf16 %v3844, %v3841
        %v3848 = vpack.c.bf16 %v3845, %v3842
        %v3849 = vld [vmem:[#allocation17] sm:$0xf]
        %v3850 = vld [vmem:[#allocation17 + $0x4] sm:$0xf]
        %v3851 = vld [vmem:[#allocation17 + $0x8] sm:$0xf]
        %v3852 = vld [vmem:[#allocation17 + $0xc] sm:$0xf]
        %v3853 = vld [vmem:[#allocation17 + $0x10] sm:$0xf]
        %v3854 = vld [vmem:[#allocation17 + $0x14] sm:$0xf]
        %v3855 = vld [vmem:[#allocation17 + $0x18] sm:$0xf]
        %v3856 = vld [vmem:[#allocation17 + $0x1c] sm:$0xf]
        %v3857 = vld [vmem:[#allocation17 + $0x20] sm:$0xf]
        %v3858 = vld [vmem:[#allocation17 + $0x24] sm:$0xf]
        %v3859 = vld [vmem:[#allocation17 + $0x28] sm:$0xf]
        %v3860 = vld [vmem:[#allocation17 + $0x2c] sm:$0xf]
        %v3861 = vld [vmem:[#allocation17 + $0x30] sm:$0xf]
        %v3862 = vld [vmem:[#allocation17 + $0x34] sm:$0xf]
        %v3863 = vld [vmem:[#allocation17 + $0x38] sm:$0xf]
        %v3864 = vld [vmem:[#allocation17 + $0x3c] sm:$0xf]
        %v3865 = vld [vmem:[#allocation17 + $0x40] sm:$0xf]
        %v3866 = vld [vmem:[#allocation17 + $0x44] sm:$0xf]
        %v3867 = vld [vmem:[#allocation17 + $0x48] sm:$0xf]
        %v3868 = vld [vmem:[#allocation17 + $0x4c] sm:$0xf]
        %v3869 = vld [vmem:[#allocation17 + $0x50] sm:$0xf]
        %v3870 = vld [vmem:[#allocation17 + $0x54] sm:$0xf]
        %v3871 = vld [vmem:[#allocation17 + $0x58] sm:$0xf]
        %v3872 = vld [vmem:[#allocation17 + $0x5c] sm:$0xf]
        %v3873 = vld [vmem:[#allocation17 + $0x60] sm:$0xf]
        %v3874 = vld [vmem:[#allocation17 + $0x64] sm:$0xf]
        %v3875 = vld [vmem:[#allocation17 + $0x68] sm:$0xf]
        %v3876 = vld [vmem:[#allocation17 + $0x6c] sm:$0xf]
        %v3877 = vld [vmem:[#allocation17 + $0x70] sm:$0xf]
        %v3878 = vld [vmem:[#allocation17 + $0x74] sm:$0xf]
        %v3879 = vld [vmem:[#allocation17 + $0x78] sm:$0xf]
        %v3880 = vld [vmem:[#allocation17 + $0x7c] sm:$0xf]
        %v3881 = vld [vmem:[#allocation17 + $0x80] sm:$0xf]
        %v3882 = vld [vmem:[#allocation17 + $0x84] sm:$0xf]
        %v3883 = vld [vmem:[#allocation17 + $0x88] sm:$0xf]
        %v3884 = vld [vmem:[#allocation17 + $0x8c] sm:$0xf]
        %v3885 = vld [vmem:[#allocation17 + $0x90] sm:$0xf]
        %v3886 = vld [vmem:[#allocation17 + $0x94] sm:$0xf]
        %v3887 = vld [vmem:[#allocation17 + $0x98] sm:$0xf]
        %v3888 = vld [vmem:[#allocation17 + $0x9c] sm:$0xf]
        %v3889 = vld [vmem:[#allocation17 + $0xa0] sm:$0xf]
        %v3890 = vld [vmem:[#allocation17 + $0xa4] sm:$0xf]
        %v3891 = vld [vmem:[#allocation17 + $0xa8] sm:$0xf]
        %v3892 = vld [vmem:[#allocation17 + $0xac] sm:$0xf]
        %v3893 = vld [vmem:[#allocation17 + $0xb0] sm:$0xf]
        %v3894 = vld [vmem:[#allocation17 + $0xb4] sm:$0xf]
        %v3895 = vld [vmem:[#allocation17 + $0xb8] sm:$0xf]
        %v3896 = vld [vmem:[#allocation17 + $0xbc] sm:$0xf]
        %v3897 = vld [vmem:[%s14] sm:$0x1]
        %v3899 = vlaneseq
        %v3900 = vshrl.u32 %v3899, 7
        %v3901 = vsub.s32 0, %v3900
        %v3902 = vrot.slane %v3897, %v3901
        %v3952 = vunpack.c.l.b16 %v3849
        %v3953 = vunpack.c.l.b16 %v3850
        %v3954 = vunpack.c.l.b16 %v3851
        %v3955 = vunpack.c.l.b16 %v3852
        %v3956 = vunpack.c.l.b16 %v3853
        %v3957 = vunpack.c.l.b16 %v3854
        %v3958 = vunpack.c.l.b16 %v3855
        %v3959 = vunpack.c.l.b16 %v3856
        %v3960 = vunpack.c.l.b16 %v3857
        %v3961 = vunpack.c.l.b16 %v3858
        %v3962 = vunpack.c.l.b16 %v3859
        %v3963 = vunpack.c.l.b16 %v3860
        %v3964 = vunpack.c.l.b16 %v3861
        %v3965 = vunpack.c.l.b16 %v3862
        %v3966 = vunpack.c.l.b16 %v3863
        %v3967 = vunpack.c.l.b16 %v3864
        %v3968 = vunpack.c.l.b16 %v3865
        %v3969 = vunpack.c.l.b16 %v3866
        %v3970 = vunpack.c.l.b16 %v3867
        %v3971 = vunpack.c.l.b16 %v3868
        %v3972 = vunpack.c.l.b16 %v3869
        %v3973 = vunpack.c.l.b16 %v3870
        %v3974 = vunpack.c.l.b16 %v3871
        %v3975 = vunpack.c.l.b16 %v3872
        %v3976 = vunpack.c.l.b16 %v3873
        %v3977 = vunpack.c.l.b16 %v3874
        %v3978 = vunpack.c.l.b16 %v3875
        %v3979 = vunpack.c.l.b16 %v3876
        %v3980 = vunpack.c.l.b16 %v3877
        %v3981 = vunpack.c.l.b16 %v3878
        %v3982 = vunpack.c.l.b16 %v3879
        %v3983 = vunpack.c.l.b16 %v3880
        %v3984 = vunpack.c.l.b16 %v3881
        %v3985 = vunpack.c.l.b16 %v3882
        %v3986 = vunpack.c.l.b16 %v3883
        %v3987 = vunpack.c.l.b16 %v3884
        %v3988 = vunpack.c.l.b16 %v3885
        %v3989 = vunpack.c.l.b16 %v3886
        %v3990 = vunpack.c.l.b16 %v3887
        %v3991 = vunpack.c.l.b16 %v3888
        %v3992 = vunpack.c.l.b16 %v3889
        %v3993 = vunpack.c.l.b16 %v3890
        %v3994 = vunpack.c.l.b16 %v3891
        %v3995 = vunpack.c.l.b16 %v3892
        %v3996 = vunpack.c.l.b16 %v3893
        %v3997 = vunpack.c.l.b16 %v3894
        %v3998 = vunpack.c.l.b16 %v3895
        %v3999 = vunpack.c.l.b16 %v3896
        %v4000 = vpack.c.b16 %v3953, %v3952
        %v4001 = vpack.c.b16 %v3955, %v3954
        %v4002 = vpack.c.b16 %v3957, %v3956
        %v4003 = vpack.c.b16 %v3959, %v3958
        %v4004 = vpack.c.b16 %v3961, %v3960
        %v4005 = vpack.c.b16 %v3963, %v3962
        %v4006 = vpack.c.b16 %v3965, %v3964
        %v4007 = vpack.c.b16 %v3967, %v3966
        %v4008 = vpack.c.b16 %v3969, %v3968
        %v4009 = vpack.c.b16 %v3971, %v3970
        %v4010 = vpack.c.b16 %v3973, %v3972
        %v4011 = vpack.c.b16 %v3975, %v3974
        %v4012 = vpack.c.b16 %v3977, %v3976
        %v4013 = vpack.c.b16 %v3979, %v3978
        %v4014 = vpack.c.b16 %v3981, %v3980
        %v4015 = vpack.c.b16 %v3983, %v3982
        %v4016 = vpack.c.b16 %v3985, %v3984
        %v4017 = vpack.c.b16 %v3987, %v3986
        %v4018 = vpack.c.b16 %v3989, %v3988
        %v4019 = vpack.c.b16 %v3991, %v3990
        %v4020 = vpack.c.b16 %v3993, %v3992
        %v4021 = vpack.c.b16 %v3995, %v3994
        %v4022 = vpack.c.b16 %v3997, %v3996
        %v4023 = vpack.c.b16 %v3999, %v3998
        %4048 = vmatprep.subr.bf16.mxu0 0
        %4049 = vmatpush1.bf16.msra.mxu0 %v4007
        %4050 = vmatprep.subr.bf16.mxu0 0
        %4051 = vmatpush1.bf16.msra.mxu0 %v4006
        %4052 = vmatprep.subr.bf16.mxu0 0
        %4053 = vmatpush1.bf16.msra.mxu0 %v4005
        %4054 = vmatprep.subr.bf16.mxu0 0
        %4055 = vmatpush1.bf16.msra.mxu0 %v4004
        %4056 = vmatprep.subr.bf16.mxu0 0
        %4057 = vmatpush1.bf16.msra.mxu0 %v4003
        %4058 = vmatprep.subr.bf16.mxu0 0
        %4059 = vmatpush1.bf16.msra.mxu0 %v4002
        %4060 = vmatprep.subr.bf16.mxu0 0
        %4061 = vmatpush1.bf16.msra.mxu0 %v4001
        %4062 = vmatprep.subr.bf16.mxu0 0
        %4063 = vmatpush1.bf16.msra.mxu0 %v4000
        %4064 = vmatprep.subr.bf16.mxu0 0
        %4065 = vmatpush2.bf16.msra.mxu0 %v4015
        %4066 = vmatprep.subr.bf16.mxu0 0
        %4067 = vmatpush2.bf16.msra.mxu0 %v4014
        %4068 = vmatprep.subr.bf16.mxu0 0
        %4069 = vmatpush2.bf16.msra.mxu0 %v4013
        %4070 = vmatprep.subr.bf16.mxu0 0
        %4071 = vmatpush2.bf16.msra.mxu0 %v4012
        %4072 = vmatprep.subr.bf16.mxu0 0
        %4073 = vmatpush2.bf16.msra.mxu0 %v4011
        %4074 = vmatprep.subr.bf16.mxu0 0
        %4075 = vmatpush2.bf16.msra.mxu0 %v4010
        %4076 = vmatprep.subr.bf16.mxu0 0
        %4077 = vmatpush2.bf16.msra.mxu0 %v4009
        %4078 = vmatprep.subr.bf16.mxu0 0
        %4079 = vmatpush2.bf16.msra.mxu0 %v4008
        %4080 = vmatprep.mubr.bf16.mxu0 %v3847
        %4081 = vmatmul.mubr.bf16.gmra.mxu0 %v3846
        %v4082 = vpop.f32.mrf.mxu0
        %v4083 = vadd.f32 %v3902, %v4082
        %v4084 = vpop.f32.mrf.mxu0
        %v4085 = vpop.f32.mrf.mxu0
        %v4086 = vadd.f32 %v3902, %v4085
        %v4087 = vpop.f32.mrf.mxu0
        %4088 = vdwg.mxu0
        %4089 = vmatprep.subr.bf16.mxu0 0
        %4090 = vmatpush1.bf16.msra.mxu0 %v4023
        %4091 = vmatprep.subr.bf16.mxu0 0
        %4092 = vmatpush1.bf16.msra.mxu0 %v4022
        %4093 = vmatprep.subr.bf16.mxu0 0
        %4094 = vmatpush1.bf16.msra.mxu0 %v4021
        %4095 = vmatprep.subr.bf16.mxu0 0
        %4096 = vmatpush1.bf16.msra.mxu0 %v4020
        %4097 = vmatprep.subr.bf16.mxu0 0
        %4098 = vmatpush1.bf16.msra.mxu0 %v4019
        %4099 = vmatprep.subr.bf16.mxu0 0
        %4100 = vmatpush1.bf16.msra.mxu0 %v4018
        %4101 = vmatprep.subr.bf16.mxu0 0
        %4102 = vmatpush1.bf16.msra.mxu0 %v4017
        %4103 = vmatprep.subr.bf16.mxu0 0
        %4104 = vmatpush1.bf16.msra.mxu0 %v4016
        %4105 = vmatprep.subr.bf16.mxu0 0
        %4106 = vmatpush2.bf16.msra.mxu0 0
        %4107 = vmatprep.subr.bf16.mxu0 0
        %4108 = vmatpush2.bf16.msra.mxu0 0
        %4109 = vmatprep.subr.bf16.mxu0 0
        %4110 = vmatpush2.bf16.msra.mxu0 0
        %4111 = vmatprep.subr.bf16.mxu0 0
        %4112 = vmatpush2.bf16.msra.mxu0 0
        %4113 = vmatprep.subr.bf16.mxu0 0
        %4114 = vmatpush2.bf16.msra.mxu0 0
        %4115 = vmatprep.subr.bf16.mxu0 0
        %4116 = vmatpush2.bf16.msra.mxu0 0
        %4117 = vmatprep.subr.bf16.mxu0 0
        %4118 = vmatpush2.bf16.msra.mxu0 0
        %4119 = vmatprep.subr.bf16.mxu0 0
        %4120 = vmatpush2.bf16.msra.mxu0 0
        %4121 = vmatprep.mubr.bf16.mxu0 0
        %4122 = vmatmul.mubr.bf16.gmra.mxu0 %v3848
        %v4123 = vpop.f32.mrf.mxu0
        %v4124 = vadd.f32 %v4083, %v4123
        %v4125 = vpop.f32.mrf.mxu0
        %v4126 = vpop.f32.mrf.mxu0
        %v4127 = vadd.f32 %v4086, %v4126
        %v4128 = vpop.f32.mrf.mxu0
        %4129 = vdwg.mxu0
        %4130 = vst [vmem:[%s666] sm:$0xff] %v4124
        %4131 = vst [vmem:[%s666 + $0x8] sm:$0xff] %v4127
        %s4132 = sand.u32 %s372, 1
        %s4133 = scalar_lea.sflag [#allocation4], %s4132
        %s4134 = sand.u32 %s372, 1
        %s4135 = smul.addr %s4134, 16
        %s4136 = scalar_lea.vmem [#allocation19], %s4135
        // Predicated region
        $region121: #{tpu_custom_call.1} parent=79 // pred_check
          %p4137 = pneg %p382
        $region122: #{tpu_custom_call.1} parent=79 // pred_check_branch
          %4139 = sbr.rel (%p4137) target = $region124
        $region123: #{tpu_custom_call.1} parent=79 // pred_region
          %s4140 = smul.u32 2, %s39
          %s4142 = ssub.s32 256, 256
          %4143 = vsyncadd %s4133, %s4142
          %s4144 = smul.addr %s4140, 128
          %s4145 = scalar_lea.hbm %s15, %s4144
          %s4146 = sshll.u32 %s4136, 4
          %s4147 = int_to_ptr.vmem [resolvable:$true] %s4146
          %4152 = dma.vmem_to_hbm [thread:$0]  %s4147, 256, %s4145, %s4133, 128, 128, 8
        $region124: #{tpu_custom_call.1} parent=79 // pred_fallthru
          _
      $region80: #{tpu_custom_call.1} parent=5 // pred_fallthru
        _
      %p4153 = scmp.le.s32.totalorder 2, %s34
      // Predicated region
      $region125: #{tpu_custom_call.1} parent=5 // pred_check
        %p4154 = pneg %p4153
      $region126: #{tpu_custom_call.1} parent=5 // pred_check_branch
        %4156 = sbr.rel (%p4154) target = $region128
      $region127: #{tpu_custom_call.1} parent=5 // pred_region
        %s4157 = ssub.s32 %s34, 2
        // Predicated region
        $region129: #{tpu_custom_call.1} parent=127 // pred_check
          %p4158 = pneg %p388
        $region130: #{tpu_custom_call.1} parent=127 // pred_check_branch
          %4160 = sbr.rel (%p4158) target = $region132
        $region131: #{tpu_custom_call.1} parent=127 // pred_region
          %s4161 = sand.u32 %s373, 1
          %s4162 = scalar_lea.sflag [#allocation4], %s4161
          %s4163 = sand.u32 %s373, 1
          %s4164 = smul.addr %s4163, 16
          %s4165 = scalar_lea.vmem [#allocation19], %s4164
          %4166 = dma.done %s4162, 256
        $region132: #{tpu_custom_call.1} parent=127 // pred_fallthru
          _
      $region128: #{tpu_custom_call.1} parent=5 // pred_fallthru
        _
    $region6: #{tpu_custom_call.1} parent=1 // loop_footer
      %s38 = sadd.s32 1, %s34
    $region7: #{tpu_custom_call.1} parent=1 // loop_footer_branch
      %33 = sbr.rel target = $region3
    $region8: #{tpu_custom_call.1} parent=1 // loop_exit
      _
    %4167 = vsyncpa [#allocation3], 1
    %s4168 = scalar_lea.sflag [#allocation3], 1
    %4169 = vsyncpa %s4168, 1
    %4170 = vsyncpa [#allocation6], 1
    %s4171 = scalar_lea.sflag [#allocation6], 1
    %4172 = vsyncpa %s4171, 1
    %4173 = vsyncpa [#allocation9], 1
    %4174 = vsyncpa [#allocation12], 1
    %4175 = vsyncpa [#allocation15], 1
    %4176 = vsyncpa [#allocation18], 1
    %4177 = vsyncpa [#allocation4], 1
    %s4178 = scalar_lea.sflag [#allocation4], 1
    %4179 = vsyncpa %s4178, 1

</llo_original>
